<compile_context>
chip_gen: v6e
topology: v6e:2x2x1
jax: 0.10.0
libtpu: 0.0.40
codegen_flags: <defaults>
</compile_context>

<pallas_src>
import jax
import jax.numpy as jnp
from jax import lax
from jax.experimental import pallas as pl
from jax.experimental.pallas import tpu as pltpu


# -----------------------------------------------------------------------------
# Pallas kernel: multi-layer LSTM recurrence + fused (folded) heads.
# -----------------------------------------------------------------------------
def _make_lstm_heads_kernel(num_layers, T, BP):
    L = num_layers
    NPL = L - 1  # number of prefetched (non-first) LSTM layers

    def kernel(*args):
        p = 0
        x_ref = args[p]; p += 1                              # (T*BP, Hin) f32
        l0_wih, l0_whh, l0_bias = args[p], args[p + 1], args[p + 2]; p += 3
        layer_hbm = args[p:p + 3 * NPL]; p += 3 * NPL        # HBM refs (pl.ANY)
        whead_hbm, bhead_hbm = args[p], args[p + 1]; p += 2  # HBM refs (pl.ANY)
        out_ref = args[p]; p += 1                            # (T*BP, OUTP) f32
        seq_scr, proj_scr = args[p], args[p + 1]; p += 2     # VMEM scratch
        layer_scr = args[p:p + 3 * NPL]; p += 3 * NPL        # VMEM weight scratch
        whead_scr, bhead_scr = args[p], args[p + 1]; p += 2
        sem = args[p]                                        # DMA semaphores

        HP = seq_scr.shape[1]

        # ---- start HBM->VMEM prefetch of layer>=1 + head weights (P4) -------
        # They are waited on only right before use, hiding the DMA behind the
        # layer-0 input projection + recurrence.
        copies = []
        k = 0
        for i in range(3 * NPL):
            cp = pltpu.make_async_copy(layer_hbm[i], layer_scr[i], sem.at[k])
            cp.start()
            copies.append(cp)
            k += 1
        cp_wh = pltpu.make_async_copy(whead_hbm, whead_scr, sem.at[k]); k += 1
        cp_bh = pltpu.make_async_copy(bhead_hbm, bhead_scr, sem.at[k]); k += 1
        cp_wh.start()
        cp_bh.start()

        for l in range(L):
            if l == 0:
                wih = l0_wih[...]                            # (Hin, 4*HP) bf16
                whh = l0_whh[...]                            # (HP,  4*HP) bf16
                bias = l0_bias[...]                          # (1,   4*HP) f32
                x_all = x_ref[...]                           # (T*BP, Hin) f32
            else:
                j = 3 * (l - 1)
                copies[j].wait()
                copies[j + 1].wait()
                copies[j + 2].wait()
                wih = layer_scr[j][...]
                whh = layer_scr[j + 1][...]
                bias = layer_scr[j + 2][...]
                x_all = seq_scr[...]                         # previous layer output

            # Batched input projection for ALL timesteps (off the serial path).
            proj_scr[...] = (jnp.dot(x_all.astype(jnp.bfloat16), wih,
                                     preferred_element_type=jnp.float32)
                             + bias)                         # (T*BP, 4*HP) f32

            def step(t, hc, whh=whh):
                h, c = hc                                    # (BP, HP) f32, vreg-resident
                row = pl.multiple_of(t * BP, BP)
                gates = (proj_scr[pl.ds(row, BP), :]
                         + jnp.dot(h.astype(jnp.bfloat16), whh,
                                   preferred_element_type=jnp.float32))
                # PyTorch LSTM gate order i, f, g, o — each gate a 128-lane block.
                i_g = jax.nn.sigmoid(gates[:, 0 * HP:1 * HP])
                f_g = jax.nn.sigmoid(gates[:, 1 * HP:2 * HP])
                g_g = jnp.tanh(gates[:, 2 * HP:3 * HP])
                o_g = jax.nn.sigmoid(gates[:, 3 * HP:4 * HP])
                c_new = f_g * c + i_g * g_g
                h_new = o_g * jnp.tanh(c_new)
                seq_scr[pl.ds(row, BP), :] = h_new           # layer output sequence
                return (h_new, c_new)

            h0 = jnp.zeros((BP, HP), jnp.float32)
            c0 = jnp.zeros((BP, HP), jnp.float32)
            lax.fori_loop(0, T, step, (h0, c0), unroll=True)

        # Folded affine heads: ONE (T*BP,HP)@(HP,OUTP) matmul over the whole
        # sequence, lane-dense output.
        cp_wh.wait()
        cp_bh.wait()
        out_ref[...] = (jnp.dot(seq_scr[...].astype(jnp.bfloat16), whead_scr[...],
                                preferred_element_type=jnp.float32)
                        + bhead_scr[...])

    return kernel


# -----------------------------------------------------------------------------
# Wrapper: feature lift (embeddings + Linear(1,8)), layout/padding, weight
# packing (gate-aligned, bf16), head folding, Pallas call, output unpacking.
# -----------------------------------------------------------------------------
def _pack_lstm_layer(w_ih, w_hh, b_ih, b_hh, in_pad, H2, HP):
    in_l = w_ih.shape[1]
    wih_t = jnp.zeros((in_pad, 4 * HP), jnp.float32)
    whh_t = jnp.zeros((HP, 4 * HP), jnp.float32)
    bias = jnp.zeros((1, 4 * HP), jnp.float32)
    b = b_ih + b_hh
    for g in range(4):  # gate order i, f, g, o — each padded to a 128-lane block
        wih_t = wih_t.at[:in_l, g * HP:g * HP + H2].set(w_ih[g * H2:(g + 1) * H2, :].T)
        whh_t = whh_t.at[:H2, g * HP:g * HP + H2].set(w_hh[g * H2:(g + 1) * H2, :].T)
        bias = bias.at[0, g * HP:g * HP + H2].set(b[g * H2:(g + 1) * H2])
    # Weights in bf16 (MXU-native); bias stays f32 (added post-accumulation).
    return wih_t.astype(jnp.bfloat16), whh_t.astype(jnp.bfloat16), bias


def multinn3_forward(x, params, num_layers):
    B, T, _ = x.shape

    # feature lift (glue): embeddings for features 0/1, Linear(1,8) for feature 2
    idx0 = x[:, :, 0].astype(jnp.int32)
    idx1 = x[:, :, 1].astype(jnp.int32)
    e0 = jnp.take(params['embed1'], idx0, axis=0)                       # (B, T, 16)
    e1 = jnp.take(params['embed2'], idx1, axis=0)                       # (B, T, 8)
    x2 = x[:, :, 2:3]                                                   # (B, T, 1)
    l2 = x2 * params['fnnf3_w'][:, 0][None, None, :] + params['fnnf3_b'][None, None, :]
    x1 = jnp.concatenate([e0, e1, l2], axis=-1)                         # (B, T, Hin)

    Hin = x1.shape[-1]
    H2 = params['lstm'][0]['w_hh'].shape[1]                             # 2 * hidden (=64)
    Hd = params['fnnR_w'].shape[0]                                      # head hidden (=Hin)
    E = params['outE_w'].shape[0]                                       # output_size (=16)
    OUT = 1 + E + 1                                                     # packed head width

    # padded dims
    BP = ((B + 7) // 8) * 8                                             # sublane-pad batch
    HP = ((H2 + 127) // 128) * 128                                      # 128-lane gate blocks
    OUTP = ((OUT + 127) // 128) * 128                                   # lane-dense output
    F3 = 3 * Hd                                                         # fused head hidden (folded away)

    # time-major, batch-padded, flattened to (T*BP, Hin)
    x_tm = jnp.transpose(x1, (1, 0, 2)).astype(jnp.float32)             # (T, B, Hin)
    x_pad = jnp.pad(x_tm, ((0, 0), (0, BP - B), (0, 0)))
    x2d = x_pad.reshape(T * BP, Hin)

    inputs = [x2d]
    for li, lp in enumerate(params['lstm']):
        in_pad = Hin if li == 0 else HP
        inputs += list(_pack_lstm_layer(lp['w_ih'], lp['w_hh'], lp['b_ih'], lp['b_hh'],
                                        in_pad, H2, HP))

    # Head fold (heads are purely affine: fnn* -> out*, no activation between,
    # exactly as in the PyTorch module):
    #   W1: (HP, 3*Hd) = [fnnR | fnnE | fnnD],  W2: (3*Hd, OUTP) block-diagonal
    #   W_head = W1 @ W2,  b_head = b1 @ W2 + b2   (computed in f32 HIGHEST).
    W1 = jnp.zeros((HP, F3), jnp.float32)
    W1 = W1.at[:H2, 0:Hd].set(params['fnnR_w'].T)
    W1 = W1.at[:H2, Hd:2 * Hd].set(params['fnnE_w'].T)
    W1 = W1.at[:H2, 2 * Hd:3 * Hd].set(params['fnnD_w'].T)
    b1 = jnp.zeros((1, F3), jnp.float32)
    b1 = b1.at[0, 0:Hd].set(params['fnnR_b'])
    b1 = b1.at[0, Hd:2 * Hd].set(params['fnnE_b'])
    b1 = b1.at[0, 2 * Hd:3 * Hd].set(params['fnnD_b'])

    W2 = jnp.zeros((F3, OUTP), jnp.float32)
    W2 = W2.at[0:Hd, 0:1].set(params['outR_w'].T)
    W2 = W2.at[Hd:2 * Hd, 1:1 + E].set(params['outE_w'].T)
    W2 = W2.at[2 * Hd:3 * Hd, 1 + E:2 + E].set(params['outD_w'].T)
    b2 = jnp.zeros((1, OUTP), jnp.float32)
    b2 = b2.at[0, 0:1].set(params['outR_b'])
    b2 = b2.at[0, 1:1 + E].set(params['outE_b'])
    b2 = b2.at[0, 1 + E:2 + E].set(params['outD_b'])

    W_head = jnp.dot(W1, W2, precision=lax.Precision.HIGHEST)           # (HP, OUTP)
    b_head = jnp.dot(b1, W2, precision=lax.Precision.HIGHEST) + b2      # (1, OUTP)
    inputs += [W_head.astype(jnp.bfloat16), b_head]

    NPL = num_layers - 1
    n_dma = 3 * NPL + 2

    vmem = pl.BlockSpec(memory_space=pltpu.MemorySpace.VMEM)
    anyspec = pl.BlockSpec(memory_space=pl.ANY)   # stays in HBM; prefetched in-kernel

    scratch = [pltpu.VMEM((T * BP, HP), jnp.float32),          # layer output sequence
               pltpu.VMEM((T * BP, 4 * HP), jnp.float32)]      # precomputed x@W_ih
    for _ in range(NPL):
        scratch += [pltpu.VMEM((HP, 4 * HP), jnp.bfloat16),    # prefetched W_ih^T
                    pltpu.VMEM((HP, 4 * HP), jnp.bfloat16),    # prefetched W_hh^T
                    pltpu.VMEM((1, 4 * HP), jnp.float32)]      # prefetched bias
    scratch += [pltpu.VMEM((HP, OUTP), jnp.bfloat16),          # prefetched W_head
                pltpu.VMEM((1, OUTP), jnp.float32),            # prefetched b_head
                pltpu.SemaphoreType.DMA((n_dma,))]

    out2d = pl.pallas_call(
        _make_lstm_heads_kernel(num_layers, T, BP),
        out_shape=jax.ShapeDtypeStruct((T * BP, OUTP), jnp.float32),
        in_specs=[vmem] * 4 + [anyspec] * (3 * NPL + 2),
        out_specs=vmem,
        scratch_shapes=scratch,
    )(*inputs)

    out_bt = jnp.transpose(out2d.reshape(T, BP, OUTP)[:, :B, :OUT], (1, 0, 2))  # (B, T, 18)
    outR = out_bt[:, :, 0:1]
    outE = out_bt[:, :, 1:1 + E]
    outD = out_bt[:, :, 1 + E:2 + E]
    output = out_bt                                   # == concat([outR, outE, outD]); detach no-op
    return output, [outR, outE, outD]


# -----------------------------------------------------------------------------
# Deterministic parameter init (PyTorch-style shapes / bounds).
# -----------------------------------------------------------------------------
def _uniform(key, shape, bound):
    return jax.random.uniform(key, shape, jnp.float32, -bound, bound)


def init_params(key, num_layers):
    V0, E0 = 10, 16        # data['0'] pretrained embedding
    V1, E1 = 12, 8         # data['1'] pretrained embedding
    F = 8                  # fnnf width (Linear(1, 8))
    Hin = E0 + E1 + F      # hidden_size after feature lift = 32
    H2 = 2 * Hin           # LSTM hidden = 64

    keys = jax.random.split(key, 40)
    ki = iter(keys)
    p = {}
    p['embed1'] = jax.random.normal(next(ki), (V0, E0), jnp.float32)
    p['embed2'] = jax.random.normal(next(ki), (V1, E1), jnp.float32)
    p['fnnf3_w'] = _uniform(next(ki), (F, 1), 1.0)
    p['fnnf3_b'] = _uniform(next(ki), (F,), 1.0)

    lstm = []
    k = 1.0 / (H2 ** 0.5)
    for l in range(num_layers):
        in_l = Hin if l == 0 else H2
        lstm.append(dict(
            w_ih=_uniform(next(ki), (4 * H2, in_l), k),
            w_hh=_uniform(next(ki), (4 * H2, H2), k),
            b_ih=_uniform(next(ki), (4 * H2,), k),
            b_hh=_uniform(next(ki), (4 * H2,), k)))
    p['lstm'] = lstm

    def lin(key, out_f, in_f):
        k1, k2 = jax.random.split(key)
        bd = 1.0 / (in_f ** 0.5)
        return _uniform(k1, (out_f, in_f), bd), _uniform(k2, (out_f,), bd)

    p['fnnR_w'], p['fnnR_b'] = lin(next(ki), Hin, H2)
    p['outR_w'], p['outR_b'] = lin(next(ki), 1, Hin)
    p['fnnE_w'], p['fnnE_b'] = lin(next(ki), Hin, H2)
    p['outE_w'], p['outE_b'] = lin(next(ki), E0, Hin)
    p['fnnD_w'], p['fnnD_b'] = lin(next(ki), Hin, H2)
    p['outD_w'], p['outD_b'] = lin(next(ki), 1, Hin)
    return p


# -----------------------------------------------------------------------------
# Pure-JAX reference (for numerical self-check).
# -----------------------------------------------------------------------------
def reference_forward(x, params, num_layers):
    idx0 = x[:, :, 0].astype(jnp.int32)
    idx1 = x[:, :, 1].astype(jnp.int32)
    e0 = jnp.take(params['embed1'], idx0, axis=0)
    e1 = jnp.take(params['embed2'], idx1, axis=0)
    x2 = x[:, :, 2:3]
    l2 = x2 * params['fnnf3_w'][:, 0][None, None, :] + params['fnnf3_b'][None, None, :]
    x1 = jnp.concatenate([e0, e1, l2], axis=-1)
    seq = jnp.transpose(x1, (1, 0, 2))
    B = seq.shape[1]
    for lp in params['lstm']:
        H2 = lp['w_hh'].shape[1]

        def step(carry, x_t, lp=lp, H2=H2):
            h, c = carry
            gates = x_t @ lp['w_ih'].T + h @ lp['w_hh'].T + lp['b_ih'] + lp['b_hh']
            i = jax.nn.sigmoid(gates[:, :H2])
            f = jax.nn.sigmoid(gates[:, H2:2 * H2])
            g = jnp.tanh(gates[:, 2 * H2:3 * H2])
            o = jax.nn.sigmoid(gates[:, 3 * H2:])
            c = f * c + i * g
            h = o * jnp.tanh(c)
            return (h, c), h

        init = (jnp.zeros((B, H2), jnp.float32), jnp.zeros((B, H2), jnp.float32))
        _, seq = lax.scan(step, init, seq)
    rnn = jnp.transpose(seq, (1, 0, 2))

    def head(wf, bf, wo, bo):
        return (rnn @ wf.T + bf) @ wo.T + bo

    outR = head(params['fnnR_w'], params['fnnR_b'], params['outR_w'], params['outR_b'])
    outE = head(params['fnnE_w'], params['fnnE_b'], params['outE_w'], params['outE_b'])
    outD = head(params['fnnD_w'], params['fnnD_b'], params['outD_w'], params['outD_b'])
    return jnp.concatenate([outR, outE, outD], axis=-1), [outR, outE, outD]


if __name__ == "__main__":
    key = jax.random.PRNGKey(0)
    kp, kx0, kx1, kx2 = jax.random.split(key, 4)

    num_layers = 2
    B, T = 2, 8
    params = init_params(kp, num_layers)

    # x holds category ids (as floats, like the PyTorch module) in features 0/1
    # and a continuous value in feature 2.
    idx0 = jax.random.randint(kx0, (B, T), 0, 10)
    idx1 = jax.random.randint(kx1, (B, T), 0, 12)
    cont = jax.random.normal(kx2, (B, T))
    x = jnp.stack([idx0.astype(jnp.float32), idx1.astype(jnp.float32), cont],
                  axis=-1)                                   # (B, T, 3)

    output, (outR, outE, outD) = multinn3_forward(x, params, num_layers)
    jax.block_until_ready(output)

    # shape / numerical checks against a pure-JAX reference.
    # (Matmul operands are intentionally bf16 — MXU-native — so the tolerance
    #  is slightly looser than pure-f32; elementwise gate math stays f32.)
    assert output.shape == (B, T, 1 + 16 + 1)
    assert outR.shape == (B, T, 1) and outE.shape == (B, T, 16) and outD.shape == (B, T, 1)
    assert bool(jnp.all(jnp.isfinite(output)))
    ref_out, _ = reference_forward(x, params, num_layers)
    assert bool(jnp.allclose(output, ref_out, atol=1e-2, rtol=1e-2))

    print("KERNEL_OK")
</pallas_src>

<mosaic_0001>
module attributes {stable_mosaic.version = 11 : i64} {
  func.func @kernel(%arg0: memref<64x32xf32, #tpu.memory_space<vmem>>, %arg1: memref<32x512xbf16, #tpu.memory_space<vmem>>, %arg2: memref<128x512xbf16, #tpu.memory_space<vmem>>, %arg3: memref<1x512xf32, #tpu.memory_space<vmem>>, %arg4: memref<128x512xbf16, #tpu.memory_space<any>>, %arg5: memref<128x512xbf16, #tpu.memory_space<any>>, %arg6: memref<1x512xf32, #tpu.memory_space<any>>, %arg7: memref<128x128xbf16, #tpu.memory_space<any>>, %arg8: memref<1x128xf32, #tpu.memory_space<any>>, %arg9: memref<64x128xf32, #tpu.memory_space<vmem>>, %arg10: memref<64x128xf32, #tpu.memory_space<vmem>>, %arg11: memref<64x512xf32, #tpu.memory_space<vmem>>, %arg12: memref<128x512xbf16, #tpu.memory_space<vmem>>, %arg13: memref<128x512xbf16, #tpu.memory_space<vmem>>, %arg14: memref<1x512xf32, #tpu.memory_space<vmem>>, %arg15: memref<128x128xbf16, #tpu.memory_space<vmem>>, %arg16: memref<1x128xf32, #tpu.memory_space<vmem>>, %arg17: memref<5x!tpu.dma_semaphore, #tpu.memory_space<semaphore_mem>>) attributes {dimension_semantics = [], scalar_prefetch = 0 : i64, scratch_operands = 8 : i64, tpu.core_type = #tpu.core_type<tc>} {
    %c0_i32 = arith.constant 0 : i32
    %0 = tpu.memref_slice %arg17[%c0_i32] : memref<5x!tpu.dma_semaphore, #tpu.memory_space<semaphore_mem>> -> memref<1x!tpu.dma_semaphore, #tpu.memory_space<semaphore_mem>>
    %1 = tpu.memref_squeeze %0 : memref<1x!tpu.dma_semaphore, #tpu.memory_space<semaphore_mem>> -> memref<!tpu.dma_semaphore, #tpu.memory_space<semaphore_mem>>
    tpu.enqueue_dma source(%arg4 : memref<128x512xbf16, #tpu.memory_space<any>>) target(%arg12 : memref<128x512xbf16, #tpu.memory_space<vmem>>) target_semaphore(%1 : memref<!tpu.dma_semaphore, #tpu.memory_space<semaphore_mem>>)
    %c1_i32 = arith.constant 1 : i32
    %2 = tpu.memref_slice %arg17[%c1_i32] : memref<5x!tpu.dma_semaphore, #tpu.memory_space<semaphore_mem>> -> memref<1x!tpu.dma_semaphore, #tpu.memory_space<semaphore_mem>>
    %3 = tpu.memref_squeeze %2 : memref<1x!tpu.dma_semaphore, #tpu.memory_space<semaphore_mem>> -> memref<!tpu.dma_semaphore, #tpu.memory_space<semaphore_mem>>
    tpu.enqueue_dma source(%arg5 : memref<128x512xbf16, #tpu.memory_space<any>>) target(%arg13 : memref<128x512xbf16, #tpu.memory_space<vmem>>) target_semaphore(%3 : memref<!tpu.dma_semaphore, #tpu.memory_space<semaphore_mem>>)
    %c2_i32 = arith.constant 2 : i32
    %4 = tpu.memref_slice %arg17[%c2_i32] : memref<5x!tpu.dma_semaphore, #tpu.memory_space<semaphore_mem>> -> memref<1x!tpu.dma_semaphore, #tpu.memory_space<semaphore_mem>>
    %5 = tpu.memref_squeeze %4 : memref<1x!tpu.dma_semaphore, #tpu.memory_space<semaphore_mem>> -> memref<!tpu.dma_semaphore, #tpu.memory_space<semaphore_mem>>
    tpu.enqueue_dma source(%arg6 : memref<1x512xf32, #tpu.memory_space<any>>) target(%arg14 : memref<1x512xf32, #tpu.memory_space<vmem>>) target_semaphore(%5 : memref<!tpu.dma_semaphore, #tpu.memory_space<semaphore_mem>>)
    %c3_i32 = arith.constant 3 : i32
    %6 = tpu.memref_slice %arg17[%c3_i32] : memref<5x!tpu.dma_semaphore, #tpu.memory_space<semaphore_mem>> -> memref<1x!tpu.dma_semaphore, #tpu.memory_space<semaphore_mem>>
    %7 = tpu.memref_squeeze %6 : memref<1x!tpu.dma_semaphore, #tpu.memory_space<semaphore_mem>> -> memref<!tpu.dma_semaphore, #tpu.memory_space<semaphore_mem>>
    tpu.enqueue_dma source(%arg7 : memref<128x128xbf16, #tpu.memory_space<any>>) target(%arg15 : memref<128x128xbf16, #tpu.memory_space<vmem>>) target_semaphore(%7 : memref<!tpu.dma_semaphore, #tpu.memory_space<semaphore_mem>>)
    %c4_i32 = arith.constant 4 : i32
    %8 = tpu.memref_slice %arg17[%c4_i32] : memref<5x!tpu.dma_semaphore, #tpu.memory_space<semaphore_mem>> -> memref<1x!tpu.dma_semaphore, #tpu.memory_space<semaphore_mem>>
    %9 = tpu.memref_squeeze %8 : memref<1x!tpu.dma_semaphore, #tpu.memory_space<semaphore_mem>> -> memref<!tpu.dma_semaphore, #tpu.memory_space<semaphore_mem>>
    tpu.enqueue_dma source(%arg8 : memref<1x128xf32, #tpu.memory_space<any>>) target(%arg16 : memref<1x128xf32, #tpu.memory_space<vmem>>) target_semaphore(%9 : memref<!tpu.dma_semaphore, #tpu.memory_space<semaphore_mem>>)
    %c0 = arith.constant 0 : index
    %c0_0 = arith.constant 0 : index
    %10 = vector.load %arg1[%c0, %c0_0] : memref<32x512xbf16, #tpu.memory_space<vmem>>, vector<32x512xbf16>
    %c0_1 = arith.constant 0 : index
    %c0_2 = arith.constant 0 : index
    %11 = vector.load %arg2[%c0_1, %c0_2] : memref<128x512xbf16, #tpu.memory_space<vmem>>, vector<128x512xbf16>
    %c0_3 = arith.constant 0 : index
    %c0_4 = arith.constant 0 : index
    %12 = vector.load %arg3[%c0_3, %c0_4] : memref<1x512xf32, #tpu.memory_space<vmem>>, vector<1x512xf32>
    %c0_5 = arith.constant 0 : index
    %c0_6 = arith.constant 0 : index
    %13 = vector.load %arg0[%c0_5, %c0_6] : memref<64x32xf32, #tpu.memory_space<vmem>>, vector<64x32xf32>
    %14 = arith.truncf %13 : vector<64x32xf32> to vector<64x32xbf16>
    %cst = arith.constant dense<0.000000e+00> : vector<64x512xf32>
    %15 = tpu.matmul %14, %10, %cst {dimension_numbers = #tpu.dot_dimension_numbers<[1], [0], [0], [1], [0, 0, 1, 1], [], []>} : vector<64x32xbf16>, vector<32x512xbf16>, vector<64x512xf32> -> vector<64x512xf32>
    %16 = vector.broadcast %12 : vector<1x512xf32> to vector<64x512xf32>
    %17 = arith.addf %15, %16 : vector<64x512xf32>
    %c0_7 = arith.constant 0 : index
    %c0_8 = arith.constant 0 : index
    %18 = vector.load %arg11[%c0_7, %c0_8] : memref<64x512xf32, #tpu.memory_space<vmem>>, vector<64x512xf32>
    tpu.vector_store %arg11[%c0_7, %c0_8], %17 {strides = array<i32>} : memref<64x512xf32, #tpu.memory_space<vmem>>, vector<64x512xf32>,
    %cst_9 = arith.constant 0.000000e+00 : f32
    %19 = vector.broadcast %cst_9 : f32 to vector<8x128xf32>
    %cst_10 = arith.constant 0.000000e+00 : f32
    %20 = vector.broadcast %cst_10 : f32 to vector<8x128xf32>
    %c0_i32_11 = arith.constant 0 : i32
    %c8_i32 = arith.constant 8 : i32
    %21 = arith.muli %c0_i32_11, %c8_i32 : i32
    %22 = tpu.assume_multiple %21, 8 : i32
    %23 = arith.index_cast %22 : i32 to index
    %c0_12 = arith.constant 0 : index
    %24 = vector.load %arg11[%23, %c0_12] : memref<64x512xf32, #tpu.memory_space<vmem>>, vector<8x512xf32>
    %25 = arith.truncf %19 : vector<8x128xf32> to vector<8x128xbf16>
    %cst_13 = arith.constant dense<0.000000e+00> : vector<8x512xf32>
    %26 = tpu.matmul %25, %11, %cst_13 {dimension_numbers = #tpu.dot_dimension_numbers<[1], [0], [0], [1], [0, 0, 1, 1], [], []>} : vector<8x128xbf16>, vector<128x512xbf16>, vector<8x512xf32> -> vector<8x512xf32>
    %27 = arith.addf %24, %26 : vector<8x512xf32>
    %28 = vector.extract_strided_slice %27 {offsets = [0, 0], sizes = [8, 128], strides = [1, 1]} : vector<8x512xf32> to vector<8x128xf32>
    %29 = arith.negf %28 : vector<8x128xf32>
    %30 = math.exp %29 : vector<8x128xf32>
    %cst_14 = arith.constant 1.000000e+00 : f32
    %31 = vector.broadcast %cst_14 : f32 to vector<8x128xf32>
    %32 = arith.addf %31, %30 : vector<8x128xf32>
    %33 = arith.divf %31, %32 : vector<8x128xf32>
    %34 = vector.extract_strided_slice %27 {offsets = [0, 128], sizes = [8, 128], strides = [1, 1]} : vector<8x512xf32> to vector<8x128xf32>
    %35 = arith.negf %34 : vector<8x128xf32>
    %36 = math.exp %35 : vector<8x128xf32>
    %cst_15 = arith.constant 1.000000e+00 : f32
    %37 = vector.broadcast %cst_15 : f32 to vector<8x128xf32>
    %38 = arith.addf %37, %36 : vector<8x128xf32>
    %39 = arith.divf %37, %38 : vector<8x128xf32>
    %40 = vector.extract_strided_slice %27 {offsets = [0, 256], sizes = [8, 128], strides = [1, 1]} : vector<8x512xf32> to vector<8x128xf32>
    %41 = math.tanh %40 : vector<8x128xf32>
    %42 = vector.extract_strided_slice %27 {offsets = [0, 384], sizes = [8, 128], strides = [1, 1]} : vector<8x512xf32> to vector<8x128xf32>
    %43 = arith.negf %42 : vector<8x128xf32>
    %44 = math.exp %43 : vector<8x128xf32>
    %cst_16 = arith.constant 1.000000e+00 : f32
    %45 = vector.broadcast %cst_16 : f32 to vector<8x128xf32>
    %46 = arith.addf %45, %44 : vector<8x128xf32>
    %47 = arith.divf %45, %46 : vector<8x128xf32>
    %48 = arith.mulf %39, %20 : vector<8x128xf32>
    %49 = arith.mulf %33, %41 : vector<8x128xf32>
    %50 = arith.addf %48, %49 : vector<8x128xf32>
    %51 = math.tanh %50 : vector<8x128xf32>
    %52 = arith.mulf %47, %51 : vector<8x128xf32>
    %53 = arith.index_cast %22 : i32 to index
    %c0_17 = arith.constant 0 : index
    %54 = vector.load %arg10[%53, %c0_17] : memref<64x128xf32, #tpu.memory_space<vmem>>, vector<8x128xf32>
    tpu.vector_store %arg10[%53, %c0_17], %52 {strides = array<i32>} : memref<64x128xf32, #tpu.memory_space<vmem>>, vector<8x128xf32>,
    %c1_i32_18 = arith.constant 1 : i32
    %c8_i32_19 = arith.constant 8 : i32
    %55 = arith.muli %c1_i32_18, %c8_i32_19 : i32
    %56 = tpu.assume_multiple %55, 8 : i32
    %57 = arith.index_cast %56 : i32 to index
    %c0_20 = arith.constant 0 : index
    %58 = vector.load %arg11[%57, %c0_20] : memref<64x512xf32, #tpu.memory_space<vmem>>, vector<8x512xf32>
    %59 = arith.truncf %52 : vector<8x128xf32> to vector<8x128xbf16>
    %cst_21 = arith.constant dense<0.000000e+00> : vector<8x512xf32>
    %60 = tpu.matmul %59, %11, %cst_21 {dimension_numbers = #tpu.dot_dimension_numbers<[1], [0], [0], [1], [0, 0, 1, 1], [], []>} : vector<8x128xbf16>, vector<128x512xbf16>, vector<8x512xf32> -> vector<8x512xf32>
    %61 = arith.addf %58, %60 : vector<8x512xf32>
    %62 = vector.extract_strided_slice %61 {offsets = [0, 0], sizes = [8, 128], strides = [1, 1]} : vector<8x512xf32> to vector<8x128xf32>
    %63 = arith.negf %62 : vector<8x128xf32>
    %64 = math.exp %63 : vector<8x128xf32>
    %cst_22 = arith.constant 1.000000e+00 : f32
    %65 = vector.broadcast %cst_22 : f32 to vector<8x128xf32>
    %66 = arith.addf %65, %64 : vector<8x128xf32>
    %67 = arith.divf %65, %66 : vector<8x128xf32>
    %68 = vector.extract_strided_slice %61 {offsets = [0, 128], sizes = [8, 128], strides = [1, 1]} : vector<8x512xf32> to vector<8x128xf32>
    %69 = arith.negf %68 : vector<8x128xf32>
    %70 = math.exp %69 : vector<8x128xf32>
    %cst_23 = arith.constant 1.000000e+00 : f32
    %71 = vector.broadcast %cst_23 : f32 to vector<8x128xf32>
    %72 = arith.addf %71, %70 : vector<8x128xf32>
    %73 = arith.divf %71, %72 : vector<8x128xf32>
    %74 = vector.extract_strided_slice %61 {offsets = [0, 256], sizes = [8, 128], strides = [1, 1]} : vector<8x512xf32> to vector<8x128xf32>
    %75 = math.tanh %74 : vector<8x128xf32>
    %76 = vector.extract_strided_slice %61 {offsets = [0, 384], sizes = [8, 128], strides = [1, 1]} : vector<8x512xf32> to vector<8x128xf32>
    %77 = arith.negf %76 : vector<8x128xf32>
    %78 = math.exp %77 : vector<8x128xf32>
    %cst_24 = arith.constant 1.000000e+00 : f32
    %79 = vector.broadcast %cst_24 : f32 to vector<8x128xf32>
    %80 = arith.addf %79, %78 : vector<8x128xf32>
    %81 = arith.divf %79, %80 : vector<8x128xf32>
    %82 = arith.mulf %73, %50 : vector<8x128xf32>
    %83 = arith.mulf %67, %75 : vector<8x128xf32>
    %84 = arith.addf %82, %83 : vector<8x128xf32>
    %85 = math.tanh %84 : vector<8x128xf32>
    %86 = arith.mulf %81, %85 : vector<8x128xf32>
    %87 = arith.index_cast %56 : i32 to index
    %c0_25 = arith.constant 0 : index
    %88 = vector.load %arg10[%87, %c0_25] : memref<64x128xf32, #tpu.memory_space<vmem>>, vector<8x128xf32>
    tpu.vector_store %arg10[%87, %c0_25], %86 {strides = array<i32>} : memref<64x128xf32, #tpu.memory_space<vmem>>, vector<8x128xf32>,
    %c2_i32_26 = arith.constant 2 : i32
    %c8_i32_27 = arith.constant 8 : i32
    %89 = arith.muli %c2_i32_26, %c8_i32_27 : i32
    %90 = tpu.assume_multiple %89, 8 : i32
    %91 = arith.index_cast %90 : i32 to index
    %c0_28 = arith.constant 0 : index
    %92 = vector.load %arg11[%91, %c0_28] : memref<64x512xf32, #tpu.memory_space<vmem>>, vector<8x512xf32>
    %93 = arith.truncf %86 : vector<8x128xf32> to vector<8x128xbf16>
    %cst_29 = arith.constant dense<0.000000e+00> : vector<8x512xf32>
    %94 = tpu.matmul %93, %11, %cst_29 {dimension_numbers = #tpu.dot_dimension_numbers<[1], [0], [0], [1], [0, 0, 1, 1], [], []>} : vector<8x128xbf16>, vector<128x512xbf16>, vector<8x512xf32> -> vector<8x512xf32>
    %95 = arith.addf %92, %94 : vector<8x512xf32>
    %96 = vector.extract_strided_slice %95 {offsets = [0, 0], sizes = [8, 128], strides = [1, 1]} : vector<8x512xf32> to vector<8x128xf32>
    %97 = arith.negf %96 : vector<8x128xf32>
    %98 = math.exp %97 : vector<8x128xf32>
    %cst_30 = arith.constant 1.000000e+00 : f32
    %99 = vector.broadcast %cst_30 : f32 to vector<8x128xf32>
    %100 = arith.addf %99, %98 : vector<8x128xf32>
    %101 = arith.divf %99, %100 : vector<8x128xf32>
    %102 = vector.extract_strided_slice %95 {offsets = [0, 128], sizes = [8, 128], strides = [1, 1]} : vector<8x512xf32> to vector<8x128xf32>
    %103 = arith.negf %102 : vector<8x128xf32>
    %104 = math.exp %103 : vector<8x128xf32>
    %cst_31 = arith.constant 1.000000e+00 : f32
    %105 = vector.broadcast %cst_31 : f32 to vector<8x128xf32>
    %106 = arith.addf %105, %104 : vector<8x128xf32>
    %107 = arith.divf %105, %106 : vector<8x128xf32>
    %108 = vector.extract_strided_slice %95 {offsets = [0, 256], sizes = [8, 128], strides = [1, 1]} : vector<8x512xf32> to vector<8x128xf32>
    %109 = math.tanh %108 : vector<8x128xf32>
    %110 = vector.extract_strided_slice %95 {offsets = [0, 384], sizes = [8, 128], strides = [1, 1]} : vector<8x512xf32> to vector<8x128xf32>
    %111 = arith.negf %110 : vector<8x128xf32>
    %112 = math.exp %111 : vector<8x128xf32>
    %cst_32 = arith.constant 1.000000e+00 : f32
    %113 = vector.broadcast %cst_32 : f32 to vector<8x128xf32>
    %114 = arith.addf %113, %112 : vector<8x128xf32>
    %115 = arith.divf %113, %114 : vector<8x128xf32>
    %116 = arith.mulf %107, %84 : vector<8x128xf32>
    %117 = arith.mulf %101, %109 : vector<8x128xf32>
    %118 = arith.addf %116, %117 : vector<8x128xf32>
    %119 = math.tanh %118 : vector<8x128xf32>
    %120 = arith.mulf %115, %119 : vector<8x128xf32>
    %121 = arith.index_cast %90 : i32 to index
    %c0_33 = arith.constant 0 : index
    %122 = vector.load %arg10[%121, %c0_33] : memref<64x128xf32, #tpu.memory_space<vmem>>, vector<8x128xf32>
    tpu.vector_store %arg10[%121, %c0_33], %120 {strides = array<i32>} : memref<64x128xf32, #tpu.memory_space<vmem>>, vector<8x128xf32>,
    %c3_i32_34 = arith.constant 3 : i32
    %c8_i32_35 = arith.constant 8 : i32
    %123 = arith.muli %c3_i32_34, %c8_i32_35 : i32
    %124 = tpu.assume_multiple %123, 8 : i32
    %125 = arith.index_cast %124 : i32 to index
    %c0_36 = arith.constant 0 : index
    %126 = vector.load %arg11[%125, %c0_36] : memref<64x512xf32, #tpu.memory_space<vmem>>, vector<8x512xf32>
    %127 = arith.truncf %120 : vector<8x128xf32> to vector<8x128xbf16>
    %cst_37 = arith.constant dense<0.000000e+00> : vector<8x512xf32>
    %128 = tpu.matmul %127, %11, %cst_37 {dimension_numbers = #tpu.dot_dimension_numbers<[1], [0], [0], [1], [0, 0, 1, 1], [], []>} : vector<8x128xbf16>, vector<128x512xbf16>, vector<8x512xf32> -> vector<8x512xf32>
    %129 = arith.addf %126, %128 : vector<8x512xf32>
    %130 = vector.extract_strided_slice %129 {offsets = [0, 0], sizes = [8, 128], strides = [1, 1]} : vector<8x512xf32> to vector<8x128xf32>
    %131 = arith.negf %130 : vector<8x128xf32>
    %132 = math.exp %131 : vector<8x128xf32>
    %cst_38 = arith.constant 1.000000e+00 : f32
    %133 = vector.broadcast %cst_38 : f32 to vector<8x128xf32>
    %134 = arith.addf %133, %132 : vector<8x128xf32>
    %135 = arith.divf %133, %134 : vector<8x128xf32>
    %136 = vector.extract_strided_slice %129 {offsets = [0, 128], sizes = [8, 128], strides = [1, 1]} : vector<8x512xf32> to vector<8x128xf32>
    %137 = arith.negf %136 : vector<8x128xf32>
    %138 = math.exp %137 : vector<8x128xf32>
    %cst_39 = arith.constant 1.000000e+00 : f32
    %139 = vector.broadcast %cst_39 : f32 to vector<8x128xf32>
    %140 = arith.addf %139, %138 : vector<8x128xf32>
    %141 = arith.divf %139, %140 : vector<8x128xf32>
    %142 = vector.extract_strided_slice %129 {offsets = [0, 256], sizes = [8, 128], strides = [1, 1]} : vector<8x512xf32> to vector<8x128xf32>
    %143 = math.tanh %142 : vector<8x128xf32>
    %144 = vector.extract_strided_slice %129 {offsets = [0, 384], sizes = [8, 128], strides = [1, 1]} : vector<8x512xf32> to vector<8x128xf32>
    %145 = arith.negf %144 : vector<8x128xf32>
    %146 = math.exp %145 : vector<8x128xf32>
    %cst_40 = arith.constant 1.000000e+00 : f32
    %147 = vector.broadcast %cst_40 : f32 to vector<8x128xf32>
    %148 = arith.addf %147, %146 : vector<8x128xf32>
    %149 = arith.divf %147, %148 : vector<8x128xf32>
    %150 = arith.mulf %141, %118 : vector<8x128xf32>
    %151 = arith.mulf %135, %143 : vector<8x128xf32>
    %152 = arith.addf %150, %151 : vector<8x128xf32>
    %153 = math.tanh %152 : vector<8x128xf32>
    %154 = arith.mulf %149, %153 : vector<8x128xf32>
    %155 = arith.index_cast %124 : i32 to index
    %c0_41 = arith.constant 0 : index
    %156 = vector.load %arg10[%155, %c0_41] : memref<64x128xf32, #tpu.memory_space<vmem>>, vector<8x128xf32>
    tpu.vector_store %arg10[%155, %c0_41], %154 {strides = array<i32>} : memref<64x128xf32, #tpu.memory_space<vmem>>, vector<8x128xf32>,
    %c4_i32_42 = arith.constant 4 : i32
    %c8_i32_43 = arith.constant 8 : i32
    %157 = arith.muli %c4_i32_42, %c8_i32_43 : i32
    %158 = tpu.assume_multiple %157, 8 : i32
    %159 = arith.index_cast %158 : i32 to index
    %c0_44 = arith.constant 0 : index
    %160 = vector.load %arg11[%159, %c0_44] : memref<64x512xf32, #tpu.memory_space<vmem>>, vector<8x512xf32>
    %161 = arith.truncf %154 : vector<8x128xf32> to vector<8x128xbf16>
    %cst_45 = arith.constant dense<0.000000e+00> : vector<8x512xf32>
    %162 = tpu.matmul %161, %11, %cst_45 {dimension_numbers = #tpu.dot_dimension_numbers<[1], [0], [0], [1], [0, 0, 1, 1], [], []>} : vector<8x128xbf16>, vector<128x512xbf16>, vector<8x512xf32> -> vector<8x512xf32>
    %163 = arith.addf %160, %162 : vector<8x512xf32>
    %164 = vector.extract_strided_slice %163 {offsets = [0, 0], sizes = [8, 128], strides = [1, 1]} : vector<8x512xf32> to vector<8x128xf32>
    %165 = arith.negf %164 : vector<8x128xf32>
    %166 = math.exp %165 : vector<8x128xf32>
    %cst_46 = arith.constant 1.000000e+00 : f32
    %167 = vector.broadcast %cst_46 : f32 to vector<8x128xf32>
    %168 = arith.addf %167, %166 : vector<8x128xf32>
    %169 = arith.divf %167, %168 : vector<8x128xf32>
    %170 = vector.extract_strided_slice %163 {offsets = [0, 128], sizes = [8, 128], strides = [1, 1]} : vector<8x512xf32> to vector<8x128xf32>
    %171 = arith.negf %170 : vector<8x128xf32>
    %172 = math.exp %171 : vector<8x128xf32>
    %cst_47 = arith.constant 1.000000e+00 : f32
    %173 = vector.broadcast %cst_47 : f32 to vector<8x128xf32>
    %174 = arith.addf %173, %172 : vector<8x128xf32>
    %175 = arith.divf %173, %174 : vector<8x128xf32>
    %176 = vector.extract_strided_slice %163 {offsets = [0, 256], sizes = [8, 128], strides = [1, 1]} : vector<8x512xf32> to vector<8x128xf32>
    %177 = math.tanh %176 : vector<8x128xf32>
    %178 = vector.extract_strided_slice %163 {offsets = [0, 384], sizes = [8, 128], strides = [1, 1]} : vector<8x512xf32> to vector<8x128xf32>
    %179 = arith.negf %178 : vector<8x128xf32>
    %180 = math.exp %179 : vector<8x128xf32>
    %cst_48 = arith.constant 1.000000e+00 : f32
    %181 = vector.broadcast %cst_48 : f32 to vector<8x128xf32>
    %182 = arith.addf %181, %180 : vector<8x128xf32>
    %183 = arith.divf %181, %182 : vector<8x128xf32>
    %184 = arith.mulf %175, %152 : vector<8x128xf32>
    %185 = arith.mulf %169, %177 : vector<8x128xf32>
    %186 = arith.addf %184, %185 : vector<8x128xf32>
    %187 = math.tanh %186 : vector<8x128xf32>
    %188 = arith.mulf %183, %187 : vector<8x128xf32>
    %189 = arith.index_cast %158 : i32 to index
    %c0_49 = arith.constant 0 : index
    %190 = vector.load %arg10[%189, %c0_49] : memref<64x128xf32, #tpu.memory_space<vmem>>, vector<8x128xf32>
    tpu.vector_store %arg10[%189, %c0_49], %188 {strides = array<i32>} : memref<64x128xf32, #tpu.memory_space<vmem>>, vector<8x128xf32>,
    %c5_i32 = arith.constant 5 : i32
    %c8_i32_50 = arith.constant 8 : i32
    %191 = arith.muli %c5_i32, %c8_i32_50 : i32
    %192 = tpu.assume_multiple %191, 8 : i32
    %193 = arith.index_cast %192 : i32 to index
    %c0_51 = arith.constant 0 : index
    %194 = vector.load %arg11[%193, %c0_51] : memref<64x512xf32, #tpu.memory_space<vmem>>, vector<8x512xf32>
    %195 = arith.truncf %188 : vector<8x128xf32> to vector<8x128xbf16>
    %cst_52 = arith.constant dense<0.000000e+00> : vector<8x512xf32>
    %196 = tpu.matmul %195, %11, %cst_52 {dimension_numbers = #tpu.dot_dimension_numbers<[1], [0], [0], [1], [0, 0, 1, 1], [], []>} : vector<8x128xbf16>, vector<128x512xbf16>, vector<8x512xf32> -> vector<8x512xf32>
    %197 = arith.addf %194, %196 : vector<8x512xf32>
    %198 = vector.extract_strided_slice %197 {offsets = [0, 0], sizes = [8, 128], strides = [1, 1]} : vector<8x512xf32> to vector<8x128xf32>
    %199 = arith.negf %198 : vector<8x128xf32>
    %200 = math.exp %199 : vector<8x128xf32>
    %cst_53 = arith.constant 1.000000e+00 : f32
    %201 = vector.broadcast %cst_53 : f32 to vector<8x128xf32>
    %202 = arith.addf %201, %200 : vector<8x128xf32>
    %203 = arith.divf %201, %202 : vector<8x128xf32>
    %204 = vector.extract_strided_slice %197 {offsets = [0, 128], sizes = [8, 128], strides = [1, 1]} : vector<8x512xf32> to vector<8x128xf32>
    %205 = arith.negf %204 : vector<8x128xf32>
    %206 = math.exp %205 : vector<8x128xf32>
    %cst_54 = arith.constant 1.000000e+00 : f32
    %207 = vector.broadcast %cst_54 : f32 to vector<8x128xf32>
    %208 = arith.addf %207, %206 : vector<8x128xf32>
    %209 = arith.divf %207, %208 : vector<8x128xf32>
    %210 = vector.extract_strided_slice %197 {offsets = [0, 256], sizes = [8, 128], strides = [1, 1]} : vector<8x512xf32> to vector<8x128xf32>
    %211 = math.tanh %210 : vector<8x128xf32>
    %212 = vector.extract_strided_slice %197 {offsets = [0, 384], sizes = [8, 128], strides = [1, 1]} : vector<8x512xf32> to vector<8x128xf32>
    %213 = arith.negf %212 : vector<8x128xf32>
    %214 = math.exp %213 : vector<8x128xf32>
    %cst_55 = arith.constant 1.000000e+00 : f32
    %215 = vector.broadcast %cst_55 : f32 to vector<8x128xf32>
    %216 = arith.addf %215, %214 : vector<8x128xf32>
    %217 = arith.divf %215, %216 : vector<8x128xf32>
    %218 = arith.mulf %209, %186 : vector<8x128xf32>
    %219 = arith.mulf %203, %211 : vector<8x128xf32>
    %220 = arith.addf %218, %219 : vector<8x128xf32>
    %221 = math.tanh %220 : vector<8x128xf32>
    %222 = arith.mulf %217, %221 : vector<8x128xf32>
    %223 = arith.index_cast %192 : i32 to index
    %c0_56 = arith.constant 0 : index
    %224 = vector.load %arg10[%223, %c0_56] : memref<64x128xf32, #tpu.memory_space<vmem>>, vector<8x128xf32>
    tpu.vector_store %arg10[%223, %c0_56], %222 {strides = array<i32>} : memref<64x128xf32, #tpu.memory_space<vmem>>, vector<8x128xf32>,
    %c6_i32 = arith.constant 6 : i32
    %c8_i32_57 = arith.constant 8 : i32
    %225 = arith.muli %c6_i32, %c8_i32_57 : i32
    %226 = tpu.assume_multiple %225, 8 : i32
    %227 = arith.index_cast %226 : i32 to index
    %c0_58 = arith.constant 0 : index
    %228 = vector.load %arg11[%227, %c0_58] : memref<64x512xf32, #tpu.memory_space<vmem>>, vector<8x512xf32>
    %229 = arith.truncf %222 : vector<8x128xf32> to vector<8x128xbf16>
    %cst_59 = arith.constant dense<0.000000e+00> : vector<8x512xf32>
    %230 = tpu.matmul %229, %11, %cst_59 {dimension_numbers = #tpu.dot_dimension_numbers<[1], [0], [0], [1], [0, 0, 1, 1], [], []>} : vector<8x128xbf16>, vector<128x512xbf16>, vector<8x512xf32> -> vector<8x512xf32>
    %231 = arith.addf %228, %230 : vector<8x512xf32>
    %232 = vector.extract_strided_slice %231 {offsets = [0, 0], sizes = [8, 128], strides = [1, 1]} : vector<8x512xf32> to vector<8x128xf32>
    %233 = arith.negf %232 : vector<8x128xf32>
    %234 = math.exp %233 : vector<8x128xf32>
    %cst_60 = arith.constant 1.000000e+00 : f32
    %235 = vector.broadcast %cst_60 : f32 to vector<8x128xf32>
    %236 = arith.addf %235, %234 : vector<8x128xf32>
    %237 = arith.divf %235, %236 : vector<8x128xf32>
    %238 = vector.extract_strided_slice %231 {offsets = [0, 128], sizes = [8, 128], strides = [1, 1]} : vector<8x512xf32> to vector<8x128xf32>
    %239 = arith.negf %238 : vector<8x128xf32>
    %240 = math.exp %239 : vector<8x128xf32>
    %cst_61 = arith.constant 1.000000e+00 : f32
    %241 = vector.broadcast %cst_61 : f32 to vector<8x128xf32>
    %242 = arith.addf %241, %240 : vector<8x128xf32>
    %243 = arith.divf %241, %242 : vector<8x128xf32>
    %244 = vector.extract_strided_slice %231 {offsets = [0, 256], sizes = [8, 128], strides = [1, 1]} : vector<8x512xf32> to vector<8x128xf32>
    %245 = math.tanh %244 : vector<8x128xf32>
    %246 = vector.extract_strided_slice %231 {offsets = [0, 384], sizes = [8, 128], strides = [1, 1]} : vector<8x512xf32> to vector<8x128xf32>
    %247 = arith.negf %246 : vector<8x128xf32>
    %248 = math.exp %247 : vector<8x128xf32>
    %cst_62 = arith.constant 1.000000e+00 : f32
    %249 = vector.broadcast %cst_62 : f32 to vector<8x128xf32>
    %250 = arith.addf %249, %248 : vector<8x128xf32>
    %251 = arith.divf %249, %250 : vector<8x128xf32>
    %252 = arith.mulf %243, %220 : vector<8x128xf32>
    %253 = arith.mulf %237, %245 : vector<8x128xf32>
    %254 = arith.addf %252, %253 : vector<8x128xf32>
    %255 = math.tanh %254 : vector<8x128xf32>
    %256 = arith.mulf %251, %255 : vector<8x128xf32>
    %257 = arith.index_cast %226 : i32 to index
    %c0_63 = arith.constant 0 : index
    %258 = vector.load %arg10[%257, %c0_63] : memref<64x128xf32, #tpu.memory_space<vmem>>, vector<8x128xf32>
    tpu.vector_store %arg10[%257, %c0_63], %256 {strides = array<i32>} : memref<64x128xf32, #tpu.memory_space<vmem>>, vector<8x128xf32>,
    %c7_i32 = arith.constant 7 : i32
    %c8_i32_64 = arith.constant 8 : i32
    %259 = arith.muli %c7_i32, %c8_i32_64 : i32
    %260 = tpu.assume_multiple %259, 8 : i32
    %261 = arith.index_cast %260 : i32 to index
    %c0_65 = arith.constant 0 : index
    %262 = vector.load %arg11[%261, %c0_65] : memref<64x512xf32, #tpu.memory_space<vmem>>, vector<8x512xf32>
    %263 = arith.truncf %256 : vector<8x128xf32> to vector<8x128xbf16>
    %cst_66 = arith.constant dense<0.000000e+00> : vector<8x512xf32>
    %264 = tpu.matmul %263, %11, %cst_66 {dimension_numbers = #tpu.dot_dimension_numbers<[1], [0], [0], [1], [0, 0, 1, 1], [], []>} : vector<8x128xbf16>, vector<128x512xbf16>, vector<8x512xf32> -> vector<8x512xf32>
    %265 = arith.addf %262, %264 : vector<8x512xf32>
    %266 = vector.extract_strided_slice %265 {offsets = [0, 0], sizes = [8, 128], strides = [1, 1]} : vector<8x512xf32> to vector<8x128xf32>
    %267 = arith.negf %266 : vector<8x128xf32>
    %268 = math.exp %267 : vector<8x128xf32>
    %cst_67 = arith.constant 1.000000e+00 : f32
    %269 = vector.broadcast %cst_67 : f32 to vector<8x128xf32>
    %270 = arith.addf %269, %268 : vector<8x128xf32>
    %271 = arith.divf %269, %270 : vector<8x128xf32>
    %272 = vector.extract_strided_slice %265 {offsets = [0, 128], sizes = [8, 128], strides = [1, 1]} : vector<8x512xf32> to vector<8x128xf32>
    %273 = arith.negf %272 : vector<8x128xf32>
    %274 = math.exp %273 : vector<8x128xf32>
    %cst_68 = arith.constant 1.000000e+00 : f32
    %275 = vector.broadcast %cst_68 : f32 to vector<8x128xf32>
    %276 = arith.addf %275, %274 : vector<8x128xf32>
    %277 = arith.divf %275, %276 : vector<8x128xf32>
    %278 = vector.extract_strided_slice %265 {offsets = [0, 256], sizes = [8, 128], strides = [1, 1]} : vector<8x512xf32> to vector<8x128xf32>
    %279 = math.tanh %278 : vector<8x128xf32>
    %280 = vector.extract_strided_slice %265 {offsets = [0, 384], sizes = [8, 128], strides = [1, 1]} : vector<8x512xf32> to vector<8x128xf32>
    %281 = arith.negf %280 : vector<8x128xf32>
    %282 = math.exp %281 : vector<8x128xf32>
    %cst_69 = arith.constant 1.000000e+00 : f32
    %283 = vector.broadcast %cst_69 : f32 to vector<8x128xf32>
    %284 = arith.addf %283, %282 : vector<8x128xf32>
    %285 = arith.divf %283, %284 : vector<8x128xf32>
    %286 = arith.mulf %277, %254 : vector<8x128xf32>
    %287 = arith.mulf %271, %279 : vector<8x128xf32>
    %288 = arith.addf %286, %287 : vector<8x128xf32>
    %289 = math.tanh %288 : vector<8x128xf32>
    %290 = arith.mulf %285, %289 : vector<8x128xf32>
    %291 = arith.index_cast %260 : i32 to index
    %c0_70 = arith.constant 0 : index
    %292 = vector.load %arg10[%291, %c0_70] : memref<64x128xf32, #tpu.memory_space<vmem>>, vector<8x128xf32>
    tpu.vector_store %arg10[%291, %c0_70], %290 {strides = array<i32>} : memref<64x128xf32, #tpu.memory_space<vmem>>, vector<8x128xf32>,
    %c8_i32_71 = arith.constant 8 : i32
    %c0_i32_72 = arith.constant 0 : i32
    %293 = tpu.memref_slice %arg17[%c0_i32_72] : memref<5x!tpu.dma_semaphore, #tpu.memory_space<semaphore_mem>> -> memref<1x!tpu.dma_semaphore, #tpu.memory_space<semaphore_mem>>
    %294 = tpu.memref_squeeze %293 : memref<1x!tpu.dma_semaphore, #tpu.memory_space<semaphore_mem>> -> memref<!tpu.dma_semaphore, #tpu.memory_space<semaphore_mem>>
    tpu.wait_dma2 semaphore(%294 : memref<!tpu.dma_semaphore, #tpu.memory_space<semaphore_mem>>) src(%arg4 : memref<128x512xbf16, #tpu.memory_space<any>>) dst(%arg12 : memref<128x512xbf16, #tpu.memory_space<vmem>>)
    %c1_i32_73 = arith.constant 1 : i32
    %295 = tpu.memref_slice %arg17[%c1_i32_73] : memref<5x!tpu.dma_semaphore, #tpu.memory_space<semaphore_mem>> -> memref<1x!tpu.dma_semaphore, #tpu.memory_space<semaphore_mem>>
    %296 = tpu.memref_squeeze %295 : memref<1x!tpu.dma_semaphore, #tpu.memory_space<semaphore_mem>> -> memref<!tpu.dma_semaphore, #tpu.memory_space<semaphore_mem>>
    tpu.wait_dma2 semaphore(%296 : memref<!tpu.dma_semaphore, #tpu.memory_space<semaphore_mem>>) src(%arg5 : memref<128x512xbf16, #tpu.memory_space<any>>) dst(%arg13 : memref<128x512xbf16, #tpu.memory_space<vmem>>)
    %c2_i32_74 = arith.constant 2 : i32
    %297 = tpu.memref_slice %arg17[%c2_i32_74] : memref<5x!tpu.dma_semaphore, #tpu.memory_space<semaphore_mem>> -> memref<1x!tpu.dma_semaphore, #tpu.memory_space<semaphore_mem>>
    %298 = tpu.memref_squeeze %297 : memref<1x!tpu.dma_semaphore, #tpu.memory_space<semaphore_mem>> -> memref<!tpu.dma_semaphore, #tpu.memory_space<semaphore_mem>>
    tpu.wait_dma2 semaphore(%298 : memref<!tpu.dma_semaphore, #tpu.memory_space<semaphore_mem>>) src(%arg6 : memref<1x512xf32, #tpu.memory_space<any>>) dst(%arg14 : memref<1x512xf32, #tpu.memory_space<vmem>>)
    %c0_75 = arith.constant 0 : index
    %c0_76 = arith.constant 0 : index
    %299 = vector.load %arg12[%c0_75, %c0_76] : memref<128x512xbf16, #tpu.memory_space<vmem>>, vector<128x512xbf16>
    %c0_77 = arith.constant 0 : index
    %c0_78 = arith.constant 0 : index
    %300 = vector.load %arg13[%c0_77, %c0_78] : memref<128x512xbf16, #tpu.memory_space<vmem>>, vector<128x512xbf16>
    %c0_79 = arith.constant 0 : index
    %c0_80 = arith.constant 0 : index
    %301 = vector.load %arg14[%c0_79, %c0_80] : memref<1x512xf32, #tpu.memory_space<vmem>>, vector<1x512xf32>
    %c0_81 = arith.constant 0 : index
    %c0_82 = arith.constant 0 : index
    %302 = vector.load %arg10[%c0_81, %c0_82] : memref<64x128xf32, #tpu.memory_space<vmem>>, vector<64x128xf32>
    %303 = arith.truncf %302 : vector<64x128xf32> to vector<64x128xbf16>
    %cst_83 = arith.constant dense<0.000000e+00> : vector<64x512xf32>
    %304 = tpu.matmul %303, %299, %cst_83 {dimension_numbers = #tpu.dot_dimension_numbers<[1], [0], [0], [1], [0, 0, 1, 1], [], []>} : vector<64x128xbf16>, vector<128x512xbf16>, vector<64x512xf32> -> vector<64x512xf32>
    %305 = vector.broadcast %301 : vector<1x512xf32> to vector<64x512xf32>
    %306 = arith.addf %304, %305 : vector<64x512xf32>
    %c0_84 = arith.constant 0 : index
    %c0_85 = arith.constant 0 : index
    %307 = vector.load %arg11[%c0_84, %c0_85] : memref<64x512xf32, #tpu.memory_space<vmem>>, vector<64x512xf32>
    tpu.vector_store %arg11[%c0_84, %c0_85], %306 {strides = array<i32>} : memref<64x512xf32, #tpu.memory_space<vmem>>, vector<64x512xf32>,
    %cst_86 = arith.constant 0.000000e+00 : f32
    %308 = vector.broadcast %cst_86 : f32 to vector<8x128xf32>
    %cst_87 = arith.constant 0.000000e+00 : f32
    %309 = vector.broadcast %cst_87 : f32 to vector<8x128xf32>
    %c0_i32_88 = arith.constant 0 : i32
    %c8_i32_89 = arith.constant 8 : i32
    %310 = arith.muli %c0_i32_88, %c8_i32_89 : i32
    %311 = tpu.assume_multiple %310, 8 : i32
    %312 = arith.index_cast %311 : i32 to index
    %c0_90 = arith.constant 0 : index
    %313 = vector.load %arg11[%312, %c0_90] : memref<64x512xf32, #tpu.memory_space<vmem>>, vector<8x512xf32>
    %314 = arith.truncf %308 : vector<8x128xf32> to vector<8x128xbf16>
    %cst_91 = arith.constant dense<0.000000e+00> : vector<8x512xf32>
    %315 = tpu.matmul %314, %300, %cst_91 {dimension_numbers = #tpu.dot_dimension_numbers<[1], [0], [0], [1], [0, 0, 1, 1], [], []>} : vector<8x128xbf16>, vector<128x512xbf16>, vector<8x512xf32> -> vector<8x512xf32>
    %316 = arith.addf %313, %315 : vector<8x512xf32>
    %317 = vector.extract_strided_slice %316 {offsets = [0, 0], sizes = [8, 128], strides = [1, 1]} : vector<8x512xf32> to vector<8x128xf32>
    %318 = arith.negf %317 : vector<8x128xf32>
    %319 = math.exp %318 : vector<8x128xf32>
    %cst_92 = arith.constant 1.000000e+00 : f32
    %320 = vector.broadcast %cst_92 : f32 to vector<8x128xf32>
    %321 = arith.addf %320, %319 : vector<8x128xf32>
    %322 = arith.divf %320, %321 : vector<8x128xf32>
    %323 = vector.extract_strided_slice %316 {offsets = [0, 128], sizes = [8, 128], strides = [1, 1]} : vector<8x512xf32> to vector<8x128xf32>
    %324 = arith.negf %323 : vector<8x128xf32>
    %325 = math.exp %324 : vector<8x128xf32>
    %cst_93 = arith.constant 1.000000e+00 : f32
    %326 = vector.broadcast %cst_93 : f32 to vector<8x128xf32>
    %327 = arith.addf %326, %325 : vector<8x128xf32>
    %328 = arith.divf %326, %327 : vector<8x128xf32>
    %329 = vector.extract_strided_slice %316 {offsets = [0, 256], sizes = [8, 128], strides = [1, 1]} : vector<8x512xf32> to vector<8x128xf32>
    %330 = math.tanh %329 : vector<8x128xf32>
    %331 = vector.extract_strided_slice %316 {offsets = [0, 384], sizes = [8, 128], strides = [1, 1]} : vector<8x512xf32> to vector<8x128xf32>
    %332 = arith.negf %331 : vector<8x128xf32>
    %333 = math.exp %332 : vector<8x128xf32>
    %cst_94 = arith.constant 1.000000e+00 : f32
    %334 = vector.broadcast %cst_94 : f32 to vector<8x128xf32>
    %335 = arith.addf %334, %333 : vector<8x128xf32>
    %336 = arith.divf %334, %335 : vector<8x128xf32>
    %337 = arith.mulf %328, %309 : vector<8x128xf32>
    %338 = arith.mulf %322, %330 : vector<8x128xf32>
    %339 = arith.addf %337, %338 : vector<8x128xf32>
    %340 = math.tanh %339 : vector<8x128xf32>
    %341 = arith.mulf %336, %340 : vector<8x128xf32>
    %342 = arith.index_cast %311 : i32 to index
    %c0_95 = arith.constant 0 : index
    %343 = vector.load %arg10[%342, %c0_95] : memref<64x128xf32, #tpu.memory_space<vmem>>, vector<8x128xf32>
    tpu.vector_store %arg10[%342, %c0_95], %341 {strides = array<i32>} : memref<64x128xf32, #tpu.memory_space<vmem>>, vector<8x128xf32>,
    %c1_i32_96 = arith.constant 1 : i32
    %c8_i32_97 = arith.constant 8 : i32
    %344 = arith.muli %c1_i32_96, %c8_i32_97 : i32
    %345 = tpu.assume_multiple %344, 8 : i32
    %346 = arith.index_cast %345 : i32 to index
    %c0_98 = arith.constant 0 : index
    %347 = vector.load %arg11[%346, %c0_98] : memref<64x512xf32, #tpu.memory_space<vmem>>, vector<8x512xf32>
    %348 = arith.truncf %341 : vector<8x128xf32> to vector<8x128xbf16>
    %cst_99 = arith.constant dense<0.000000e+00> : vector<8x512xf32>
    %349 = tpu.matmul %348, %300, %cst_99 {dimension_numbers = #tpu.dot_dimension_numbers<[1], [0], [0], [1], [0, 0, 1, 1], [], []>} : vector<8x128xbf16>, vector<128x512xbf16>, vector<8x512xf32> -> vector<8x512xf32>
    %350 = arith.addf %347, %349 : vector<8x512xf32>
    %351 = vector.extract_strided_slice %350 {offsets = [0, 0], sizes = [8, 128], strides = [1, 1]} : vector<8x512xf32> to vector<8x128xf32>
    %352 = arith.negf %351 : vector<8x128xf32>
    %353 = math.exp %352 : vector<8x128xf32>
    %cst_100 = arith.constant 1.000000e+00 : f32
    %354 = vector.broadcast %cst_100 : f32 to vector<8x128xf32>
    %355 = arith.addf %354, %353 : vector<8x128xf32>
    %356 = arith.divf %354, %355 : vector<8x128xf32>
    %357 = vector.extract_strided_slice %350 {offsets = [0, 128], sizes = [8, 128], strides = [1, 1]} : vector<8x512xf32> to vector<8x128xf32>
    %358 = arith.negf %357 : vector<8x128xf32>
    %359 = math.exp %358 : vector<8x128xf32>
    %cst_101 = arith.constant 1.000000e+00 : f32
    %360 = vector.broadcast %cst_101 : f32 to vector<8x128xf32>
    %361 = arith.addf %360, %359 : vector<8x128xf32>
    %362 = arith.divf %360, %361 : vector<8x128xf32>
    %363 = vector.extract_strided_slice %350 {offsets = [0, 256], sizes = [8, 128], strides = [1, 1]} : vector<8x512xf32> to vector<8x128xf32>
    %364 = math.tanh %363 : vector<8x128xf32>
    %365 = vector.extract_strided_slice %350 {offsets = [0, 384], sizes = [8, 128], strides = [1, 1]} : vector<8x512xf32> to vector<8x128xf32>
    %366 = arith.negf %365 : vector<8x128xf32>
    %367 = math.exp %366 : vector<8x128xf32>
    %cst_102 = arith.constant 1.000000e+00 : f32
    %368 = vector.broadcast %cst_102 : f32 to vector<8x128xf32>
    %369 = arith.addf %368, %367 : vector<8x128xf32>
    %370 = arith.divf %368, %369 : vector<8x128xf32>
    %371 = arith.mulf %362, %339 : vector<8x128xf32>
    %372 = arith.mulf %356, %364 : vector<8x128xf32>
    %373 = arith.addf %371, %372 : vector<8x128xf32>
    %374 = math.tanh %373 : vector<8x128xf32>
    %375 = arith.mulf %370, %374 : vector<8x128xf32>
    %376 = arith.index_cast %345 : i32 to index
    %c0_103 = arith.constant 0 : index
    %377 = vector.load %arg10[%376, %c0_103] : memref<64x128xf32, #tpu.memory_space<vmem>>, vector<8x128xf32>
    tpu.vector_store %arg10[%376, %c0_103], %375 {strides = array<i32>} : memref<64x128xf32, #tpu.memory_space<vmem>>, vector<8x128xf32>,
    %c2_i32_104 = arith.constant 2 : i32
    %c8_i32_105 = arith.constant 8 : i32
    %378 = arith.muli %c2_i32_104, %c8_i32_105 : i32
    %379 = tpu.assume_multiple %378, 8 : i32
    %380 = arith.index_cast %379 : i32 to index
    %c0_106 = arith.constant 0 : index
    %381 = vector.load %arg11[%380, %c0_106] : memref<64x512xf32, #tpu.memory_space<vmem>>, vector<8x512xf32>
    %382 = arith.truncf %375 : vector<8x128xf32> to vector<8x128xbf16>
    %cst_107 = arith.constant dense<0.000000e+00> : vector<8x512xf32>
    %383 = tpu.matmul %382, %300, %cst_107 {dimension_numbers = #tpu.dot_dimension_numbers<[1], [0], [0], [1], [0, 0, 1, 1], [], []>} : vector<8x128xbf16>, vector<128x512xbf16>, vector<8x512xf32> -> vector<8x512xf32>
    %384 = arith.addf %381, %383 : vector<8x512xf32>
    %385 = vector.extract_strided_slice %384 {offsets = [0, 0], sizes = [8, 128], strides = [1, 1]} : vector<8x512xf32> to vector<8x128xf32>
    %386 = arith.negf %385 : vector<8x128xf32>
    %387 = math.exp %386 : vector<8x128xf32>
    %cst_108 = arith.constant 1.000000e+00 : f32
    %388 = vector.broadcast %cst_108 : f32 to vector<8x128xf32>
    %389 = arith.addf %388, %387 : vector<8x128xf32>
    %390 = arith.divf %388, %389 : vector<8x128xf32>
    %391 = vector.extract_strided_slice %384 {offsets = [0, 128], sizes = [8, 128], strides = [1, 1]} : vector<8x512xf32> to vector<8x128xf32>
    %392 = arith.negf %391 : vector<8x128xf32>
    %393 = math.exp %392 : vector<8x128xf32>
    %cst_109 = arith.constant 1.000000e+00 : f32
    %394 = vector.broadcast %cst_109 : f32 to vector<8x128xf32>
    %395 = arith.addf %394, %393 : vector<8x128xf32>
    %396 = arith.divf %394, %395 : vector<8x128xf32>
    %397 = vector.extract_strided_slice %384 {offsets = [0, 256], sizes = [8, 128], strides = [1, 1]} : vector<8x512xf32> to vector<8x128xf32>
    %398 = math.tanh %397 : vector<8x128xf32>
    %399 = vector.extract_strided_slice %384 {offsets = [0, 384], sizes = [8, 128], strides = [1, 1]} : vector<8x512xf32> to vector<8x128xf32>
    %400 = arith.negf %399 : vector<8x128xf32>
    %401 = math.exp %400 : vector<8x128xf32>
    %cst_110 = arith.constant 1.000000e+00 : f32
    %402 = vector.broadcast %cst_110 : f32 to vector<8x128xf32>
    %403 = arith.addf %402, %401 : vector<8x128xf32>
    %404 = arith.divf %402, %403 : vector<8x128xf32>
    %405 = arith.mulf %396, %373 : vector<8x128xf32>
    %406 = arith.mulf %390, %398 : vector<8x128xf32>
    %407 = arith.addf %405, %406 : vector<8x128xf32>
    %408 = math.tanh %407 : vector<8x128xf32>
    %409 = arith.mulf %404, %408 : vector<8x128xf32>
    %410 = arith.index_cast %379 : i32 to index
    %c0_111 = arith.constant 0 : index
    %411 = vector.load %arg10[%410, %c0_111] : memref<64x128xf32, #tpu.memory_space<vmem>>, vector<8x128xf32>
    tpu.vector_store %arg10[%410, %c0_111], %409 {strides = array<i32>} : memref<64x128xf32, #tpu.memory_space<vmem>>, vector<8x128xf32>,
    %c3_i32_112 = arith.constant 3 : i32
    %c8_i32_113 = arith.constant 8 : i32
    %412 = arith.muli %c3_i32_112, %c8_i32_113 : i32
    %413 = tpu.assume_multiple %412, 8 : i32
    %414 = arith.index_cast %413 : i32 to index
    %c0_114 = arith.constant 0 : index
    %415 = vector.load %arg11[%414, %c0_114] : memref<64x512xf32, #tpu.memory_space<vmem>>, vector<8x512xf32>
    %416 = arith.truncf %409 : vector<8x128xf32> to vector<8x128xbf16>
    %cst_115 = arith.constant dense<0.000000e+00> : vector<8x512xf32>
    %417 = tpu.matmul %416, %300, %cst_115 {dimension_numbers = #tpu.dot_dimension_numbers<[1], [0], [0], [1], [0, 0, 1, 1], [], []>} : vector<8x128xbf16>, vector<128x512xbf16>, vector<8x512xf32> -> vector<8x512xf32>
    %418 = arith.addf %415, %417 : vector<8x512xf32>
    %419 = vector.extract_strided_slice %418 {offsets = [0, 0], sizes = [8, 128], strides = [1, 1]} : vector<8x512xf32> to vector<8x128xf32>
    %420 = arith.negf %419 : vector<8x128xf32>
    %421 = math.exp %420 : vector<8x128xf32>
    %cst_116 = arith.constant 1.000000e+00 : f32
    %422 = vector.broadcast %cst_116 : f32 to vector<8x128xf32>
    %423 = arith.addf %422, %421 : vector<8x128xf32>
    %424 = arith.divf %422, %423 : vector<8x128xf32>
    %425 = vector.extract_strided_slice %418 {offsets = [0, 128], sizes = [8, 128], strides = [1, 1]} : vector<8x512xf32> to vector<8x128xf32>
    %426 = arith.negf %425 : vector<8x128xf32>
    %427 = math.exp %426 : vector<8x128xf32>
    %cst_117 = arith.constant 1.000000e+00 : f32
    %428 = vector.broadcast %cst_117 : f32 to vector<8x128xf32>
    %429 = arith.addf %428, %427 : vector<8x128xf32>
    %430 = arith.divf %428, %429 : vector<8x128xf32>
    %431 = vector.extract_strided_slice %418 {offsets = [0, 256], sizes = [8, 128], strides = [1, 1]} : vector<8x512xf32> to vector<8x128xf32>
    %432 = math.tanh %431 : vector<8x128xf32>
    %433 = vector.extract_strided_slice %418 {offsets = [0, 384], sizes = [8, 128], strides = [1, 1]} : vector<8x512xf32> to vector<8x128xf32>
    %434 = arith.negf %433 : vector<8x128xf32>
    %435 = math.exp %434 : vector<8x128xf32>
    %cst_118 = arith.constant 1.000000e+00 : f32
    %436 = vector.broadcast %cst_118 : f32 to vector<8x128xf32>
    %437 = arith.addf %436, %435 : vector<8x128xf32>
    %438 = arith.divf %436, %437 : vector<8x128xf32>
    %439 = arith.mulf %430, %407 : vector<8x128xf32>
    %440 = arith.mulf %424, %432 : vector<8x128xf32>
    %441 = arith.addf %439, %440 : vector<8x128xf32>
    %442 = math.tanh %441 : vector<8x128xf32>
    %443 = arith.mulf %438, %442 : vector<8x128xf32>
    %444 = arith.index_cast %413 : i32 to index
    %c0_119 = arith.constant 0 : index
    %445 = vector.load %arg10[%444, %c0_119] : memref<64x128xf32, #tpu.memory_space<vmem>>, vector<8x128xf32>
    tpu.vector_store %arg10[%444, %c0_119], %443 {strides = array<i32>} : memref<64x128xf32, #tpu.memory_space<vmem>>, vector<8x128xf32>,
    %c4_i32_120 = arith.constant 4 : i32
    %c8_i32_121 = arith.constant 8 : i32
    %446 = arith.muli %c4_i32_120, %c8_i32_121 : i32
    %447 = tpu.assume_multiple %446, 8 : i32
    %448 = arith.index_cast %447 : i32 to index
    %c0_122 = arith.constant 0 : index
    %449 = vector.load %arg11[%448, %c0_122] : memref<64x512xf32, #tpu.memory_space<vmem>>, vector<8x512xf32>
    %450 = arith.truncf %443 : vector<8x128xf32> to vector<8x128xbf16>
    %cst_123 = arith.constant dense<0.000000e+00> : vector<8x512xf32>
    %451 = tpu.matmul %450, %300, %cst_123 {dimension_numbers = #tpu.dot_dimension_numbers<[1], [0], [0], [1], [0, 0, 1, 1], [], []>} : vector<8x128xbf16>, vector<128x512xbf16>, vector<8x512xf32> -> vector<8x512xf32>
    %452 = arith.addf %449, %451 : vector<8x512xf32>
    %453 = vector.extract_strided_slice %452 {offsets = [0, 0], sizes = [8, 128], strides = [1, 1]} : vector<8x512xf32> to vector<8x128xf32>
    %454 = arith.negf %453 : vector<8x128xf32>
    %455 = math.exp %454 : vector<8x128xf32>
    %cst_124 = arith.constant 1.000000e+00 : f32
    %456 = vector.broadcast %cst_124 : f32 to vector<8x128xf32>
    %457 = arith.addf %456, %455 : vector<8x128xf32>
    %458 = arith.divf %456, %457 : vector<8x128xf32>
    %459 = vector.extract_strided_slice %452 {offsets = [0, 128], sizes = [8, 128], strides = [1, 1]} : vector<8x512xf32> to vector<8x128xf32>
    %460 = arith.negf %459 : vector<8x128xf32>
    %461 = math.exp %460 : vector<8x128xf32>
    %cst_125 = arith.constant 1.000000e+00 : f32
    %462 = vector.broadcast %cst_125 : f32 to vector<8x128xf32>
    %463 = arith.addf %462, %461 : vector<8x128xf32>
    %464 = arith.divf %462, %463 : vector<8x128xf32>
    %465 = vector.extract_strided_slice %452 {offsets = [0, 256], sizes = [8, 128], strides = [1, 1]} : vector<8x512xf32> to vector<8x128xf32>
    %466 = math.tanh %465 : vector<8x128xf32>
    %467 = vector.extract_strided_slice %452 {offsets = [0, 384], sizes = [8, 128], strides = [1, 1]} : vector<8x512xf32> to vector<8x128xf32>
    %468 = arith.negf %467 : vector<8x128xf32>
    %469 = math.exp %468 : vector<8x128xf32>
    %cst_126 = arith.constant 1.000000e+00 : f32
    %470 = vector.broadcast %cst_126 : f32 to vector<8x128xf32>
    %471 = arith.addf %470, %469 : vector<8x128xf32>
    %472 = arith.divf %470, %471 : vector<8x128xf32>
    %473 = arith.mulf %464, %441 : vector<8x128xf32>
    %474 = arith.mulf %458, %466 : vector<8x128xf32>
    %475 = arith.addf %473, %474 : vector<8x128xf32>
    %476 = math.tanh %475 : vector<8x128xf32>
    %477 = arith.mulf %472, %476 : vector<8x128xf32>
    %478 = arith.index_cast %447 : i32 to index
    %c0_127 = arith.constant 0 : index
    %479 = vector.load %arg10[%478, %c0_127] : memref<64x128xf32, #tpu.memory_space<vmem>>, vector<8x128xf32>
    tpu.vector_store %arg10[%478, %c0_127], %477 {strides = array<i32>} : memref<64x128xf32, #tpu.memory_space<vmem>>, vector<8x128xf32>,
    %c5_i32_128 = arith.constant 5 : i32
    %c8_i32_129 = arith.constant 8 : i32
    %480 = arith.muli %c5_i32_128, %c8_i32_129 : i32
    %481 = tpu.assume_multiple %480, 8 : i32
    %482 = arith.index_cast %481 : i32 to index
    %c0_130 = arith.constant 0 : index
    %483 = vector.load %arg11[%482, %c0_130] : memref<64x512xf32, #tpu.memory_space<vmem>>, vector<8x512xf32>
    %484 = arith.truncf %477 : vector<8x128xf32> to vector<8x128xbf16>
    %cst_131 = arith.constant dense<0.000000e+00> : vector<8x512xf32>
    %485 = tpu.matmul %484, %300, %cst_131 {dimension_numbers = #tpu.dot_dimension_numbers<[1], [0], [0], [1], [0, 0, 1, 1], [], []>} : vector<8x128xbf16>, vector<128x512xbf16>, vector<8x512xf32> -> vector<8x512xf32>
    %486 = arith.addf %483, %485 : vector<8x512xf32>
    %487 = vector.extract_strided_slice %486 {offsets = [0, 0], sizes = [8, 128], strides = [1, 1]} : vector<8x512xf32> to vector<8x128xf32>
    %488 = arith.negf %487 : vector<8x128xf32>
    %489 = math.exp %488 : vector<8x128xf32>
    %cst_132 = arith.constant 1.000000e+00 : f32
    %490 = vector.broadcast %cst_132 : f32 to vector<8x128xf32>
    %491 = arith.addf %490, %489 : vector<8x128xf32>
    %492 = arith.divf %490, %491 : vector<8x128xf32>
    %493 = vector.extract_strided_slice %486 {offsets = [0, 128], sizes = [8, 128], strides = [1, 1]} : vector<8x512xf32> to vector<8x128xf32>
    %494 = arith.negf %493 : vector<8x128xf32>
    %495 = math.exp %494 : vector<8x128xf32>
    %cst_133 = arith.constant 1.000000e+00 : f32
    %496 = vector.broadcast %cst_133 : f32 to vector<8x128xf32>
    %497 = arith.addf %496, %495 : vector<8x128xf32>
    %498 = arith.divf %496, %497 : vector<8x128xf32>
    %499 = vector.extract_strided_slice %486 {offsets = [0, 256], sizes = [8, 128], strides = [1, 1]} : vector<8x512xf32> to vector<8x128xf32>
    %500 = math.tanh %499 : vector<8x128xf32>
    %501 = vector.extract_strided_slice %486 {offsets = [0, 384], sizes = [8, 128], strides = [1, 1]} : vector<8x512xf32> to vector<8x128xf32>
    %502 = arith.negf %501 : vector<8x128xf32>
    %503 = math.exp %502 : vector<8x128xf32>
    %cst_134 = arith.constant 1.000000e+00 : f32
    %504 = vector.broadcast %cst_134 : f32 to vector<8x128xf32>
    %505 = arith.addf %504, %503 : vector<8x128xf32>
    %506 = arith.divf %504, %505 : vector<8x128xf32>
    %507 = arith.mulf %498, %475 : vector<8x128xf32>
    %508 = arith.mulf %492, %500 : vector<8x128xf32>
    %509 = arith.addf %507, %508 : vector<8x128xf32>
    %510 = math.tanh %509 : vector<8x128xf32>
    %511 = arith.mulf %506, %510 : vector<8x128xf32>
    %512 = arith.index_cast %481 : i32 to index
    %c0_135 = arith.constant 0 : index
    %513 = vector.load %arg10[%512, %c0_135] : memref<64x128xf32, #tpu.memory_space<vmem>>, vector<8x128xf32>
    tpu.vector_store %arg10[%512, %c0_135], %511 {strides = array<i32>} : memref<64x128xf32, #tpu.memory_space<vmem>>, vector<8x128xf32>,
    %c6_i32_136 = arith.constant 6 : i32
    %c8_i32_137 = arith.constant 8 : i32
    %514 = arith.muli %c6_i32_136, %c8_i32_137 : i32
    %515 = tpu.assume_multiple %514, 8 : i32
    %516 = arith.index_cast %515 : i32 to index
    %c0_138 = arith.constant 0 : index
    %517 = vector.load %arg11[%516, %c0_138] : memref<64x512xf32, #tpu.memory_space<vmem>>, vector<8x512xf32>
    %518 = arith.truncf %511 : vector<8x128xf32> to vector<8x128xbf16>
    %cst_139 = arith.constant dense<0.000000e+00> : vector<8x512xf32>
    %519 = tpu.matmul %518, %300, %cst_139 {dimension_numbers = #tpu.dot_dimension_numbers<[1], [0], [0], [1], [0, 0, 1, 1], [], []>} : vector<8x128xbf16>, vector<128x512xbf16>, vector<8x512xf32> -> vector<8x512xf32>
    %520 = arith.addf %517, %519 : vector<8x512xf32>
    %521 = vector.extract_strided_slice %520 {offsets = [0, 0], sizes = [8, 128], strides = [1, 1]} : vector<8x512xf32> to vector<8x128xf32>
    %522 = arith.negf %521 : vector<8x128xf32>
    %523 = math.exp %522 : vector<8x128xf32>
    %cst_140 = arith.constant 1.000000e+00 : f32
    %524 = vector.broadcast %cst_140 : f32 to vector<8x128xf32>
    %525 = arith.addf %524, %523 : vector<8x128xf32>
    %526 = arith.divf %524, %525 : vector<8x128xf32>
    %527 = vector.extract_strided_slice %520 {offsets = [0, 128], sizes = [8, 128], strides = [1, 1]} : vector<8x512xf32> to vector<8x128xf32>
    %528 = arith.negf %527 : vector<8x128xf32>
    %529 = math.exp %528 : vector<8x128xf32>
    %cst_141 = arith.constant 1.000000e+00 : f32
    %530 = vector.broadcast %cst_141 : f32 to vector<8x128xf32>
    %531 = arith.addf %530, %529 : vector<8x128xf32>
    %532 = arith.divf %530, %531 : vector<8x128xf32>
    %533 = vector.extract_strided_slice %520 {offsets = [0, 256], sizes = [8, 128], strides = [1, 1]} : vector<8x512xf32> to vector<8x128xf32>
    %534 = math.tanh %533 : vector<8x128xf32>
    %535 = vector.extract_strided_slice %520 {offsets = [0, 384], sizes = [8, 128], strides = [1, 1]} : vector<8x512xf32> to vector<8x128xf32>
    %536 = arith.negf %535 : vector<8x128xf32>
    %537 = math.exp %536 : vector<8x128xf32>
    %cst_142 = arith.constant 1.000000e+00 : f32
    %538 = vector.broadcast %cst_142 : f32 to vector<8x128xf32>
    %539 = arith.addf %538, %537 : vector<8x128xf32>
    %540 = arith.divf %538, %539 : vector<8x128xf32>
    %541 = arith.mulf %532, %509 : vector<8x128xf32>
    %542 = arith.mulf %526, %534 : vector<8x128xf32>
    %543 = arith.addf %541, %542 : vector<8x128xf32>
    %544 = math.tanh %543 : vector<8x128xf32>
    %545 = arith.mulf %540, %544 : vector<8x128xf32>
    %546 = arith.index_cast %515 : i32 to index
    %c0_143 = arith.constant 0 : index
    %547 = vector.load %arg10[%546, %c0_143] : memref<64x128xf32, #tpu.memory_space<vmem>>, vector<8x128xf32>
    tpu.vector_store %arg10[%546, %c0_143], %545 {strides = array<i32>} : memref<64x128xf32, #tpu.memory_space<vmem>>, vector<8x128xf32>,
    %c7_i32_144 = arith.constant 7 : i32
    %c8_i32_145 = arith.constant 8 : i32
    %548 = arith.muli %c7_i32_144, %c8_i32_145 : i32
    %549 = tpu.assume_multiple %548, 8 : i32
    %550 = arith.index_cast %549 : i32 to index
    %c0_146 = arith.constant 0 : index
    %551 = vector.load %arg11[%550, %c0_146] : memref<64x512xf32, #tpu.memory_space<vmem>>, vector<8x512xf32>
    %552 = arith.truncf %545 : vector<8x128xf32> to vector<8x128xbf16>
    %cst_147 = arith.constant dense<0.000000e+00> : vector<8x512xf32>
    %553 = tpu.matmul %552, %300, %cst_147 {dimension_numbers = #tpu.dot_dimension_numbers<[1], [0], [0], [1], [0, 0, 1, 1], [], []>} : vector<8x128xbf16>, vector<128x512xbf16>, vector<8x512xf32> -> vector<8x512xf32>
    %554 = arith.addf %551, %553 : vector<8x512xf32>
    %555 = vector.extract_strided_slice %554 {offsets = [0, 0], sizes = [8, 128], strides = [1, 1]} : vector<8x512xf32> to vector<8x128xf32>
    %556 = arith.negf %555 : vector<8x128xf32>
    %557 = math.exp %556 : vector<8x128xf32>
    %cst_148 = arith.constant 1.000000e+00 : f32
    %558 = vector.broadcast %cst_148 : f32 to vector<8x128xf32>
    %559 = arith.addf %558, %557 : vector<8x128xf32>
    %560 = arith.divf %558, %559 : vector<8x128xf32>
    %561 = vector.extract_strided_slice %554 {offsets = [0, 128], sizes = [8, 128], strides = [1, 1]} : vector<8x512xf32> to vector<8x128xf32>
    %562 = arith.negf %561 : vector<8x128xf32>
    %563 = math.exp %562 : vector<8x128xf32>
    %cst_149 = arith.constant 1.000000e+00 : f32
    %564 = vector.broadcast %cst_149 : f32 to vector<8x128xf32>
    %565 = arith.addf %564, %563 : vector<8x128xf32>
    %566 = arith.divf %564, %565 : vector<8x128xf32>
    %567 = vector.extract_strided_slice %554 {offsets = [0, 256], sizes = [8, 128], strides = [1, 1]} : vector<8x512xf32> to vector<8x128xf32>
    %568 = math.tanh %567 : vector<8x128xf32>
    %569 = vector.extract_strided_slice %554 {offsets = [0, 384], sizes = [8, 128], strides = [1, 1]} : vector<8x512xf32> to vector<8x128xf32>
    %570 = arith.negf %569 : vector<8x128xf32>
    %571 = math.exp %570 : vector<8x128xf32>
    %cst_150 = arith.constant 1.000000e+00 : f32
    %572 = vector.broadcast %cst_150 : f32 to vector<8x128xf32>
    %573 = arith.addf %572, %571 : vector<8x128xf32>
    %574 = arith.divf %572, %573 : vector<8x128xf32>
    %575 = arith.mulf %566, %543 : vector<8x128xf32>
    %576 = arith.mulf %560, %568 : vector<8x128xf32>
    %577 = arith.addf %575, %576 : vector<8x128xf32>
    %578 = math.tanh %577 : vector<8x128xf32>
    %579 = arith.mulf %574, %578 : vector<8x128xf32>
    %580 = arith.index_cast %549 : i32 to index
    %c0_151 = arith.constant 0 : index
    %581 = vector.load %arg10[%580, %c0_151] : memref<64x128xf32, #tpu.memory_space<vmem>>, vector<8x128xf32>
    tpu.vector_store %arg10[%580, %c0_151], %579 {strides = array<i32>} : memref<64x128xf32, #tpu.memory_space<vmem>>, vector<8x128xf32>,
    %c8_i32_152 = arith.constant 8 : i32
    %c3_i32_153 = arith.constant 3 : i32
    %582 = tpu.memref_slice %arg17[%c3_i32_153] : memref<5x!tpu.dma_semaphore, #tpu.memory_space<semaphore_mem>> -> memref<1x!tpu.dma_semaphore, #tpu.memory_space<semaphore_mem>>
    %583 = tpu.memref_squeeze %582 : memref<1x!tpu.dma_semaphore, #tpu.memory_space<semaphore_mem>> -> memref<!tpu.dma_semaphore, #tpu.memory_space<semaphore_mem>>
    tpu.wait_dma2 semaphore(%583 : memref<!tpu.dma_semaphore, #tpu.memory_space<semaphore_mem>>) src(%arg7 : memref<128x128xbf16, #tpu.memory_space<any>>) dst(%arg15 : memref<128x128xbf16, #tpu.memory_space<vmem>>)
    %c4_i32_154 = arith.constant 4 : i32
    %584 = tpu.memref_slice %arg17[%c4_i32_154] : memref<5x!tpu.dma_semaphore, #tpu.memory_space<semaphore_mem>> -> memref<1x!tpu.dma_semaphore, #tpu.memory_space<semaphore_mem>>
    %585 = tpu.memref_squeeze %584 : memref<1x!tpu.dma_semaphore, #tpu.memory_space<semaphore_mem>> -> memref<!tpu.dma_semaphore, #tpu.memory_space<semaphore_mem>>
    tpu.wait_dma2 semaphore(%585 : memref<!tpu.dma_semaphore, #tpu.memory_space<semaphore_mem>>) src(%arg8 : memref<1x128xf32, #tpu.memory_space<any>>) dst(%arg16 : memref<1x128xf32, #tpu.memory_space<vmem>>)
    %c0_155 = arith.constant 0 : index
    %c0_156 = arith.constant 0 : index
    %586 = vector.load %arg10[%c0_155, %c0_156] : memref<64x128xf32, #tpu.memory_space<vmem>>, vector<64x128xf32>
    %587 = arith.truncf %586 : vector<64x128xf32> to vector<64x128xbf16>
    %c0_157 = arith.constant 0 : index
    %c0_158 = arith.constant 0 : index
    %588 = vector.load %arg15[%c0_157, %c0_158] : memref<128x128xbf16, #tpu.memory_space<vmem>>, vector<128x128xbf16>
    %cst_159 = arith.constant dense<0.000000e+00> : vector<64x128xf32>
    %589 = tpu.matmul %587, %588, %cst_159 {dimension_numbers = #tpu.dot_dimension_numbers<[1], [0], [0], [1], [0, 0, 1, 1], [], []>} : vector<64x128xbf16>, vector<128x128xbf16>, vector<64x128xf32> -> vector<64x128xf32>
    %c0_160 = arith.constant 0 : index
    %c0_161 = arith.constant 0 : index
    %590 = vector.load %arg16[%c0_160, %c0_161] : memref<1x128xf32, #tpu.memory_space<vmem>>, vector<1x128xf32>
    %591 = vector.broadcast %590 : vector<1x128xf32> to vector<64x128xf32>
    %592 = arith.addf %589, %591 : vector<64x128xf32>
    %c0_162 = arith.constant 0 : index
    %c0_163 = arith.constant 0 : index
    %593 = vector.load %arg9[%c0_162, %c0_163] : memref<64x128xf32, #tpu.memory_space<vmem>>, vector<64x128xf32>
    tpu.vector_store %arg9[%c0_162, %c0_163], %592 {strides = array<i32>} : memref<64x128xf32, #tpu.memory_space<vmem>>, vector<64x128xf32>,
    return
  }
}

</mosaic_0001>

<llo_original>
// kernel: tpu_custom_call.1
$region0: #{tpu_custom_call.1}
  #allocation0 [shape = 'u32[]', space=smem, size = 0x4, offset = 0x4, fixed_abs, tag = 'smem constant byte address 0x4 - core index']
  #allocation1 [shape = 'u32[144,128]{1,0:T(1,128)}', space=vmem, size = 0x12000, scoped, tag = 'internal scratch']
  #allocation2 [shape = 'f32[64,128]{1,0:T(8,128)}', space=vmem, size = 0x8000, scoped, tag = 'scratch operand']
  #allocation3 [shape = 'f32[64,512]{1,0:T(8,128)}', space=vmem, size = 0x20000, scoped, tag = 'scratch operand']
  #allocation4 [shape = 'bf16[128,512]{1,0:T(8,128)(2,1)}', space=vmem, size = 0x20000, scoped, tag = 'scratch operand']
  #allocation5 [shape = 'bf16[128,512]{1,0:T(8,128)(2,1)}', space=vmem, size = 0x20000, scoped, tag = 'scratch operand']
  #allocation6 [shape = 'f32[1,512]{1,0:T(1,128)}', space=vmem, size = 0x800, scoped, tag = 'scratch operand']
  #allocation7 [shape = 'bf16[128,128]{1,0:T(8,128)(2,1)}', space=vmem, size = 0x8000, scoped, tag = 'scratch operand']
  #allocation8 [shape = 'f32[1,128]{1,0:T(1,128)}', space=vmem, size = 0x200, scoped, tag = 'scratch operand']
  #allocation9 [shape = 's32[5]{0}', space=sflag, size = 0x14, scoped, tag = 'scratch operand']
  #allocation14 [shape = 's32[]', space=sflag, size = 0x4, offset = 0, fixed_abs, tag = 'sflag constant byte address 0x0 - dummy sync flag']
  #allocation15 [shape = 's32[]', space=sflag, size = 0x4, offset = 0, fixed_abs, tag = 'sflag constant byte address 0x0 - dummy sync flag']
  #allocation16 [shape = 'u32[]', space=smem, size = 0x4, offset = 0x44, fixed_abs, tag = 'smem constant byte address 0x44 - assertion arg 0']
  #allocation17 [shape = 'u32[]', space=smem, size = 0x4, offset = 0x48, fixed_abs, tag = 'smem constant byte address 0x48 - assertion arg 1']
  #allocation18 [shape = 's32[]', space=sflag, size = 0x4, offset = 0, fixed_abs, tag = 'sflag constant byte address 0x0 - dummy sync flag']
  #allocation19 [shape = 's32[]', space=sflag, size = 0x4, offset = 0, fixed_abs, tag = 'sflag constant byte address 0x0 - dummy sync flag']
  #allocation20 [shape = 's32[]', space=sflag, size = 0x4, offset = 0, fixed_abs, tag = 'sflag constant byte address 0x0 - dummy sync flag']
  #allocation21 [shape = 's32[]', space=sflag, size = 0x4, offset = 0, fixed_abs, tag = 'sflag constant byte address 0x0 - dummy sync flag']
  #allocation22 [shape = 's32[]', space=sflag, size = 0x4, offset = 0, fixed_abs, tag = 'sflag constant byte address 0x0 - dummy sync flag']
  #allocation23 [shape = 's32[]', space=sflag, size = 0x4, offset = 0, fixed_abs, tag = 'sflag constant byte address 0x0 - dummy sync flag']
  %s0 = inlined_call_operand.vmem [shape: f32[64,32], index: 0, kind: input, shape index: {}]
  %s1 = inlined_call_operand.vmem [shape: bf16[32,512], index: 1, kind: input, shape index: {}]
  %s2 = inlined_call_operand.hbm [shape: bf16[128,512], index: 2, kind: input, shape index: {}]
  %s3 = inlined_call_operand.vmem [shape: f32[1,512], index: 3, kind: input, shape index: {}]
  %s4 = inlined_call_operand.hbm [shape: bf16[128,512], index: 4, kind: input, shape index: {}]
  %s5 = inlined_call_operand.hbm [shape: bf16[128,512], index: 5, kind: input, shape index: {}]
  %s6 = inlined_call_operand.vmem [shape: f32[1,512], index: 6, kind: input, shape index: {}]
  %s7 = inlined_call_operand.hbm [shape: bf16[128,128], index: 7, kind: input, shape index: {}]
  %s8 = inlined_call_operand.vmem [shape: f32[1,128], index: 8, kind: input, shape index: {}]
  %s9 = inlined_call_operand.hbm [shape: f32[64,128], index: 9, kind: output, shape index: {}]
  %s10 = sld [smem:[#allocation0]]
  $region102: #{tpu_custom_call.1} parent=0
    _
  %s12 = ssub.s32 1, %s10
  %s13 = scalar_select 0, %s12, %s10
  $region1: #{tpu_custom_call.1} parent=0
    #allocation10 [shape = 'u8[131072]{0}', space=vmem, size = 0x20000, scoped, tag = 'input window, operand 2, single buffered']
    #allocation11 [shape = 's32[1]{0}', space=sflag, size = 0x4, scoped, tag = 'scoped memory for tpu_custom_call.1']
    #allocation12 [shape = 's32[1]{0}', space=sflag, size = 0x4, scoped, tag = 'scoped memory for tpu_custom_call.1']
    #allocation13 [shape = 'u8[32768]{0}', space=vmem, size = 0x8000, scoped, tag = 'output window, operand 0, single buffered']
    %14 = vsyncpa [#allocation11], 0
    %15 = vsyncpa [#allocation12], 0
    // Predicated region
    $region2: #{tpu_custom_call.1} parent=1 // pred_check
      _
    $region3: #{tpu_custom_call.1} parent=1 // pred_check_branch
      %17 = sbr.rel (0) target = $region5
    $region4: #{tpu_custom_call.1} parent=1 // pred_region
      _
    $region5: #{tpu_custom_call.1} parent=1 // pred_fallthru
      _
    // Predicated region
    $region6: #{tpu_custom_call.1} parent=1 // pred_check
      _
    $region7: #{tpu_custom_call.1} parent=1 // pred_check_branch
      %19 = sbr.rel (0) target = $region9
    $region8: #{tpu_custom_call.1} parent=1 // pred_region
      _
    $region9: #{tpu_custom_call.1} parent=1 // pred_fallthru
      _
    // Predicated region
    $region10: #{tpu_custom_call.1} parent=1 // pred_check
      _
    $region11: #{tpu_custom_call.1} parent=1 // pred_check_branch
      %21 = sbr.rel (0) target = $region13
    $region12: #{tpu_custom_call.1} parent=1 // pred_region
      %s23 = ssub.s32 4096, 4096
      %24 = vsyncadd [#allocation11], %s23
      %s25 = sshll.u32 [#allocation10], 4
      %s26 = int_to_ptr.vmem [resolvable:$true] %s25
      %31 = dma.hbm_to_vmem [thread:$0]  %s2, 4096, %s26, [#allocation11], 256, 256, 16
    $region13: #{tpu_custom_call.1} parent=1 // pred_fallthru
      _
    // Predicated region
    $region14: #{tpu_custom_call.1} parent=1 // pred_check
      _
    $region15: #{tpu_custom_call.1} parent=1 // pred_check_branch
      %33 = sbr.rel (0) target = $region17
    $region16: #{tpu_custom_call.1} parent=1 // pred_region
      _
    $region17: #{tpu_custom_call.1} parent=1 // pred_fallthru
      _
    // Predicated region
    $region18: #{tpu_custom_call.1} parent=1 // pred_check
      _
    $region19: #{tpu_custom_call.1} parent=1 // pred_check_branch
      %35 = sbr.rel (0) target = $region21
    $region20: #{tpu_custom_call.1} parent=1 // pred_region
      %36 = dma.done [#allocation11], 4096
    $region21: #{tpu_custom_call.1} parent=1 // pred_fallthru
      _
    // Predicated region
    $region22: #{tpu_custom_call.1} parent=1 // pred_check
      _
    $region23: #{tpu_custom_call.1} parent=1 // pred_check_branch
      %39 = sbr.rel target = $region25
    $region24: #{tpu_custom_call.1} parent=1 // pred_region
      %40 = sst [smem:[#allocation16]] [#allocation15]
      %41 = sst [smem:[#allocation17]] [#allocation14]
    $region25: #{tpu_custom_call.1} parent=1 // pred_fallthru
      _
    %43 = shalt.err (0)
    %s45 = sshll.u32 [#allocation4], 4
    %s46 = int_to_ptr.vmem [resolvable:$true] %s45
    %48 = dma.hbm_to_vmem [thread:$0]  %s4, 4096, %s46, [#allocation9]
    %s49 = scalar_lea.sflag [#allocation9], 1
    // Predicated region
    $region26: #{tpu_custom_call.1} parent=1 // pred_check
      _
    $region27: #{tpu_custom_call.1} parent=1 // pred_check_branch
      %51 = sbr.rel target = $region29
    $region28: #{tpu_custom_call.1} parent=1 // pred_region
      %52 = sst [smem:[#allocation16]] [#allocation19]
      %53 = sst [smem:[#allocation17]] [#allocation18]
    $region29: #{tpu_custom_call.1} parent=1 // pred_fallthru
      _
    %55 = shalt.err (0)
    %s57 = sshll.u32 [#allocation5], 4
    %s58 = int_to_ptr.vmem [resolvable:$true] %s57
    %60 = dma.hbm_to_vmem [thread:$0]  %s5, 4096, %s58, %s49
    %s61 = scalar_lea.sflag [#allocation9], 2
    %p63 = scmp.lt.u32.totalorder 4, 8
    %p64 = pneg %p63
    // Predicated region
    $region30: #{tpu_custom_call.1} parent=1 // pred_check
      _
    $region31: #{tpu_custom_call.1} parent=1 // pred_check_branch
      %66 = sbr.rel (%p63) target = $region33
    $region32: #{tpu_custom_call.1} parent=1 // pred_region
      %s82 = sand.u32 4, 7
      %p83 = scmp.eq.s32.totalorder %s82, 0
      %p84 = pneg %p83
      // Predicated region
      $region45: #{tpu_custom_call.1} parent=32 // pred_check
        _
      $region46: #{tpu_custom_call.1} parent=32 // pred_check_branch
        %86 = sbr.rel (%p83) target = $region48
      $region47: #{tpu_custom_call.1} parent=32 // pred_region
        %s87 = sand.u32 4, 7
        %s88 = ssub.s32 4, %s87
        %s89 = scalar_lea.vmem %s6, %s88
        %s90 = ssub.s32 4, %s87
        %s91 = scalar_lea.vmem [#allocation6], %s90
        %s92 = sshll.u32 1, %s87
        %s93 = ssub.s32 %s92, 1
        loop: start=0, step=1, limit=1
        $region49: #{tpu_custom_call.1} parent=47 // loop_pre_header
          _
        $region50: #{tpu_custom_call.1} parent=47 // loop_header
          %s95 = sphi 0, %s99
          %p96 = scmp.ge.s32.totalorder %s95, 1
          %s100 = sphi %s89, %s89
          %s101 = sphi %s91, %s91
        $region51: #{tpu_custom_call.1} parent=47 // loop_header_branch
          %98 = sbr.rel (%p96) target = $region55
        $region52: #{tpu_custom_call.1} parent=47 // loop_body
          %v102 = vld [vmem:[%s100] sm:%s93]
          %103 = vst [vmem:[%s101] sm:%s93] %v102
        $region53: #{tpu_custom_call.1} parent=47 // loop_footer
          %s99 = sadd.s32 1, %s95
        $region54: #{tpu_custom_call.1} parent=47 // loop_footer_branch
          %94 = sbr.rel target = $region50
        $region55: #{tpu_custom_call.1} parent=47 // loop_exit
          _
      $region48: #{tpu_custom_call.1} parent=32 // pred_fallthru
        _
    $region33: #{tpu_custom_call.1} parent=1 // pred_fallthru
      _
    // Predicated region
    $region34: #{tpu_custom_call.1} parent=1 // pred_check
      %p67 = pneg %p63
    $region35: #{tpu_custom_call.1} parent=1 // pred_check_branch
      %69 = sbr.rel (%p67) target = $region37
    $region36: #{tpu_custom_call.1} parent=1 // pred_region
      %s70 = sshll.u32 1, 4
      %s71 = ssub.s32 %s70, 1
      loop: start=0, step=1, limit=1
      $region38: #{tpu_custom_call.1} parent=36 // loop_pre_header
        _
      $region39: #{tpu_custom_call.1} parent=36 // loop_header
        %s73 = sphi 0, %s77
        %p74 = scmp.ge.s32.totalorder %s73, 1
        %s78 = sphi %s6, %s6
        %s79 = sphi [#allocation6], [#allocation6]
      $region40: #{tpu_custom_call.1} parent=36 // loop_header_branch
        %76 = sbr.rel (%p74) target = $region44
      $region41: #{tpu_custom_call.1} parent=36 // loop_body
        %v80 = vld [vmem:[%s78] sm:%s71]
        %81 = vst [vmem:[%s79] sm:%s71] %v80
      $region42: #{tpu_custom_call.1} parent=36 // loop_footer
        %s77 = sadd.s32 1, %s73
      $region43: #{tpu_custom_call.1} parent=36 // loop_footer_branch
        %72 = sbr.rel target = $region39
      $region44: #{tpu_custom_call.1} parent=36 // loop_exit
        _
    $region37: #{tpu_custom_call.1} parent=1 // pred_fallthru
      _
    // Predicated region
    $region56: #{tpu_custom_call.1} parent=1 // pred_check
      _
    $region57: #{tpu_custom_call.1} parent=1 // pred_check_branch
      %106 = sbr.rel (0) target = $region59
    $region58: #{tpu_custom_call.1} parent=1 // pred_region
      %107 = vsyncadd %s61, 64
    $region59: #{tpu_custom_call.1} parent=1 // pred_fallthru
      _
    %s108 = scalar_lea.sflag [#allocation9], 3
    // Predicated region
    $region60: #{tpu_custom_call.1} parent=1 // pred_check
      _
    $region61: #{tpu_custom_call.1} parent=1 // pred_check_branch
      %110 = sbr.rel target = $region63
    $region62: #{tpu_custom_call.1} parent=1 // pred_region
      %111 = sst [smem:[#allocation16]] [#allocation22]
      %112 = sst [smem:[#allocation17]] [#allocation21]
    $region63: #{tpu_custom_call.1} parent=1 // pred_fallthru
      _
    %114 = shalt.err (0)
    %s116 = sshll.u32 [#allocation7], 4
    %s117 = int_to_ptr.vmem [resolvable:$true] %s116
    %119 = dma.hbm_to_vmem [thread:$0]  %s7, 1024, %s117, %s108
    %s120 = scalar_lea.sflag [#allocation9], 4
    %p122 = scmp.lt.u32.totalorder 1, 8
    %p123 = pneg %p122
    // Predicated region
    $region64: #{tpu_custom_call.1} parent=1 // pred_check
      _
    $region65: #{tpu_custom_call.1} parent=1 // pred_check_branch
      %125 = sbr.rel (%p122) target = $region67
    $region66: #{tpu_custom_call.1} parent=1 // pred_region
      %s141 = sand.u32 1, 7
      %p142 = scmp.eq.s32.totalorder %s141, 0
      %p143 = pneg %p142
      // Predicated region
      $region79: #{tpu_custom_call.1} parent=66 // pred_check
        _
      $region80: #{tpu_custom_call.1} parent=66 // pred_check_branch
        %145 = sbr.rel (%p142) target = $region82
      $region81: #{tpu_custom_call.1} parent=66 // pred_region
        %s146 = sand.u32 1, 7
        %s147 = ssub.s32 1, %s146
        %s148 = scalar_lea.vmem %s8, %s147
        %s149 = ssub.s32 1, %s146
        %s150 = scalar_lea.vmem [#allocation8], %s149
        %s151 = sshll.u32 1, %s146
        %s152 = ssub.s32 %s151, 1
        loop: start=0, step=1, limit=1
        $region83: #{tpu_custom_call.1} parent=81 // loop_pre_header
          _
        $region84: #{tpu_custom_call.1} parent=81 // loop_header
          %s154 = sphi 0, %s158
          %p155 = scmp.ge.s32.totalorder %s154, 1
          %s159 = sphi %s148, %s148
          %s160 = sphi %s150, %s150
        $region85: #{tpu_custom_call.1} parent=81 // loop_header_branch
          %157 = sbr.rel (%p155) target = $region89
        $region86: #{tpu_custom_call.1} parent=81 // loop_body
          %v161 = vld [vmem:[%s159] sm:%s152]
          %162 = vst [vmem:[%s160] sm:%s152] %v161
        $region87: #{tpu_custom_call.1} parent=81 // loop_footer
          %s158 = sadd.s32 1, %s154
        $region88: #{tpu_custom_call.1} parent=81 // loop_footer_branch
          %153 = sbr.rel target = $region84
        $region89: #{tpu_custom_call.1} parent=81 // loop_exit
          _
      $region82: #{tpu_custom_call.1} parent=66 // pred_fallthru
        _
    $region67: #{tpu_custom_call.1} parent=1 // pred_fallthru
      _
    // Predicated region
    $region68: #{tpu_custom_call.1} parent=1 // pred_check
      %p126 = pneg %p122
    $region69: #{tpu_custom_call.1} parent=1 // pred_check_branch
      %128 = sbr.rel (%p126) target = $region71
    $region70: #{tpu_custom_call.1} parent=1 // pred_region
      %s129 = sshll.u32 1, 1
      %s130 = ssub.s32 %s129, 1
      loop: start=0, step=1, limit=1
      $region72: #{tpu_custom_call.1} parent=70 // loop_pre_header
        _
      $region73: #{tpu_custom_call.1} parent=70 // loop_header
        %s132 = sphi 0, %s136
        %p133 = scmp.ge.s32.totalorder %s132, 1
        %s137 = sphi %s8, %s8
        %s138 = sphi [#allocation8], [#allocation8]
      $region74: #{tpu_custom_call.1} parent=70 // loop_header_branch
        %135 = sbr.rel (%p133) target = $region78
      $region75: #{tpu_custom_call.1} parent=70 // loop_body
        %v139 = vld [vmem:[%s137] sm:%s130]
        %140 = vst [vmem:[%s138] sm:%s130] %v139
      $region76: #{tpu_custom_call.1} parent=70 // loop_footer
        %s136 = sadd.s32 1, %s132
      $region77: #{tpu_custom_call.1} parent=70 // loop_footer_branch
        %131 = sbr.rel target = $region73
      $region78: #{tpu_custom_call.1} parent=70 // loop_exit
        _
    $region71: #{tpu_custom_call.1} parent=1 // pred_fallthru
      _
    // Predicated region
    $region90: #{tpu_custom_call.1} parent=1 // pred_check
      _
    $region91: #{tpu_custom_call.1} parent=1 // pred_check_branch
      %165 = sbr.rel (0) target = $region93
    $region92: #{tpu_custom_call.1} parent=1 // pred_region
      %166 = vsyncadd %s120, 16
    $region93: #{tpu_custom_call.1} parent=1 // pred_fallthru
      _
    %v167 = vld [vmem:[%s1] sm:$0xff]
    %v168 = vld [vmem:[%s1 + $0x8] sm:$0xff]
    %v169 = vld [vmem:[%s1 + $0x10] sm:$0xff]
    %v170 = vld [vmem:[%s1 + $0x18] sm:$0xff]
    %v171 = vld [vmem:[%s1 + $0x20] sm:$0xff]
    %v172 = vld [vmem:[%s1 + $0x28] sm:$0xff]
    %v173 = vld [vmem:[%s1 + $0x30] sm:$0xff]
    %v174 = vld [vmem:[%s1 + $0x38] sm:$0xff]
    %v175 = vld [vmem:[#allocation10] sm:$0xff]
    %v176 = vld [vmem:[#allocation10 + $0x8] sm:$0xff]
    %v177 = vld [vmem:[#allocation10 + $0x10] sm:$0xff]
    %v178 = vld [vmem:[#allocation10 + $0x18] sm:$0xff]
    %v179 = vld [vmem:[#allocation10 + $0x20] sm:$0xff]
    %v180 = vld [vmem:[#allocation10 + $0x28] sm:$0xff]
    %v181 = vld [vmem:[#allocation10 + $0x30] sm:$0xff]
    %v182 = vld [vmem:[#allocation10 + $0x38] sm:$0xff]
    %v183 = vld [vmem:[#allocation10 + $0x40] sm:$0xff]
    %v184 = vld [vmem:[#allocation10 + $0x48] sm:$0xff]
    %v185 = vld [vmem:[#allocation10 + $0x50] sm:$0xff]
    %v186 = vld [vmem:[#allocation10 + $0x58] sm:$0xff]
    %v187 = vld [vmem:[#allocation10 + $0x60] sm:$0xff]
    %v188 = vld [vmem:[#allocation10 + $0x68] sm:$0xff]
    %v189 = vld [vmem:[#allocation10 + $0x70] sm:$0xff]
    %v190 = vld [vmem:[#allocation10 + $0x78] sm:$0xff]
    %v191 = vld [vmem:[#allocation10 + $0x80] sm:$0xff]
    %v192 = vld [vmem:[#allocation10 + $0x88] sm:$0xff]
    %v193 = vld [vmem:[#allocation10 + $0x90] sm:$0xff]
    %v194 = vld [vmem:[#allocation10 + $0x98] sm:$0xff]
    %v195 = vld [vmem:[#allocation10 + $0xa0] sm:$0xff]
    %v196 = vld [vmem:[#allocation10 + $0xa8] sm:$0xff]
    %v197 = vld [vmem:[#allocation10 + $0xb0] sm:$0xff]
    %v198 = vld [vmem:[#allocation10 + $0xb8] sm:$0xff]
    %v199 = vld [vmem:[#allocation10 + $0xc0] sm:$0xff]
    %v200 = vld [vmem:[#allocation10 + $0xc8] sm:$0xff]
    %v201 = vld [vmem:[#allocation10 + $0xd0] sm:$0xff]
    %v202 = vld [vmem:[#allocation10 + $0xd8] sm:$0xff]
    %v203 = vld [vmem:[#allocation10 + $0xe0] sm:$0xff]
    %v204 = vld [vmem:[#allocation10 + $0xe8] sm:$0xff]
    %v205 = vld [vmem:[#allocation10 + $0xf0] sm:$0xff]
    %v206 = vld [vmem:[#allocation10 + $0xf8] sm:$0xff]
    %v207 = vld [vmem:[%s3] sm:$0xf]
    %v208 = vld [vmem:[%s0] sm:$0xff]
    %v209 = vld [vmem:[%s0 + $0x8] sm:$0xff]
    %v210 = vld [vmem:[%s0 + $0x10] sm:$0xff]
    %v211 = vld [vmem:[%s0 + $0x18] sm:$0xff]
    %v212 = vld [vmem:[%s0 + $0x20] sm:$0xff]
    %v213 = vld [vmem:[%s0 + $0x28] sm:$0xff]
    %v214 = vld [vmem:[%s0 + $0x30] sm:$0xff]
    %v215 = vld [vmem:[%s0 + $0x38] sm:$0xff]
    %v216 = vpack.c.bf16 %v209, %v208
    %v217 = vpack.c.bf16 %v211, %v210
    %v218 = vpack.c.bf16 %v213, %v212
    %v219 = vpack.c.bf16 %v215, %v214
    %v221 = vlaneseq
    %v222 = vshrl.u32 %v221, 7
    %v223 = vsub.s32 0, %v222
    %v224 = vrot.slane %v207, %v223
    %v225 = vlaneseq
    %v226 = vshrl.u32 %v225, 7
    %v227 = vsub.s32 1, %v226
    %v228 = vrot.slane %v207, %v227
    %v229 = vlaneseq
    %v230 = vshrl.u32 %v229, 7
    %v231 = vsub.s32 2, %v230
    %v232 = vrot.slane %v207, %v231
    %v233 = vlaneseq
    %v234 = vshrl.u32 %v233, 7
    %v235 = vsub.s32 3, %v234
    %v236 = vrot.slane %v207, %v235
    %v249 = vunpack.c.l.b16 %v167
    %v250 = vunpack.c.h.b16 %v167
    %v251 = vunpack.c.l.b16 %v168
    %v252 = vunpack.c.h.b16 %v168
    %v253 = vunpack.c.l.b16 %v169
    %v254 = vunpack.c.h.b16 %v169
    %v255 = vunpack.c.l.b16 %v170
    %v256 = vunpack.c.h.b16 %v170
    %v257 = vunpack.c.l.b16 %v171
    %v258 = vunpack.c.h.b16 %v171
    %v259 = vunpack.c.l.b16 %v172
    %v260 = vunpack.c.h.b16 %v172
    %v261 = vunpack.c.l.b16 %v173
    %v262 = vunpack.c.h.b16 %v173
    %v263 = vunpack.c.l.b16 %v174
    %v264 = vunpack.c.h.b16 %v174
    %v265 = vpack.c.b16 %v253, %v249
    %v266 = vpack.c.b16 %v254, %v250
    %v267 = vpack.c.b16 %v255, %v251
    %v268 = vpack.c.b16 %v256, %v252
    %v269 = vpack.c.b16 %v261, %v257
    %v270 = vpack.c.b16 %v262, %v258
    %v271 = vpack.c.b16 %v263, %v259
    %v272 = vpack.c.b16 %v264, %v260
    %vm281 = vcmask 261120
    %v283 = vsel %vm281, %v216, 0
    %v286 = vsel %vm281, %v217, 0
    %v289 = vsel %vm281, %v218, 0
    %v292 = vsel %vm281, %v219, 0
    %294 = vmatprep.subr.bf16.mxu0 0
    %295 = vmatpush1.bf16.msra.mxu0 0
    %296 = vmatprep.subr.bf16.mxu0 0
    %297 = vmatpush1.bf16.msra.mxu0 0
    %298 = vmatprep.subr.bf16.mxu0 0
    %299 = vmatpush1.bf16.msra.mxu0 0
    %300 = vmatprep.subr.bf16.mxu0 0
    %301 = vmatpush1.bf16.msra.mxu0 0
    %302 = vmatprep.subr.bf16.mxu0 0
    %303 = vmatpush1.bf16.msra.mxu0 0
    %304 = vmatprep.subr.bf16.mxu0 0
    %305 = vmatpush1.bf16.msra.mxu0 0
    %306 = vmatprep.subr.bf16.mxu0 %v270
    %307 = vmatpush1.bf16.msra.mxu0 %v269
    %308 = vmatprep.subr.bf16.mxu0 %v266
    %309 = vmatpush1.bf16.msra.mxu0 %v265
    %310 = vmatprep.subr.bf16.mxu0 0
    %311 = vmatpush2.bf16.msra.mxu0 0
    %312 = vmatprep.subr.bf16.mxu0 0
    %313 = vmatpush2.bf16.msra.mxu0 0
    %314 = vmatprep.subr.bf16.mxu0 0
    %315 = vmatpush2.bf16.msra.mxu0 0
    %316 = vmatprep.subr.bf16.mxu0 0
    %317 = vmatpush2.bf16.msra.mxu0 0
    %318 = vmatprep.subr.bf16.mxu0 0
    %319 = vmatpush2.bf16.msra.mxu0 0
    %320 = vmatprep.subr.bf16.mxu0 0
    %321 = vmatpush2.bf16.msra.mxu0 0
    %322 = vmatprep.subr.bf16.mxu0 0
    %323 = vmatpush2.bf16.msra.mxu0 0
    %324 = vmatprep.subr.bf16.mxu0 0
    %325 = vmatpush2.bf16.msra.mxu0 0
    %326 = vmatprep.mubr.bf16.mxu0 0
    %327 = vmatmul.mubr.bf16.gmra.mxu0 %v283
    %v328 = vpop.f32.mrf.mxu0
    %v329 = vadd.f32 %v224, %v328
    %v330 = vpop.f32.mrf.mxu0
    %v331 = vadd.f32 %v228, %v330
    %v332 = vpop.f32.mrf.mxu0
    %v333 = vadd.f32 %v224, %v332
    %v334 = vpop.f32.mrf.mxu0
    %v335 = vadd.f32 %v228, %v334
    %336 = vmatprep.mubr.bf16.mxu0 0
    %337 = vmatmul.mubr.bf16.gmra.mxu0 %v286
    %v338 = vpop.f32.mrf.mxu0
    %v339 = vadd.f32 %v224, %v338
    %v340 = vpop.f32.mrf.mxu0
    %v341 = vadd.f32 %v228, %v340
    %v342 = vpop.f32.mrf.mxu0
    %v343 = vadd.f32 %v224, %v342
    %v344 = vpop.f32.mrf.mxu0
    %v345 = vadd.f32 %v228, %v344
    %346 = vmatprep.mubr.bf16.mxu0 0
    %347 = vmatmul.mubr.bf16.gmra.mxu0 %v289
    %v348 = vpop.f32.mrf.mxu0
    %v349 = vadd.f32 %v224, %v348
    %v350 = vpop.f32.mrf.mxu0
    %v351 = vadd.f32 %v228, %v350
    %v352 = vpop.f32.mrf.mxu0
    %v353 = vadd.f32 %v224, %v352
    %v354 = vpop.f32.mrf.mxu0
    %v355 = vadd.f32 %v228, %v354
    %356 = vmatprep.mubr.bf16.mxu0 0
    %357 = vmatmul.mubr.bf16.gmra.mxu0 %v292
    %v358 = vpop.f32.mrf.mxu0
    %v359 = vadd.f32 %v224, %v358
    %v360 = vpop.f32.mrf.mxu0
    %v361 = vadd.f32 %v228, %v360
    %v362 = vpop.f32.mrf.mxu0
    %v363 = vadd.f32 %v224, %v362
    %v364 = vpop.f32.mrf.mxu0
    %v365 = vadd.f32 %v228, %v364
    %366 = vdwg.mxu0
    %367 = vmatprep.subr.bf16.mxu0 0
    %368 = vmatpush1.bf16.msra.mxu0 0
    %369 = vmatprep.subr.bf16.mxu0 0
    %370 = vmatpush1.bf16.msra.mxu0 0
    %371 = vmatprep.subr.bf16.mxu0 0
    %372 = vmatpush1.bf16.msra.mxu0 0
    %373 = vmatprep.subr.bf16.mxu0 0
    %374 = vmatpush1.bf16.msra.mxu0 0
    %375 = vmatprep.subr.bf16.mxu0 0
    %376 = vmatpush1.bf16.msra.mxu0 0
    %377 = vmatprep.subr.bf16.mxu0 0
    %378 = vmatpush1.bf16.msra.mxu0 0
    %379 = vmatprep.subr.bf16.mxu0 %v272
    %380 = vmatpush1.bf16.msra.mxu0 %v271
    %381 = vmatprep.subr.bf16.mxu0 %v268
    %382 = vmatpush1.bf16.msra.mxu0 %v267
    %383 = vmatprep.subr.bf16.mxu0 0
    %384 = vmatpush2.bf16.msra.mxu0 0
    %385 = vmatprep.subr.bf16.mxu0 0
    %386 = vmatpush2.bf16.msra.mxu0 0
    %387 = vmatprep.subr.bf16.mxu0 0
    %388 = vmatpush2.bf16.msra.mxu0 0
    %389 = vmatprep.subr.bf16.mxu0 0
    %390 = vmatpush2.bf16.msra.mxu0 0
    %391 = vmatprep.subr.bf16.mxu0 0
    %392 = vmatpush2.bf16.msra.mxu0 0
    %393 = vmatprep.subr.bf16.mxu0 0
    %394 = vmatpush2.bf16.msra.mxu0 0
    %395 = vmatprep.subr.bf16.mxu0 0
    %396 = vmatpush2.bf16.msra.mxu0 0
    %397 = vmatprep.subr.bf16.mxu0 0
    %398 = vmatpush2.bf16.msra.mxu0 0
    %399 = vmatprep.mubr.bf16.mxu0 0
    %400 = vmatmul.mubr.bf16.gmra.mxu0 %v283
    %v401 = vpop.f32.mrf.mxu0
    %v402 = vadd.f32 %v232, %v401
    %v403 = vpop.f32.mrf.mxu0
    %v404 = vadd.f32 %v236, %v403
    %v405 = vpop.f32.mrf.mxu0
    %v406 = vadd.f32 %v232, %v405
    %v407 = vpop.f32.mrf.mxu0
    %v408 = vadd.f32 %v236, %v407
    %409 = vmatprep.mubr.bf16.mxu0 0
    %410 = vmatmul.mubr.bf16.gmra.mxu0 %v286
    %v411 = vpop.f32.mrf.mxu0
    %v412 = vadd.f32 %v232, %v411
    %v413 = vpop.f32.mrf.mxu0
    %v414 = vadd.f32 %v236, %v413
    %v415 = vpop.f32.mrf.mxu0
    %v416 = vadd.f32 %v232, %v415
    %v417 = vpop.f32.mrf.mxu0
    %v418 = vadd.f32 %v236, %v417
    %419 = vmatprep.mubr.bf16.mxu0 0
    %420 = vmatmul.mubr.bf16.gmra.mxu0 %v289
    %v421 = vpop.f32.mrf.mxu0
    %v422 = vadd.f32 %v232, %v421
    %v423 = vpop.f32.mrf.mxu0
    %v424 = vadd.f32 %v236, %v423
    %v425 = vpop.f32.mrf.mxu0
    %v426 = vadd.f32 %v232, %v425
    %v427 = vpop.f32.mrf.mxu0
    %v428 = vadd.f32 %v236, %v427
    %429 = vmatprep.mubr.bf16.mxu0 0
    %430 = vmatmul.mubr.bf16.gmra.mxu0 %v292
    %v431 = vpop.f32.mrf.mxu0
    %v432 = vadd.f32 %v232, %v431
    %v433 = vpop.f32.mrf.mxu0
    %v434 = vadd.f32 %v236, %v433
    %v435 = vpop.f32.mrf.mxu0
    %v436 = vadd.f32 %v232, %v435
    %v437 = vpop.f32.mrf.mxu0
    %v438 = vadd.f32 %v236, %v437
    %439 = vdwg.mxu0
    %440 = vst [vmem:[#allocation3] sm:$0xff] %v329
    %441 = vst [vmem:[#allocation3 + $0x8] sm:$0xff] %v331
    %442 = vst [vmem:[#allocation3 + $0x10] sm:$0xff] %v402
    %443 = vst [vmem:[#allocation3 + $0x18] sm:$0xff] %v404
    %444 = vst [vmem:[#allocation3 + $0x20] sm:$0xff] %v333
    %445 = vst [vmem:[#allocation3 + $0x28] sm:$0xff] %v335
    %446 = vst [vmem:[#allocation3 + $0x30] sm:$0xff] %v406
    %447 = vst [vmem:[#allocation3 + $0x38] sm:$0xff] %v408
    %448 = vst [vmem:[#allocation3 + $0x40] sm:$0xff] %v339
    %449 = vst [vmem:[#allocation3 + $0x48] sm:$0xff] %v341
    %450 = vst [vmem:[#allocation3 + $0x50] sm:$0xff] %v412
    %451 = vst [vmem:[#allocation3 + $0x58] sm:$0xff] %v414
    %452 = vst [vmem:[#allocation3 + $0x60] sm:$0xff] %v343
    %453 = vst [vmem:[#allocation3 + $0x68] sm:$0xff] %v345
    %454 = vst [vmem:[#allocation3 + $0x70] sm:$0xff] %v416
    %455 = vst [vmem:[#allocation3 + $0x78] sm:$0xff] %v418
    %456 = vst [vmem:[#allocation3 + $0x80] sm:$0xff] %v349
    %457 = vst [vmem:[#allocation3 + $0x88] sm:$0xff] %v351
    %458 = vst [vmem:[#allocation3 + $0x90] sm:$0xff] %v422
    %459 = vst [vmem:[#allocation3 + $0x98] sm:$0xff] %v424
    %460 = vst [vmem:[#allocation3 + $0xa0] sm:$0xff] %v353
    %461 = vst [vmem:[#allocation3 + $0xa8] sm:$0xff] %v355
    %462 = vst [vmem:[#allocation3 + $0xb0] sm:$0xff] %v426
    %463 = vst [vmem:[#allocation3 + $0xb8] sm:$0xff] %v428
    %464 = vst [vmem:[#allocation3 + $0xc0] sm:$0xff] %v359
    %465 = vst [vmem:[#allocation3 + $0xc8] sm:$0xff] %v361
    %466 = vst [vmem:[#allocation3 + $0xd0] sm:$0xff] %v432
    %467 = vst [vmem:[#allocation3 + $0xd8] sm:$0xff] %v434
    %468 = vst [vmem:[#allocation3 + $0xe0] sm:$0xff] %v363
    %469 = vst [vmem:[#allocation3 + $0xe8] sm:$0xff] %v365
    %470 = vst [vmem:[#allocation3 + $0xf0] sm:$0xff] %v436
    %471 = vst [vmem:[#allocation3 + $0xf8] sm:$0xff] %v438
    %s472 = smul.u32 0, 4
    %s473 = smul.addr %s472, 8
    %s474 = scalar_lea.vmem [#allocation3], %s473
    %v475 = vld [vmem:[%s474] sm:$0xff]
    %v476 = vld [vmem:[%s474 + $0x8] sm:$0xff]
    %v477 = vld [vmem:[%s474 + $0x10] sm:$0xff]
    %v478 = vld [vmem:[%s474 + $0x18] sm:$0xff]
    %v511 = vunpack.c.l.b16 %v175
    %v512 = vunpack.c.h.b16 %v175
    %v513 = vunpack.c.l.b16 %v176
    %v514 = vunpack.c.h.b16 %v176
    %v515 = vunpack.c.l.b16 %v177
    %v516 = vunpack.c.h.b16 %v177
    %v517 = vunpack.c.l.b16 %v178
    %v518 = vunpack.c.h.b16 %v178
    %v519 = vunpack.c.l.b16 %v179
    %v520 = vunpack.c.h.b16 %v179
    %v521 = vunpack.c.l.b16 %v180
    %v522 = vunpack.c.h.b16 %v180
    %v523 = vunpack.c.l.b16 %v181
    %v524 = vunpack.c.h.b16 %v181
    %v525 = vunpack.c.l.b16 %v182
    %v526 = vunpack.c.h.b16 %v182
    %v527 = vunpack.c.l.b16 %v183
    %v528 = vunpack.c.h.b16 %v183
    %v529 = vunpack.c.l.b16 %v184
    %v530 = vunpack.c.h.b16 %v184
    %v531 = vunpack.c.l.b16 %v185
    %v532 = vunpack.c.h.b16 %v185
    %v533 = vunpack.c.l.b16 %v186
    %v534 = vunpack.c.h.b16 %v186
    %v535 = vunpack.c.l.b16 %v187
    %v536 = vunpack.c.h.b16 %v187
    %v537 = vunpack.c.l.b16 %v188
    %v538 = vunpack.c.h.b16 %v188
    %v539 = vunpack.c.l.b16 %v189
    %v540 = vunpack.c.h.b16 %v189
    %v541 = vunpack.c.l.b16 %v190
    %v542 = vunpack.c.h.b16 %v190
    %v543 = vunpack.c.l.b16 %v191
    %v544 = vunpack.c.h.b16 %v191
    %v545 = vunpack.c.l.b16 %v192
    %v546 = vunpack.c.h.b16 %v192
    %v547 = vunpack.c.l.b16 %v193
    %v548 = vunpack.c.h.b16 %v193
    %v549 = vunpack.c.l.b16 %v194
    %v550 = vunpack.c.h.b16 %v194
    %v551 = vunpack.c.l.b16 %v195
    %v552 = vunpack.c.h.b16 %v195
    %v553 = vunpack.c.l.b16 %v196
    %v554 = vunpack.c.h.b16 %v196
    %v555 = vunpack.c.l.b16 %v197
    %v556 = vunpack.c.h.b16 %v197
    %v557 = vunpack.c.l.b16 %v198
    %v558 = vunpack.c.h.b16 %v198
    %v559 = vunpack.c.l.b16 %v199
    %v560 = vunpack.c.h.b16 %v199
    %v561 = vunpack.c.l.b16 %v200
    %v562 = vunpack.c.h.b16 %v200
    %v563 = vunpack.c.l.b16 %v201
    %v564 = vunpack.c.h.b16 %v201
    %v565 = vunpack.c.l.b16 %v202
    %v566 = vunpack.c.h.b16 %v202
    %v567 = vunpack.c.l.b16 %v203
    %v568 = vunpack.c.h.b16 %v203
    %v569 = vunpack.c.l.b16 %v204
    %v570 = vunpack.c.h.b16 %v204
    %v571 = vunpack.c.l.b16 %v205
    %v572 = vunpack.c.h.b16 %v205
    %v573 = vunpack.c.l.b16 %v206
    %v574 = vunpack.c.h.b16 %v206
    %v575 = vpack.c.b16 %v515, %v511
    %v576 = vpack.c.b16 %v516, %v512
    %v577 = vpack.c.b16 %v517, %v513
    %v578 = vpack.c.b16 %v518, %v514
    %v579 = vpack.c.b16 %v523, %v519
    %v580 = vpack.c.b16 %v524, %v520
    %v581 = vpack.c.b16 %v525, %v521
    %v582 = vpack.c.b16 %v526, %v522
    %v583 = vpack.c.b16 %v531, %v527
    %v584 = vpack.c.b16 %v532, %v528
    %v585 = vpack.c.b16 %v533, %v529
    %v586 = vpack.c.b16 %v534, %v530
    %v587 = vpack.c.b16 %v539, %v535
    %v588 = vpack.c.b16 %v540, %v536
    %v589 = vpack.c.b16 %v541, %v537
    %v590 = vpack.c.b16 %v542, %v538
    %v591 = vpack.c.b16 %v547, %v543
    %v592 = vpack.c.b16 %v548, %v544
    %v593 = vpack.c.b16 %v549, %v545
    %v594 = vpack.c.b16 %v550, %v546
    %v595 = vpack.c.b16 %v555, %v551
    %v596 = vpack.c.b16 %v556, %v552
    %v597 = vpack.c.b16 %v557, %v553
    %v598 = vpack.c.b16 %v558, %v554
    %v599 = vpack.c.b16 %v563, %v559
    %v600 = vpack.c.b16 %v564, %v560
    %v601 = vpack.c.b16 %v565, %v561
    %v602 = vpack.c.b16 %v566, %v562
    %v603 = vpack.c.b16 %v571, %v567
    %v604 = vpack.c.b16 %v572, %v568
    %v605 = vpack.c.b16 %v573, %v569
    %v606 = vpack.c.b16 %v574, %v570
    %639 = vmatprep.subr.bf16.mxu0 %v604
    %640 = vmatpush1.bf16.msra.mxu0 %v603
    %641 = vmatprep.subr.bf16.mxu0 %v600
    %642 = vmatpush1.bf16.msra.mxu0 %v599
    %643 = vmatprep.subr.bf16.mxu0 %v596
    %644 = vmatpush1.bf16.msra.mxu0 %v595
    %645 = vmatprep.subr.bf16.mxu0 %v592
    %646 = vmatpush1.bf16.msra.mxu0 %v591
    %647 = vmatprep.subr.bf16.mxu0 %v588
    %648 = vmatpush1.bf16.msra.mxu0 %v587
    %649 = vmatprep.subr.bf16.mxu0 %v584
    %650 = vmatpush1.bf16.msra.mxu0 %v583
    %651 = vmatprep.subr.bf16.mxu0 %v580
    %652 = vmatpush1.bf16.msra.mxu0 %v579
    %653 = vmatprep.subr.bf16.mxu0 %v576
    %654 = vmatpush1.bf16.msra.mxu0 %v575
    %655 = vmatprep.subr.bf16.mxu0 0
    %656 = vmatpush2.bf16.msra.mxu0 0
    %657 = vmatprep.subr.bf16.mxu0 0
    %658 = vmatpush2.bf16.msra.mxu0 0
    %659 = vmatprep.subr.bf16.mxu0 0
    %660 = vmatpush2.bf16.msra.mxu0 0
    %661 = vmatprep.subr.bf16.mxu0 0
    %662 = vmatpush2.bf16.msra.mxu0 0
    %663 = vmatprep.subr.bf16.mxu0 0
    %664 = vmatpush2.bf16.msra.mxu0 0
    %665 = vmatprep.subr.bf16.mxu0 0
    %666 = vmatpush2.bf16.msra.mxu0 0
    %667 = vmatprep.subr.bf16.mxu0 0
    %668 = vmatpush2.bf16.msra.mxu0 0
    %669 = vmatprep.subr.bf16.mxu0 0
    %670 = vmatpush2.bf16.msra.mxu0 0
    %671 = vmatprep.mubr.bf16.mxu0 0
    %672 = vmatmul.mubr.bf16.gmra.mxu0 0
    %v673 = vpop.f32.mrf.mxu0
    %v674 = vadd.f32 0.0, %v673
    %v675 = vpop.f32.mrf.mxu0
    %v676 = vadd.f32 0.0, %v675
    %v677 = vpop.f32.mrf.mxu0
    %v678 = vpop.f32.mrf.mxu0
    %679 = vdwg.mxu0
    %680 = vmatprep.subr.bf16.mxu0 %v606
    %681 = vmatpush1.bf16.msra.mxu0 %v605
    %682 = vmatprep.subr.bf16.mxu0 %v602
    %683 = vmatpush1.bf16.msra.mxu0 %v601
    %684 = vmatprep.subr.bf16.mxu0 %v598
    %685 = vmatpush1.bf16.msra.mxu0 %v597
    %686 = vmatprep.subr.bf16.mxu0 %v594
    %687 = vmatpush1.bf16.msra.mxu0 %v593
    %688 = vmatprep.subr.bf16.mxu0 %v590
    %689 = vmatpush1.bf16.msra.mxu0 %v589
    %690 = vmatprep.subr.bf16.mxu0 %v586
    %691 = vmatpush1.bf16.msra.mxu0 %v585
    %692 = vmatprep.subr.bf16.mxu0 %v582
    %693 = vmatpush1.bf16.msra.mxu0 %v581
    %694 = vmatprep.subr.bf16.mxu0 %v578
    %695 = vmatpush1.bf16.msra.mxu0 %v577
    %696 = vmatprep.subr.bf16.mxu0 0
    %697 = vmatpush2.bf16.msra.mxu0 0
    %698 = vmatprep.subr.bf16.mxu0 0
    %699 = vmatpush2.bf16.msra.mxu0 0
    %700 = vmatprep.subr.bf16.mxu0 0
    %701 = vmatpush2.bf16.msra.mxu0 0
    %702 = vmatprep.subr.bf16.mxu0 0
    %703 = vmatpush2.bf16.msra.mxu0 0
    %704 = vmatprep.subr.bf16.mxu0 0
    %705 = vmatpush2.bf16.msra.mxu0 0
    %706 = vmatprep.subr.bf16.mxu0 0
    %707 = vmatpush2.bf16.msra.mxu0 0
    %708 = vmatprep.subr.bf16.mxu0 0
    %709 = vmatpush2.bf16.msra.mxu0 0
    %710 = vmatprep.subr.bf16.mxu0 0
    %711 = vmatpush2.bf16.msra.mxu0 0
    %712 = vmatprep.mubr.bf16.mxu0 0
    %713 = vmatmul.mubr.bf16.gmra.mxu0 0
    %v714 = vpop.f32.mrf.mxu0
    %v715 = vadd.f32 0.0, %v714
    %v716 = vpop.f32.mrf.mxu0
    %v717 = vadd.f32 0.0, %v716
    %v718 = vpop.f32.mrf.mxu0
    %v719 = vpop.f32.mrf.mxu0
    %720 = vdwg.mxu0
    %v721 = vadd.f32 %v475, %v674
    %v722 = vadd.f32 %v476, %v676
    %v723 = vadd.f32 %v477, %v715
    %v724 = vadd.f32 %v478, %v717
    %v725 = vxor.u32 %v721, 2147483648
    %v726 = vmul.f32 %v725, 1.442695
    %v727 = vpow.pop %v726
    %v728 = vadd.f32 %v727, 1.0
    %v729 = vrcp.pop %v728
    %v730 = vmul.f32 1.0, %v729
    %v731 = vxor.u32 %v722, 2147483648
    %v732 = vmul.f32 %v731, 1.442695
    %v733 = vpow.pop %v732
    %v734 = vadd.f32 %v733, 1.0
    %v735 = vrcp.pop %v734
    %v736 = vmul.f32 1.0, %v735
    %v737 = vtanh.pop %v723
    %v738 = vxor.u32 %v724, 2147483648
    %v739 = vmul.f32 %v738, 1.442695
    %v740 = vpow.pop %v739
    %v741 = vadd.f32 %v740, 1.0
    %v742 = vrcp.pop %v741
    %v743 = vmul.f32 1.0, %v742
    %v744 = vmul.f32 %v736, 0.0
    %v745 = vmul.f32 %v730, %v737
    %v746 = vadd.f32 %v744, %v745
    %v747 = vtanh.pop %v746
    %v748 = vmul.f32 %v743, %v747
    %749 = vst [vmem:[#allocation2] sm:$0xff] %v748
    %s750 = smul.u32 1, 4
    %s751 = smul.addr %s750, 8
    %s752 = scalar_lea.vmem [#allocation3], %s751
    %v753 = vld [vmem:[%s752] sm:$0xff]
    %v754 = vld [vmem:[%s752 + $0x8] sm:$0xff]
    %v755 = vld [vmem:[%s752 + $0x10] sm:$0xff]
    %v756 = vld [vmem:[%s752 + $0x18] sm:$0xff]
    %v757 = vpack.c.bf16 %v748, %v748
    %758 = vmatprep.subr.bf16.mxu0 %v604
    %759 = vmatpush1.bf16.msra.mxu0 %v603
    %760 = vmatprep.subr.bf16.mxu0 %v600
    %761 = vmatpush1.bf16.msra.mxu0 %v599
    %762 = vmatprep.subr.bf16.mxu0 %v596
    %763 = vmatpush1.bf16.msra.mxu0 %v595
    %764 = vmatprep.subr.bf16.mxu0 %v592
    %765 = vmatpush1.bf16.msra.mxu0 %v591
    %766 = vmatprep.subr.bf16.mxu0 %v588
    %767 = vmatpush1.bf16.msra.mxu0 %v587
    %768 = vmatprep.subr.bf16.mxu0 %v584
    %769 = vmatpush1.bf16.msra.mxu0 %v583
    %770 = vmatprep.subr.bf16.mxu0 %v580
    %771 = vmatpush1.bf16.msra.mxu0 %v579
    %772 = vmatprep.subr.bf16.mxu0 %v576
    %773 = vmatpush1.bf16.msra.mxu0 %v575
    %774 = vmatprep.subr.bf16.mxu0 0
    %775 = vmatpush2.bf16.msra.mxu0 0
    %776 = vmatprep.subr.bf16.mxu0 0
    %777 = vmatpush2.bf16.msra.mxu0 0
    %778 = vmatprep.subr.bf16.mxu0 0
    %779 = vmatpush2.bf16.msra.mxu0 0
    %780 = vmatprep.subr.bf16.mxu0 0
    %781 = vmatpush2.bf16.msra.mxu0 0
    %782 = vmatprep.subr.bf16.mxu0 0
    %783 = vmatpush2.bf16.msra.mxu0 0
    %784 = vmatprep.subr.bf16.mxu0 0
    %785 = vmatpush2.bf16.msra.mxu0 0
    %786 = vmatprep.subr.bf16.mxu0 0
    %787 = vmatpush2.bf16.msra.mxu0 0
    %788 = vmatprep.subr.bf16.mxu0 0
    %789 = vmatpush2.bf16.msra.mxu0 0
    %790 = vmatprep.mubr.bf16.mxu0 0
    %791 = vmatmul.mubr.bf16.gmra.mxu0 %v757
    %v792 = vpop.f32.mrf.mxu0
    %v793 = vadd.f32 0.0, %v792
    %v794 = vpop.f32.mrf.mxu0
    %v795 = vadd.f32 0.0, %v794
    %v796 = vpop.f32.mrf.mxu0
    %v797 = vpop.f32.mrf.mxu0
    %798 = vdwg.mxu0
    %799 = vmatprep.subr.bf16.mxu0 %v606
    %800 = vmatpush1.bf16.msra.mxu0 %v605
    %801 = vmatprep.subr.bf16.mxu0 %v602
    %802 = vmatpush1.bf16.msra.mxu0 %v601
    %803 = vmatprep.subr.bf16.mxu0 %v598
    %804 = vmatpush1.bf16.msra.mxu0 %v597
    %805 = vmatprep.subr.bf16.mxu0 %v594
    %806 = vmatpush1.bf16.msra.mxu0 %v593
    %807 = vmatprep.subr.bf16.mxu0 %v590
    %808 = vmatpush1.bf16.msra.mxu0 %v589
    %809 = vmatprep.subr.bf16.mxu0 %v586
    %810 = vmatpush1.bf16.msra.mxu0 %v585
    %811 = vmatprep.subr.bf16.mxu0 %v582
    %812 = vmatpush1.bf16.msra.mxu0 %v581
    %813 = vmatprep.subr.bf16.mxu0 %v578
    %814 = vmatpush1.bf16.msra.mxu0 %v577
    %815 = vmatprep.subr.bf16.mxu0 0
    %816 = vmatpush2.bf16.msra.mxu0 0
    %817 = vmatprep.subr.bf16.mxu0 0
    %818 = vmatpush2.bf16.msra.mxu0 0
    %819 = vmatprep.subr.bf16.mxu0 0
    %820 = vmatpush2.bf16.msra.mxu0 0
    %821 = vmatprep.subr.bf16.mxu0 0
    %822 = vmatpush2.bf16.msra.mxu0 0
    %823 = vmatprep.subr.bf16.mxu0 0
    %824 = vmatpush2.bf16.msra.mxu0 0
    %825 = vmatprep.subr.bf16.mxu0 0
    %826 = vmatpush2.bf16.msra.mxu0 0
    %827 = vmatprep.subr.bf16.mxu0 0
    %828 = vmatpush2.bf16.msra.mxu0 0
    %829 = vmatprep.subr.bf16.mxu0 0
    %830 = vmatpush2.bf16.msra.mxu0 0
    %831 = vmatprep.mubr.bf16.mxu0 0
    %832 = vmatmul.mubr.bf16.gmra.mxu0 %v757
    %v833 = vpop.f32.mrf.mxu0
    %v834 = vadd.f32 0.0, %v833
    %v835 = vpop.f32.mrf.mxu0
    %v836 = vadd.f32 0.0, %v835
    %v837 = vpop.f32.mrf.mxu0
    %v838 = vpop.f32.mrf.mxu0
    %839 = vdwg.mxu0
    %v840 = vadd.f32 %v753, %v793
    %v841 = vadd.f32 %v754, %v795
    %v842 = vadd.f32 %v755, %v834
    %v843 = vadd.f32 %v756, %v836
    %v844 = vxor.u32 %v840, 2147483648
    %v845 = vmul.f32 %v844, 1.442695
    %v846 = vpow.pop %v845
    %v847 = vadd.f32 %v846, 1.0
    %v848 = vrcp.pop %v847
    %v849 = vmul.f32 1.0, %v848
    %v850 = vxor.u32 %v841, 2147483648
    %v851 = vmul.f32 %v850, 1.442695
    %v852 = vpow.pop %v851
    %v853 = vadd.f32 %v852, 1.0
    %v854 = vrcp.pop %v853
    %v855 = vmul.f32 1.0, %v854
    %v856 = vtanh.pop %v842
    %v857 = vxor.u32 %v843, 2147483648
    %v858 = vmul.f32 %v857, 1.442695
    %v859 = vpow.pop %v858
    %v860 = vadd.f32 %v859, 1.0
    %v861 = vrcp.pop %v860
    %v862 = vmul.f32 1.0, %v861
    %v863 = vmul.f32 %v855, %v746
    %v864 = vmul.f32 %v849, %v856
    %v865 = vadd.f32 %v863, %v864
    %v866 = vtanh.pop %v865
    %v867 = vmul.f32 %v862, %v866
    %s868 = scalar_lea.vmem [#allocation2], 8
    %869 = vst [vmem:[%s868] sm:$0xff] %v867
    %s870 = smul.u32 2, 4
    %s871 = smul.addr %s870, 8
    %s872 = scalar_lea.vmem [#allocation3], %s871
    %v873 = vld [vmem:[%s872] sm:$0xff]
    %v874 = vld [vmem:[%s872 + $0x8] sm:$0xff]
    %v875 = vld [vmem:[%s872 + $0x10] sm:$0xff]
    %v876 = vld [vmem:[%s872 + $0x18] sm:$0xff]
    %v877 = vpack.c.bf16 %v867, %v867
    %878 = vmatprep.subr.bf16.mxu0 %v604
    %879 = vmatpush1.bf16.msra.mxu0 %v603
    %880 = vmatprep.subr.bf16.mxu0 %v600
    %881 = vmatpush1.bf16.msra.mxu0 %v599
    %882 = vmatprep.subr.bf16.mxu0 %v596
    %883 = vmatpush1.bf16.msra.mxu0 %v595
    %884 = vmatprep.subr.bf16.mxu0 %v592
    %885 = vmatpush1.bf16.msra.mxu0 %v591
    %886 = vmatprep.subr.bf16.mxu0 %v588
    %887 = vmatpush1.bf16.msra.mxu0 %v587
    %888 = vmatprep.subr.bf16.mxu0 %v584
    %889 = vmatpush1.bf16.msra.mxu0 %v583
    %890 = vmatprep.subr.bf16.mxu0 %v580
    %891 = vmatpush1.bf16.msra.mxu0 %v579
    %892 = vmatprep.subr.bf16.mxu0 %v576
    %893 = vmatpush1.bf16.msra.mxu0 %v575
    %894 = vmatprep.subr.bf16.mxu0 0
    %895 = vmatpush2.bf16.msra.mxu0 0
    %896 = vmatprep.subr.bf16.mxu0 0
    %897 = vmatpush2.bf16.msra.mxu0 0
    %898 = vmatprep.subr.bf16.mxu0 0
    %899 = vmatpush2.bf16.msra.mxu0 0
    %900 = vmatprep.subr.bf16.mxu0 0
    %901 = vmatpush2.bf16.msra.mxu0 0
    %902 = vmatprep.subr.bf16.mxu0 0
    %903 = vmatpush2.bf16.msra.mxu0 0
    %904 = vmatprep.subr.bf16.mxu0 0
    %905 = vmatpush2.bf16.msra.mxu0 0
    %906 = vmatprep.subr.bf16.mxu0 0
    %907 = vmatpush2.bf16.msra.mxu0 0
    %908 = vmatprep.subr.bf16.mxu0 0
    %909 = vmatpush2.bf16.msra.mxu0 0
    %910 = vmatprep.mubr.bf16.mxu0 0
    %911 = vmatmul.mubr.bf16.gmra.mxu0 %v877
    %v912 = vpop.f32.mrf.mxu0
    %v913 = vadd.f32 0.0, %v912
    %v914 = vpop.f32.mrf.mxu0
    %v915 = vadd.f32 0.0, %v914
    %v916 = vpop.f32.mrf.mxu0
    %v917 = vpop.f32.mrf.mxu0
    %918 = vdwg.mxu0
    %919 = vmatprep.subr.bf16.mxu0 %v606
    %920 = vmatpush1.bf16.msra.mxu0 %v605
    %921 = vmatprep.subr.bf16.mxu0 %v602
    %922 = vmatpush1.bf16.msra.mxu0 %v601
    %923 = vmatprep.subr.bf16.mxu0 %v598
    %924 = vmatpush1.bf16.msra.mxu0 %v597
    %925 = vmatprep.subr.bf16.mxu0 %v594
    %926 = vmatpush1.bf16.msra.mxu0 %v593
    %927 = vmatprep.subr.bf16.mxu0 %v590
    %928 = vmatpush1.bf16.msra.mxu0 %v589
    %929 = vmatprep.subr.bf16.mxu0 %v586
    %930 = vmatpush1.bf16.msra.mxu0 %v585
    %931 = vmatprep.subr.bf16.mxu0 %v582
    %932 = vmatpush1.bf16.msra.mxu0 %v581
    %933 = vmatprep.subr.bf16.mxu0 %v578
    %934 = vmatpush1.bf16.msra.mxu0 %v577
    %935 = vmatprep.subr.bf16.mxu0 0
    %936 = vmatpush2.bf16.msra.mxu0 0
    %937 = vmatprep.subr.bf16.mxu0 0
    %938 = vmatpush2.bf16.msra.mxu0 0
    %939 = vmatprep.subr.bf16.mxu0 0
    %940 = vmatpush2.bf16.msra.mxu0 0
    %941 = vmatprep.subr.bf16.mxu0 0
    %942 = vmatpush2.bf16.msra.mxu0 0
    %943 = vmatprep.subr.bf16.mxu0 0
    %944 = vmatpush2.bf16.msra.mxu0 0
    %945 = vmatprep.subr.bf16.mxu0 0
    %946 = vmatpush2.bf16.msra.mxu0 0
    %947 = vmatprep.subr.bf16.mxu0 0
    %948 = vmatpush2.bf16.msra.mxu0 0
    %949 = vmatprep.subr.bf16.mxu0 0
    %950 = vmatpush2.bf16.msra.mxu0 0
    %951 = vmatprep.mubr.bf16.mxu0 0
    %952 = vmatmul.mubr.bf16.gmra.mxu0 %v877
    %v953 = vpop.f32.mrf.mxu0
    %v954 = vadd.f32 0.0, %v953
    %v955 = vpop.f32.mrf.mxu0
    %v956 = vadd.f32 0.0, %v955
    %v957 = vpop.f32.mrf.mxu0
    %v958 = vpop.f32.mrf.mxu0
    %959 = vdwg.mxu0
    %v960 = vadd.f32 %v873, %v913
    %v961 = vadd.f32 %v874, %v915
    %v962 = vadd.f32 %v875, %v954
    %v963 = vadd.f32 %v876, %v956
    %v964 = vxor.u32 %v960, 2147483648
    %v965 = vmul.f32 %v964, 1.442695
    %v966 = vpow.pop %v965
    %v967 = vadd.f32 %v966, 1.0
    %v968 = vrcp.pop %v967
    %v969 = vmul.f32 1.0, %v968
    %v970 = vxor.u32 %v961, 2147483648
    %v971 = vmul.f32 %v970, 1.442695
    %v972 = vpow.pop %v971
    %v973 = vadd.f32 %v972, 1.0
    %v974 = vrcp.pop %v973
    %v975 = vmul.f32 1.0, %v974
    %v976 = vtanh.pop %v962
    %v977 = vxor.u32 %v963, 2147483648
    %v978 = vmul.f32 %v977, 1.442695
    %v979 = vpow.pop %v978
    %v980 = vadd.f32 %v979, 1.0
    %v981 = vrcp.pop %v980
    %v982 = vmul.f32 1.0, %v981
    %v983 = vmul.f32 %v975, %v865
    %v984 = vmul.f32 %v969, %v976
    %v985 = vadd.f32 %v983, %v984
    %v986 = vtanh.pop %v985
    %v987 = vmul.f32 %v982, %v986
    %s988 = scalar_lea.vmem [#allocation2], 16
    %989 = vst [vmem:[%s988] sm:$0xff] %v987
    %s990 = smul.u32 3, 4
    %s991 = smul.addr %s990, 8
    %s992 = scalar_lea.vmem [#allocation3], %s991
    %v993 = vld [vmem:[%s992] sm:$0xff]
    %v994 = vld [vmem:[%s992 + $0x8] sm:$0xff]
    %v995 = vld [vmem:[%s992 + $0x10] sm:$0xff]
    %v996 = vld [vmem:[%s992 + $0x18] sm:$0xff]
    %v997 = vpack.c.bf16 %v987, %v987
    %998 = vmatprep.subr.bf16.mxu0 %v604
    %999 = vmatpush1.bf16.msra.mxu0 %v603
    %1000 = vmatprep.subr.bf16.mxu0 %v600
    %1001 = vmatpush1.bf16.msra.mxu0 %v599
    %1002 = vmatprep.subr.bf16.mxu0 %v596
    %1003 = vmatpush1.bf16.msra.mxu0 %v595
    %1004 = vmatprep.subr.bf16.mxu0 %v592
    %1005 = vmatpush1.bf16.msra.mxu0 %v591
    %1006 = vmatprep.subr.bf16.mxu0 %v588
    %1007 = vmatpush1.bf16.msra.mxu0 %v587
    %1008 = vmatprep.subr.bf16.mxu0 %v584
    %1009 = vmatpush1.bf16.msra.mxu0 %v583
    %1010 = vmatprep.subr.bf16.mxu0 %v580
    %1011 = vmatpush1.bf16.msra.mxu0 %v579
    %1012 = vmatprep.subr.bf16.mxu0 %v576
    %1013 = vmatpush1.bf16.msra.mxu0 %v575
    %1014 = vmatprep.subr.bf16.mxu0 0
    %1015 = vmatpush2.bf16.msra.mxu0 0
    %1016 = vmatprep.subr.bf16.mxu0 0
    %1017 = vmatpush2.bf16.msra.mxu0 0
    %1018 = vmatprep.subr.bf16.mxu0 0
    %1019 = vmatpush2.bf16.msra.mxu0 0
    %1020 = vmatprep.subr.bf16.mxu0 0
    %1021 = vmatpush2.bf16.msra.mxu0 0
    %1022 = vmatprep.subr.bf16.mxu0 0
    %1023 = vmatpush2.bf16.msra.mxu0 0
    %1024 = vmatprep.subr.bf16.mxu0 0
    %1025 = vmatpush2.bf16.msra.mxu0 0
    %1026 = vmatprep.subr.bf16.mxu0 0
    %1027 = vmatpush2.bf16.msra.mxu0 0
    %1028 = vmatprep.subr.bf16.mxu0 0
    %1029 = vmatpush2.bf16.msra.mxu0 0
    %1030 = vmatprep.mubr.bf16.mxu0 0
    %1031 = vmatmul.mubr.bf16.gmra.mxu0 %v997
    %v1032 = vpop.f32.mrf.mxu0
    %v1033 = vadd.f32 0.0, %v1032
    %v1034 = vpop.f32.mrf.mxu0
    %v1035 = vadd.f32 0.0, %v1034
    %v1036 = vpop.f32.mrf.mxu0
    %v1037 = vpop.f32.mrf.mxu0
    %1038 = vdwg.mxu0
    %1039 = vmatprep.subr.bf16.mxu0 %v606
    %1040 = vmatpush1.bf16.msra.mxu0 %v605
    %1041 = vmatprep.subr.bf16.mxu0 %v602
    %1042 = vmatpush1.bf16.msra.mxu0 %v601
    %1043 = vmatprep.subr.bf16.mxu0 %v598
    %1044 = vmatpush1.bf16.msra.mxu0 %v597
    %1045 = vmatprep.subr.bf16.mxu0 %v594
    %1046 = vmatpush1.bf16.msra.mxu0 %v593
    %1047 = vmatprep.subr.bf16.mxu0 %v590
    %1048 = vmatpush1.bf16.msra.mxu0 %v589
    %1049 = vmatprep.subr.bf16.mxu0 %v586
    %1050 = vmatpush1.bf16.msra.mxu0 %v585
    %1051 = vmatprep.subr.bf16.mxu0 %v582
    %1052 = vmatpush1.bf16.msra.mxu0 %v581
    %1053 = vmatprep.subr.bf16.mxu0 %v578
    %1054 = vmatpush1.bf16.msra.mxu0 %v577
    %1055 = vmatprep.subr.bf16.mxu0 0
    %1056 = vmatpush2.bf16.msra.mxu0 0
    %1057 = vmatprep.subr.bf16.mxu0 0
    %1058 = vmatpush2.bf16.msra.mxu0 0
    %1059 = vmatprep.subr.bf16.mxu0 0
    %1060 = vmatpush2.bf16.msra.mxu0 0
    %1061 = vmatprep.subr.bf16.mxu0 0
    %1062 = vmatpush2.bf16.msra.mxu0 0
    %1063 = vmatprep.subr.bf16.mxu0 0
    %1064 = vmatpush2.bf16.msra.mxu0 0
    %1065 = vmatprep.subr.bf16.mxu0 0
    %1066 = vmatpush2.bf16.msra.mxu0 0
    %1067 = vmatprep.subr.bf16.mxu0 0
    %1068 = vmatpush2.bf16.msra.mxu0 0
    %1069 = vmatprep.subr.bf16.mxu0 0
    %1070 = vmatpush2.bf16.msra.mxu0 0
    %1071 = vmatprep.mubr.bf16.mxu0 0
    %1072 = vmatmul.mubr.bf16.gmra.mxu0 %v997
    %v1073 = vpop.f32.mrf.mxu0
    %v1074 = vadd.f32 0.0, %v1073
    %v1075 = vpop.f32.mrf.mxu0
    %v1076 = vadd.f32 0.0, %v1075
    %v1077 = vpop.f32.mrf.mxu0
    %v1078 = vpop.f32.mrf.mxu0
    %1079 = vdwg.mxu0
    %v1080 = vadd.f32 %v993, %v1033
    %v1081 = vadd.f32 %v994, %v1035
    %v1082 = vadd.f32 %v995, %v1074
    %v1083 = vadd.f32 %v996, %v1076
    %v1084 = vxor.u32 %v1080, 2147483648
    %v1085 = vmul.f32 %v1084, 1.442695
    %v1086 = vpow.pop %v1085
    %v1087 = vadd.f32 %v1086, 1.0
    %v1088 = vrcp.pop %v1087
    %v1089 = vmul.f32 1.0, %v1088
    %v1090 = vxor.u32 %v1081, 2147483648
    %v1091 = vmul.f32 %v1090, 1.442695
    %v1092 = vpow.pop %v1091
    %v1093 = vadd.f32 %v1092, 1.0
    %v1094 = vrcp.pop %v1093
    %v1095 = vmul.f32 1.0, %v1094
    %v1096 = vtanh.pop %v1082
    %v1097 = vxor.u32 %v1083, 2147483648
    %v1098 = vmul.f32 %v1097, 1.442695
    %v1099 = vpow.pop %v1098
    %v1100 = vadd.f32 %v1099, 1.0
    %v1101 = vrcp.pop %v1100
    %v1102 = vmul.f32 1.0, %v1101
    %v1103 = vmul.f32 %v1095, %v985
    %v1104 = vmul.f32 %v1089, %v1096
    %v1105 = vadd.f32 %v1103, %v1104
    %v1106 = vtanh.pop %v1105
    %v1107 = vmul.f32 %v1102, %v1106
    %s1108 = scalar_lea.vmem [#allocation2], 24
    %1109 = vst [vmem:[%s1108] sm:$0xff] %v1107
    %s1110 = smul.u32 4, 4
    %s1111 = smul.addr %s1110, 8
    %s1112 = scalar_lea.vmem [#allocation3], %s1111
    %v1113 = vld [vmem:[%s1112] sm:$0xff]
    %v1114 = vld [vmem:[%s1112 + $0x8] sm:$0xff]
    %v1115 = vld [vmem:[%s1112 + $0x10] sm:$0xff]
    %v1116 = vld [vmem:[%s1112 + $0x18] sm:$0xff]
    %v1117 = vpack.c.bf16 %v1107, %v1107
    %1118 = vmatprep.subr.bf16.mxu0 %v604
    %1119 = vmatpush1.bf16.msra.mxu0 %v603
    %1120 = vmatprep.subr.bf16.mxu0 %v600
    %1121 = vmatpush1.bf16.msra.mxu0 %v599
    %1122 = vmatprep.subr.bf16.mxu0 %v596
    %1123 = vmatpush1.bf16.msra.mxu0 %v595
    %1124 = vmatprep.subr.bf16.mxu0 %v592
    %1125 = vmatpush1.bf16.msra.mxu0 %v591
    %1126 = vmatprep.subr.bf16.mxu0 %v588
    %1127 = vmatpush1.bf16.msra.mxu0 %v587
    %1128 = vmatprep.subr.bf16.mxu0 %v584
    %1129 = vmatpush1.bf16.msra.mxu0 %v583
    %1130 = vmatprep.subr.bf16.mxu0 %v580
    %1131 = vmatpush1.bf16.msra.mxu0 %v579
    %1132 = vmatprep.subr.bf16.mxu0 %v576
    %1133 = vmatpush1.bf16.msra.mxu0 %v575
    %1134 = vmatprep.subr.bf16.mxu0 0
    %1135 = vmatpush2.bf16.msra.mxu0 0
    %1136 = vmatprep.subr.bf16.mxu0 0
    %1137 = vmatpush2.bf16.msra.mxu0 0
    %1138 = vmatprep.subr.bf16.mxu0 0
    %1139 = vmatpush2.bf16.msra.mxu0 0
    %1140 = vmatprep.subr.bf16.mxu0 0
    %1141 = vmatpush2.bf16.msra.mxu0 0
    %1142 = vmatprep.subr.bf16.mxu0 0
    %1143 = vmatpush2.bf16.msra.mxu0 0
    %1144 = vmatprep.subr.bf16.mxu0 0
    %1145 = vmatpush2.bf16.msra.mxu0 0
    %1146 = vmatprep.subr.bf16.mxu0 0
    %1147 = vmatpush2.bf16.msra.mxu0 0
    %1148 = vmatprep.subr.bf16.mxu0 0
    %1149 = vmatpush2.bf16.msra.mxu0 0
    %1150 = vmatprep.mubr.bf16.mxu0 0
    %1151 = vmatmul.mubr.bf16.gmra.mxu0 %v1117
    %v1152 = vpop.f32.mrf.mxu0
    %v1153 = vadd.f32 0.0, %v1152
    %v1154 = vpop.f32.mrf.mxu0
    %v1155 = vadd.f32 0.0, %v1154
    %v1156 = vpop.f32.mrf.mxu0
    %v1157 = vpop.f32.mrf.mxu0
    %1158 = vdwg.mxu0
    %1159 = vmatprep.subr.bf16.mxu0 %v606
    %1160 = vmatpush1.bf16.msra.mxu0 %v605
    %1161 = vmatprep.subr.bf16.mxu0 %v602
    %1162 = vmatpush1.bf16.msra.mxu0 %v601
    %1163 = vmatprep.subr.bf16.mxu0 %v598
    %1164 = vmatpush1.bf16.msra.mxu0 %v597
    %1165 = vmatprep.subr.bf16.mxu0 %v594
    %1166 = vmatpush1.bf16.msra.mxu0 %v593
    %1167 = vmatprep.subr.bf16.mxu0 %v590
    %1168 = vmatpush1.bf16.msra.mxu0 %v589
    %1169 = vmatprep.subr.bf16.mxu0 %v586
    %1170 = vmatpush1.bf16.msra.mxu0 %v585
    %1171 = vmatprep.subr.bf16.mxu0 %v582
    %1172 = vmatpush1.bf16.msra.mxu0 %v581
    %1173 = vmatprep.subr.bf16.mxu0 %v578
    %1174 = vmatpush1.bf16.msra.mxu0 %v577
    %1175 = vmatprep.subr.bf16.mxu0 0
    %1176 = vmatpush2.bf16.msra.mxu0 0
    %1177 = vmatprep.subr.bf16.mxu0 0
    %1178 = vmatpush2.bf16.msra.mxu0 0
    %1179 = vmatprep.subr.bf16.mxu0 0
    %1180 = vmatpush2.bf16.msra.mxu0 0
    %1181 = vmatprep.subr.bf16.mxu0 0
    %1182 = vmatpush2.bf16.msra.mxu0 0
    %1183 = vmatprep.subr.bf16.mxu0 0
    %1184 = vmatpush2.bf16.msra.mxu0 0
    %1185 = vmatprep.subr.bf16.mxu0 0
    %1186 = vmatpush2.bf16.msra.mxu0 0
    %1187 = vmatprep.subr.bf16.mxu0 0
    %1188 = vmatpush2.bf16.msra.mxu0 0
    %1189 = vmatprep.subr.bf16.mxu0 0
    %1190 = vmatpush2.bf16.msra.mxu0 0
    %1191 = vmatprep.mubr.bf16.mxu0 0
    %1192 = vmatmul.mubr.bf16.gmra.mxu0 %v1117
    %v1193 = vpop.f32.mrf.mxu0
    %v1194 = vadd.f32 0.0, %v1193
    %v1195 = vpop.f32.mrf.mxu0
    %v1196 = vadd.f32 0.0, %v1195
    %v1197 = vpop.f32.mrf.mxu0
    %v1198 = vpop.f32.mrf.mxu0
    %1199 = vdwg.mxu0
    %v1200 = vadd.f32 %v1113, %v1153
    %v1201 = vadd.f32 %v1114, %v1155
    %v1202 = vadd.f32 %v1115, %v1194
    %v1203 = vadd.f32 %v1116, %v1196
    %v1204 = vxor.u32 %v1200, 2147483648
    %v1205 = vmul.f32 %v1204, 1.442695
    %v1206 = vpow.pop %v1205
    %v1207 = vadd.f32 %v1206, 1.0
    %v1208 = vrcp.pop %v1207
    %v1209 = vmul.f32 1.0, %v1208
    %v1210 = vxor.u32 %v1201, 2147483648
    %v1211 = vmul.f32 %v1210, 1.442695
    %v1212 = vpow.pop %v1211
    %v1213 = vadd.f32 %v1212, 1.0
    %v1214 = vrcp.pop %v1213
    %v1215 = vmul.f32 1.0, %v1214
    %v1216 = vtanh.pop %v1202
    %v1217 = vxor.u32 %v1203, 2147483648
    %v1218 = vmul.f32 %v1217, 1.442695
    %v1219 = vpow.pop %v1218
    %v1220 = vadd.f32 %v1219, 1.0
    %v1221 = vrcp.pop %v1220
    %v1222 = vmul.f32 1.0, %v1221
    %v1223 = vmul.f32 %v1215, %v1105
    %v1224 = vmul.f32 %v1209, %v1216
    %v1225 = vadd.f32 %v1223, %v1224
    %v1226 = vtanh.pop %v1225
    %v1227 = vmul.f32 %v1222, %v1226
    %s1228 = scalar_lea.vmem [#allocation2], 32
    %1229 = vst [vmem:[%s1228] sm:$0xff] %v1227
    %s1230 = smul.u32 5, 4
    %s1231 = smul.addr %s1230, 8
    %s1232 = scalar_lea.vmem [#allocation3], %s1231
    %v1233 = vld [vmem:[%s1232] sm:$0xff]
    %v1234 = vld [vmem:[%s1232 + $0x8] sm:$0xff]
    %v1235 = vld [vmem:[%s1232 + $0x10] sm:$0xff]
    %v1236 = vld [vmem:[%s1232 + $0x18] sm:$0xff]
    %v1237 = vpack.c.bf16 %v1227, %v1227
    %1238 = vmatprep.subr.bf16.mxu0 %v604
    %1239 = vmatpush1.bf16.msra.mxu0 %v603
    %1240 = vmatprep.subr.bf16.mxu0 %v600
    %1241 = vmatpush1.bf16.msra.mxu0 %v599
    %1242 = vmatprep.subr.bf16.mxu0 %v596
    %1243 = vmatpush1.bf16.msra.mxu0 %v595
    %1244 = vmatprep.subr.bf16.mxu0 %v592
    %1245 = vmatpush1.bf16.msra.mxu0 %v591
    %1246 = vmatprep.subr.bf16.mxu0 %v588
    %1247 = vmatpush1.bf16.msra.mxu0 %v587
    %1248 = vmatprep.subr.bf16.mxu0 %v584
    %1249 = vmatpush1.bf16.msra.mxu0 %v583
    %1250 = vmatprep.subr.bf16.mxu0 %v580
    %1251 = vmatpush1.bf16.msra.mxu0 %v579
    %1252 = vmatprep.subr.bf16.mxu0 %v576
    %1253 = vmatpush1.bf16.msra.mxu0 %v575
    %1254 = vmatprep.subr.bf16.mxu0 0
    %1255 = vmatpush2.bf16.msra.mxu0 0
    %1256 = vmatprep.subr.bf16.mxu0 0
    %1257 = vmatpush2.bf16.msra.mxu0 0
    %1258 = vmatprep.subr.bf16.mxu0 0
    %1259 = vmatpush2.bf16.msra.mxu0 0
    %1260 = vmatprep.subr.bf16.mxu0 0
    %1261 = vmatpush2.bf16.msra.mxu0 0
    %1262 = vmatprep.subr.bf16.mxu0 0
    %1263 = vmatpush2.bf16.msra.mxu0 0
    %1264 = vmatprep.subr.bf16.mxu0 0
    %1265 = vmatpush2.bf16.msra.mxu0 0
    %1266 = vmatprep.subr.bf16.mxu0 0
    %1267 = vmatpush2.bf16.msra.mxu0 0
    %1268 = vmatprep.subr.bf16.mxu0 0
    %1269 = vmatpush2.bf16.msra.mxu0 0
    %1270 = vmatprep.mubr.bf16.mxu0 0
    %1271 = vmatmul.mubr.bf16.gmra.mxu0 %v1237
    %v1272 = vpop.f32.mrf.mxu0
    %v1273 = vadd.f32 0.0, %v1272
    %v1274 = vpop.f32.mrf.mxu0
    %v1275 = vadd.f32 0.0, %v1274
    %v1276 = vpop.f32.mrf.mxu0
    %v1277 = vpop.f32.mrf.mxu0
    %1278 = vdwg.mxu0
    %1279 = vmatprep.subr.bf16.mxu0 %v606
    %1280 = vmatpush1.bf16.msra.mxu0 %v605
    %1281 = vmatprep.subr.bf16.mxu0 %v602
    %1282 = vmatpush1.bf16.msra.mxu0 %v601
    %1283 = vmatprep.subr.bf16.mxu0 %v598
    %1284 = vmatpush1.bf16.msra.mxu0 %v597
    %1285 = vmatprep.subr.bf16.mxu0 %v594
    %1286 = vmatpush1.bf16.msra.mxu0 %v593
    %1287 = vmatprep.subr.bf16.mxu0 %v590
    %1288 = vmatpush1.bf16.msra.mxu0 %v589
    %1289 = vmatprep.subr.bf16.mxu0 %v586
    %1290 = vmatpush1.bf16.msra.mxu0 %v585
    %1291 = vmatprep.subr.bf16.mxu0 %v582
    %1292 = vmatpush1.bf16.msra.mxu0 %v581
    %1293 = vmatprep.subr.bf16.mxu0 %v578
    %1294 = vmatpush1.bf16.msra.mxu0 %v577
    %1295 = vmatprep.subr.bf16.mxu0 0
    %1296 = vmatpush2.bf16.msra.mxu0 0
    %1297 = vmatprep.subr.bf16.mxu0 0
    %1298 = vmatpush2.bf16.msra.mxu0 0
    %1299 = vmatprep.subr.bf16.mxu0 0
    %1300 = vmatpush2.bf16.msra.mxu0 0
    %1301 = vmatprep.subr.bf16.mxu0 0
    %1302 = vmatpush2.bf16.msra.mxu0 0
    %1303 = vmatprep.subr.bf16.mxu0 0
    %1304 = vmatpush2.bf16.msra.mxu0 0
    %1305 = vmatprep.subr.bf16.mxu0 0
    %1306 = vmatpush2.bf16.msra.mxu0 0
    %1307 = vmatprep.subr.bf16.mxu0 0
    %1308 = vmatpush2.bf16.msra.mxu0 0
    %1309 = vmatprep.subr.bf16.mxu0 0
    %1310 = vmatpush2.bf16.msra.mxu0 0
    %1311 = vmatprep.mubr.bf16.mxu0 0
    %1312 = vmatmul.mubr.bf16.gmra.mxu0 %v1237
    %v1313 = vpop.f32.mrf.mxu0
    %v1314 = vadd.f32 0.0, %v1313
    %v1315 = vpop.f32.mrf.mxu0
    %v1316 = vadd.f32 0.0, %v1315
    %v1317 = vpop.f32.mrf.mxu0
    %v1318 = vpop.f32.mrf.mxu0
    %1319 = vdwg.mxu0
    %v1320 = vadd.f32 %v1233, %v1273
    %v1321 = vadd.f32 %v1234, %v1275
    %v1322 = vadd.f32 %v1235, %v1314
    %v1323 = vadd.f32 %v1236, %v1316
    %v1324 = vxor.u32 %v1320, 2147483648
    %v1325 = vmul.f32 %v1324, 1.442695
    %v1326 = vpow.pop %v1325
    %v1327 = vadd.f32 %v1326, 1.0
    %v1328 = vrcp.pop %v1327
    %v1329 = vmul.f32 1.0, %v1328
    %v1330 = vxor.u32 %v1321, 2147483648
    %v1331 = vmul.f32 %v1330, 1.442695
    %v1332 = vpow.pop %v1331
    %v1333 = vadd.f32 %v1332, 1.0
    %v1334 = vrcp.pop %v1333
    %v1335 = vmul.f32 1.0, %v1334
    %v1336 = vtanh.pop %v1322
    %v1337 = vxor.u32 %v1323, 2147483648
    %v1338 = vmul.f32 %v1337, 1.442695
    %v1339 = vpow.pop %v1338
    %v1340 = vadd.f32 %v1339, 1.0
    %v1341 = vrcp.pop %v1340
    %v1342 = vmul.f32 1.0, %v1341
    %v1343 = vmul.f32 %v1335, %v1225
    %v1344 = vmul.f32 %v1329, %v1336
    %v1345 = vadd.f32 %v1343, %v1344
    %v1346 = vtanh.pop %v1345
    %v1347 = vmul.f32 %v1342, %v1346
    %s1348 = scalar_lea.vmem [#allocation2], 40
    %1349 = vst [vmem:[%s1348] sm:$0xff] %v1347
    %s1350 = smul.u32 6, 4
    %s1351 = smul.addr %s1350, 8
    %s1352 = scalar_lea.vmem [#allocation3], %s1351
    %v1353 = vld [vmem:[%s1352] sm:$0xff]
    %v1354 = vld [vmem:[%s1352 + $0x8] sm:$0xff]
    %v1355 = vld [vmem:[%s1352 + $0x10] sm:$0xff]
    %v1356 = vld [vmem:[%s1352 + $0x18] sm:$0xff]
    %v1357 = vpack.c.bf16 %v1347, %v1347
    %1358 = vmatprep.subr.bf16.mxu0 %v604
    %1359 = vmatpush1.bf16.msra.mxu0 %v603
    %1360 = vmatprep.subr.bf16.mxu0 %v600
    %1361 = vmatpush1.bf16.msra.mxu0 %v599
    %1362 = vmatprep.subr.bf16.mxu0 %v596
    %1363 = vmatpush1.bf16.msra.mxu0 %v595
    %1364 = vmatprep.subr.bf16.mxu0 %v592
    %1365 = vmatpush1.bf16.msra.mxu0 %v591
    %1366 = vmatprep.subr.bf16.mxu0 %v588
    %1367 = vmatpush1.bf16.msra.mxu0 %v587
    %1368 = vmatprep.subr.bf16.mxu0 %v584
    %1369 = vmatpush1.bf16.msra.mxu0 %v583
    %1370 = vmatprep.subr.bf16.mxu0 %v580
    %1371 = vmatpush1.bf16.msra.mxu0 %v579
    %1372 = vmatprep.subr.bf16.mxu0 %v576
    %1373 = vmatpush1.bf16.msra.mxu0 %v575
    %1374 = vmatprep.subr.bf16.mxu0 0
    %1375 = vmatpush2.bf16.msra.mxu0 0
    %1376 = vmatprep.subr.bf16.mxu0 0
    %1377 = vmatpush2.bf16.msra.mxu0 0
    %1378 = vmatprep.subr.bf16.mxu0 0
    %1379 = vmatpush2.bf16.msra.mxu0 0
    %1380 = vmatprep.subr.bf16.mxu0 0
    %1381 = vmatpush2.bf16.msra.mxu0 0
    %1382 = vmatprep.subr.bf16.mxu0 0
    %1383 = vmatpush2.bf16.msra.mxu0 0
    %1384 = vmatprep.subr.bf16.mxu0 0
    %1385 = vmatpush2.bf16.msra.mxu0 0
    %1386 = vmatprep.subr.bf16.mxu0 0
    %1387 = vmatpush2.bf16.msra.mxu0 0
    %1388 = vmatprep.subr.bf16.mxu0 0
    %1389 = vmatpush2.bf16.msra.mxu0 0
    %1390 = vmatprep.mubr.bf16.mxu0 0
    %1391 = vmatmul.mubr.bf16.gmra.mxu0 %v1357
    %v1392 = vpop.f32.mrf.mxu0
    %v1393 = vadd.f32 0.0, %v1392
    %v1394 = vpop.f32.mrf.mxu0
    %v1395 = vadd.f32 0.0, %v1394
    %v1396 = vpop.f32.mrf.mxu0
    %v1397 = vpop.f32.mrf.mxu0
    %1398 = vdwg.mxu0
    %1399 = vmatprep.subr.bf16.mxu0 %v606
    %1400 = vmatpush1.bf16.msra.mxu0 %v605
    %1401 = vmatprep.subr.bf16.mxu0 %v602
    %1402 = vmatpush1.bf16.msra.mxu0 %v601
    %1403 = vmatprep.subr.bf16.mxu0 %v598
    %1404 = vmatpush1.bf16.msra.mxu0 %v597
    %1405 = vmatprep.subr.bf16.mxu0 %v594
    %1406 = vmatpush1.bf16.msra.mxu0 %v593
    %1407 = vmatprep.subr.bf16.mxu0 %v590
    %1408 = vmatpush1.bf16.msra.mxu0 %v589
    %1409 = vmatprep.subr.bf16.mxu0 %v586
    %1410 = vmatpush1.bf16.msra.mxu0 %v585
    %1411 = vmatprep.subr.bf16.mxu0 %v582
    %1412 = vmatpush1.bf16.msra.mxu0 %v581
    %1413 = vmatprep.subr.bf16.mxu0 %v578
    %1414 = vmatpush1.bf16.msra.mxu0 %v577
    %1415 = vmatprep.subr.bf16.mxu0 0
    %1416 = vmatpush2.bf16.msra.mxu0 0
    %1417 = vmatprep.subr.bf16.mxu0 0
    %1418 = vmatpush2.bf16.msra.mxu0 0
    %1419 = vmatprep.subr.bf16.mxu0 0
    %1420 = vmatpush2.bf16.msra.mxu0 0
    %1421 = vmatprep.subr.bf16.mxu0 0
    %1422 = vmatpush2.bf16.msra.mxu0 0
    %1423 = vmatprep.subr.bf16.mxu0 0
    %1424 = vmatpush2.bf16.msra.mxu0 0
    %1425 = vmatprep.subr.bf16.mxu0 0
    %1426 = vmatpush2.bf16.msra.mxu0 0
    %1427 = vmatprep.subr.bf16.mxu0 0
    %1428 = vmatpush2.bf16.msra.mxu0 0
    %1429 = vmatprep.subr.bf16.mxu0 0
    %1430 = vmatpush2.bf16.msra.mxu0 0
    %1431 = vmatprep.mubr.bf16.mxu0 0
    %1432 = vmatmul.mubr.bf16.gmra.mxu0 %v1357
    %v1433 = vpop.f32.mrf.mxu0
    %v1434 = vadd.f32 0.0, %v1433
    %v1435 = vpop.f32.mrf.mxu0
    %v1436 = vadd.f32 0.0, %v1435
    %v1437 = vpop.f32.mrf.mxu0
    %v1438 = vpop.f32.mrf.mxu0
    %1439 = vdwg.mxu0
    %v1440 = vadd.f32 %v1353, %v1393
    %v1441 = vadd.f32 %v1354, %v1395
    %v1442 = vadd.f32 %v1355, %v1434
    %v1443 = vadd.f32 %v1356, %v1436
    %v1444 = vxor.u32 %v1440, 2147483648
    %v1445 = vmul.f32 %v1444, 1.442695
    %v1446 = vpow.pop %v1445
    %v1447 = vadd.f32 %v1446, 1.0
    %v1448 = vrcp.pop %v1447
    %v1449 = vmul.f32 1.0, %v1448
    %v1450 = vxor.u32 %v1441, 2147483648
    %v1451 = vmul.f32 %v1450, 1.442695
    %v1452 = vpow.pop %v1451
    %v1453 = vadd.f32 %v1452, 1.0
    %v1454 = vrcp.pop %v1453
    %v1455 = vmul.f32 1.0, %v1454
    %v1456 = vtanh.pop %v1442
    %v1457 = vxor.u32 %v1443, 2147483648
    %v1458 = vmul.f32 %v1457, 1.442695
    %v1459 = vpow.pop %v1458
    %v1460 = vadd.f32 %v1459, 1.0
    %v1461 = vrcp.pop %v1460
    %v1462 = vmul.f32 1.0, %v1461
    %v1463 = vmul.f32 %v1455, %v1345
    %v1464 = vmul.f32 %v1449, %v1456
    %v1465 = vadd.f32 %v1463, %v1464
    %v1466 = vtanh.pop %v1465
    %v1467 = vmul.f32 %v1462, %v1466
    %s1468 = scalar_lea.vmem [#allocation2], 48
    %1469 = vst [vmem:[%s1468] sm:$0xff] %v1467
    %s1470 = smul.u32 7, 4
    %s1471 = smul.addr %s1470, 8
    %s1472 = scalar_lea.vmem [#allocation3], %s1471
    %v1473 = vld [vmem:[%s1472] sm:$0xff]
    %v1474 = vld [vmem:[%s1472 + $0x8] sm:$0xff]
    %v1475 = vld [vmem:[%s1472 + $0x10] sm:$0xff]
    %v1476 = vld [vmem:[%s1472 + $0x18] sm:$0xff]
    %v1477 = vpack.c.bf16 %v1467, %v1467
    %1478 = vmatprep.subr.bf16.mxu0 %v604
    %1479 = vmatpush1.bf16.msra.mxu0 %v603
    %1480 = vmatprep.subr.bf16.mxu0 %v600
    %1481 = vmatpush1.bf16.msra.mxu0 %v599
    %1482 = vmatprep.subr.bf16.mxu0 %v596
    %1483 = vmatpush1.bf16.msra.mxu0 %v595
    %1484 = vmatprep.subr.bf16.mxu0 %v592
    %1485 = vmatpush1.bf16.msra.mxu0 %v591
    %1486 = vmatprep.subr.bf16.mxu0 %v588
    %1487 = vmatpush1.bf16.msra.mxu0 %v587
    %1488 = vmatprep.subr.bf16.mxu0 %v584
    %1489 = vmatpush1.bf16.msra.mxu0 %v583
    %1490 = vmatprep.subr.bf16.mxu0 %v580
    %1491 = vmatpush1.bf16.msra.mxu0 %v579
    %1492 = vmatprep.subr.bf16.mxu0 %v576
    %1493 = vmatpush1.bf16.msra.mxu0 %v575
    %1494 = vmatprep.subr.bf16.mxu0 0
    %1495 = vmatpush2.bf16.msra.mxu0 0
    %1496 = vmatprep.subr.bf16.mxu0 0
    %1497 = vmatpush2.bf16.msra.mxu0 0
    %1498 = vmatprep.subr.bf16.mxu0 0
    %1499 = vmatpush2.bf16.msra.mxu0 0
    %1500 = vmatprep.subr.bf16.mxu0 0
    %1501 = vmatpush2.bf16.msra.mxu0 0
    %1502 = vmatprep.subr.bf16.mxu0 0
    %1503 = vmatpush2.bf16.msra.mxu0 0
    %1504 = vmatprep.subr.bf16.mxu0 0
    %1505 = vmatpush2.bf16.msra.mxu0 0
    %1506 = vmatprep.subr.bf16.mxu0 0
    %1507 = vmatpush2.bf16.msra.mxu0 0
    %1508 = vmatprep.subr.bf16.mxu0 0
    %1509 = vmatpush2.bf16.msra.mxu0 0
    %1510 = vmatprep.mubr.bf16.mxu0 0
    %1511 = vmatmul.mubr.bf16.gmra.mxu0 %v1477
    %v1512 = vpop.f32.mrf.mxu0
    %v1513 = vadd.f32 0.0, %v1512
    %v1514 = vpop.f32.mrf.mxu0
    %v1515 = vadd.f32 0.0, %v1514
    %v1516 = vpop.f32.mrf.mxu0
    %v1517 = vpop.f32.mrf.mxu0
    %1518 = vdwg.mxu0
    %1519 = vmatprep.subr.bf16.mxu0 %v606
    %1520 = vmatpush1.bf16.msra.mxu0 %v605
    %1521 = vmatprep.subr.bf16.mxu0 %v602
    %1522 = vmatpush1.bf16.msra.mxu0 %v601
    %1523 = vmatprep.subr.bf16.mxu0 %v598
    %1524 = vmatpush1.bf16.msra.mxu0 %v597
    %1525 = vmatprep.subr.bf16.mxu0 %v594
    %1526 = vmatpush1.bf16.msra.mxu0 %v593
    %1527 = vmatprep.subr.bf16.mxu0 %v590
    %1528 = vmatpush1.bf16.msra.mxu0 %v589
    %1529 = vmatprep.subr.bf16.mxu0 %v586
    %1530 = vmatpush1.bf16.msra.mxu0 %v585
    %1531 = vmatprep.subr.bf16.mxu0 %v582
    %1532 = vmatpush1.bf16.msra.mxu0 %v581
    %1533 = vmatprep.subr.bf16.mxu0 %v578
    %1534 = vmatpush1.bf16.msra.mxu0 %v577
    %1535 = vmatprep.subr.bf16.mxu0 0
    %1536 = vmatpush2.bf16.msra.mxu0 0
    %1537 = vmatprep.subr.bf16.mxu0 0
    %1538 = vmatpush2.bf16.msra.mxu0 0
    %1539 = vmatprep.subr.bf16.mxu0 0
    %1540 = vmatpush2.bf16.msra.mxu0 0
    %1541 = vmatprep.subr.bf16.mxu0 0
    %1542 = vmatpush2.bf16.msra.mxu0 0
    %1543 = vmatprep.subr.bf16.mxu0 0
    %1544 = vmatpush2.bf16.msra.mxu0 0
    %1545 = vmatprep.subr.bf16.mxu0 0
    %1546 = vmatpush2.bf16.msra.mxu0 0
    %1547 = vmatprep.subr.bf16.mxu0 0
    %1548 = vmatpush2.bf16.msra.mxu0 0
    %1549 = vmatprep.subr.bf16.mxu0 0
    %1550 = vmatpush2.bf16.msra.mxu0 0
    %1551 = vmatprep.mubr.bf16.mxu0 0
    %1552 = vmatmul.mubr.bf16.gmra.mxu0 %v1477
    %v1553 = vpop.f32.mrf.mxu0
    %v1554 = vadd.f32 0.0, %v1553
    %v1555 = vpop.f32.mrf.mxu0
    %v1556 = vadd.f32 0.0, %v1555
    %v1557 = vpop.f32.mrf.mxu0
    %v1558 = vpop.f32.mrf.mxu0
    %1559 = vdwg.mxu0
    %v1560 = vadd.f32 %v1473, %v1513
    %v1561 = vadd.f32 %v1474, %v1515
    %v1562 = vadd.f32 %v1475, %v1554
    %v1563 = vadd.f32 %v1476, %v1556
    %v1564 = vxor.u32 %v1560, 2147483648
    %v1565 = vmul.f32 %v1564, 1.442695
    %v1566 = vpow.pop %v1565
    %v1567 = vadd.f32 %v1566, 1.0
    %v1568 = vrcp.pop %v1567
    %v1569 = vmul.f32 1.0, %v1568
    %v1570 = vxor.u32 %v1561, 2147483648
    %v1571 = vmul.f32 %v1570, 1.442695
    %v1572 = vpow.pop %v1571
    %v1573 = vadd.f32 %v1572, 1.0
    %v1574 = vrcp.pop %v1573
    %v1575 = vmul.f32 1.0, %v1574
    %v1576 = vtanh.pop %v1562
    %v1577 = vxor.u32 %v1563, 2147483648
    %v1578 = vmul.f32 %v1577, 1.442695
    %v1579 = vpow.pop %v1578
    %v1580 = vadd.f32 %v1579, 1.0
    %v1581 = vrcp.pop %v1580
    %v1582 = vmul.f32 1.0, %v1581
    %v1583 = vmul.f32 %v1575, %v1465
    %v1584 = vmul.f32 %v1569, %v1576
    %v1585 = vadd.f32 %v1583, %v1584
    %v1586 = vtanh.pop %v1585
    %v1587 = vmul.f32 %v1582, %v1586
    %s1588 = scalar_lea.vmem [#allocation2], 56
    %1589 = vst [vmem:[%s1588] sm:$0xff] %v1587
    %s1590 = smul.u32 4, 16
    %s1591 = smul.u32 %s1590, 4
    %s1592 = sshll.u32 %s1591, 4
    %1593 = dma.done [#allocation9], %s1592
    %s1594 = sshll.u32 %s1591, 4
    %1595 = dma.done %s49, %s1594
    %s1596 = smul.u32 1, 4
    %s1597 = sshll.u32 %s1596, 4
    %1598 = dma.done %s61, %s1597
    %v1599 = vld [vmem:[#allocation4] sm:$0xff]
    %v1600 = vld [vmem:[#allocation4 + $0x8] sm:$0xff]
    %v1601 = vld [vmem:[#allocation4 + $0x10] sm:$0xff]
    %v1602 = vld [vmem:[#allocation4 + $0x18] sm:$0xff]
    %v1603 = vld [vmem:[#allocation4 + $0x20] sm:$0xff]
    %v1604 = vld [vmem:[#allocation4 + $0x28] sm:$0xff]
    %v1605 = vld [vmem:[#allocation4 + $0x30] sm:$0xff]
    %v1606 = vld [vmem:[#allocation4 + $0x38] sm:$0xff]
    %v1607 = vld [vmem:[#allocation4 + $0x40] sm:$0xff]
    %v1608 = vld [vmem:[#allocation4 + $0x48] sm:$0xff]
    %v1609 = vld [vmem:[#allocation4 + $0x50] sm:$0xff]
    %v1610 = vld [vmem:[#allocation4 + $0x58] sm:$0xff]
    %v1611 = vld [vmem:[#allocation4 + $0x60] sm:$0xff]
    %v1612 = vld [vmem:[#allocation4 + $0x68] sm:$0xff]
    %v1613 = vld [vmem:[#allocation4 + $0x70] sm:$0xff]
    %v1614 = vld [vmem:[#allocation4 + $0x78] sm:$0xff]
    %v1615 = vld [vmem:[#allocation4 + $0x80] sm:$0xff]
    %v1616 = vld [vmem:[#allocation4 + $0x88] sm:$0xff]
    %v1617 = vld [vmem:[#allocation4 + $0x90] sm:$0xff]
    %v1618 = vld [vmem:[#allocation4 + $0x98] sm:$0xff]
    %v1619 = vld [vmem:[#allocation4 + $0xa0] sm:$0xff]
    %v1620 = vld [vmem:[#allocation4 + $0xa8] sm:$0xff]
    %v1621 = vld [vmem:[#allocation4 + $0xb0] sm:$0xff]
    %v1622 = vld [vmem:[#allocation4 + $0xb8] sm:$0xff]
    %v1623 = vld [vmem:[#allocation4 + $0xc0] sm:$0xff]
    %v1624 = vld [vmem:[#allocation4 + $0xc8] sm:$0xff]
    %v1625 = vld [vmem:[#allocation4 + $0xd0] sm:$0xff]
    %v1626 = vld [vmem:[#allocation4 + $0xd8] sm:$0xff]
    %v1627 = vld [vmem:[#allocation4 + $0xe0] sm:$0xff]
    %v1628 = vld [vmem:[#allocation4 + $0xe8] sm:$0xff]
    %v1629 = vld [vmem:[#allocation4 + $0xf0] sm:$0xff]
    %v1630 = vld [vmem:[#allocation4 + $0xf8] sm:$0xff]
    %v1631 = vld [vmem:[#allocation5] sm:$0xff]
    %v1632 = vld [vmem:[#allocation5 + $0x8] sm:$0xff]
    %v1633 = vld [vmem:[#allocation5 + $0x10] sm:$0xff]
    %v1634 = vld [vmem:[#allocation5 + $0x18] sm:$0xff]
    %v1635 = vld [vmem:[#allocation5 + $0x20] sm:$0xff]
    %v1636 = vld [vmem:[#allocation5 + $0x28] sm:$0xff]
    %v1637 = vld [vmem:[#allocation5 + $0x30] sm:$0xff]
    %v1638 = vld [vmem:[#allocation5 + $0x38] sm:$0xff]
    %v1639 = vld [vmem:[#allocation5 + $0x40] sm:$0xff]
    %v1640 = vld [vmem:[#allocation5 + $0x48] sm:$0xff]
    %v1641 = vld [vmem:[#allocation5 + $0x50] sm:$0xff]
    %v1642 = vld [vmem:[#allocation5 + $0x58] sm:$0xff]
    %v1643 = vld [vmem:[#allocation5 + $0x60] sm:$0xff]
    %v1644 = vld [vmem:[#allocation5 + $0x68] sm:$0xff]
    %v1645 = vld [vmem:[#allocation5 + $0x70] sm:$0xff]
    %v1646 = vld [vmem:[#allocation5 + $0x78] sm:$0xff]
    %v1647 = vld [vmem:[#allocation5 + $0x80] sm:$0xff]
    %v1648 = vld [vmem:[#allocation5 + $0x88] sm:$0xff]
    %v1649 = vld [vmem:[#allocation5 + $0x90] sm:$0xff]
    %v1650 = vld [vmem:[#allocation5 + $0x98] sm:$0xff]
    %v1651 = vld [vmem:[#allocation5 + $0xa0] sm:$0xff]
    %v1652 = vld [vmem:[#allocation5 + $0xa8] sm:$0xff]
    %v1653 = vld [vmem:[#allocation5 + $0xb0] sm:$0xff]
    %v1654 = vld [vmem:[#allocation5 + $0xb8] sm:$0xff]
    %v1655 = vld [vmem:[#allocation5 + $0xc0] sm:$0xff]
    %v1656 = vld [vmem:[#allocation5 + $0xc8] sm:$0xff]
    %v1657 = vld [vmem:[#allocation5 + $0xd0] sm:$0xff]
    %v1658 = vld [vmem:[#allocation5 + $0xd8] sm:$0xff]
    %v1659 = vld [vmem:[#allocation5 + $0xe0] sm:$0xff]
    %v1660 = vld [vmem:[#allocation5 + $0xe8] sm:$0xff]
    %v1661 = vld [vmem:[#allocation5 + $0xf0] sm:$0xff]
    %v1662 = vld [vmem:[#allocation5 + $0xf8] sm:$0xff]
    %v1663 = vld [vmem:[#allocation6] sm:$0xf]
    %v1664 = vld [vmem:[#allocation2] sm:$0xff]
    %v1665 = vld [vmem:[#allocation2 + $0x8] sm:$0xff]
    %v1666 = vld [vmem:[#allocation2 + $0x10] sm:$0xff]
    %v1667 = vld [vmem:[#allocation2 + $0x18] sm:$0xff]
    %v1668 = vld [vmem:[#allocation2 + $0x20] sm:$0xff]
    %v1669 = vld [vmem:[#allocation2 + $0x28] sm:$0xff]
    %v1670 = vld [vmem:[#allocation2 + $0x30] sm:$0xff]
    %v1671 = vld [vmem:[#allocation2 + $0x38] sm:$0xff]
    %v1672 = vpack.c.bf16 %v1665, %v1664
    %v1673 = vpack.c.bf16 %v1667, %v1666
    %v1674 = vpack.c.bf16 %v1669, %v1668
    %v1675 = vpack.c.bf16 %v1671, %v1670
    %v1677 = vlaneseq
    %v1678 = vshrl.u32 %v1677, 7
    %v1679 = vsub.s32 0, %v1678
    %v1680 = vrot.slane %v1663, %v1679
    %v1681 = vlaneseq
    %v1682 = vshrl.u32 %v1681, 7
    %v1683 = vsub.s32 1, %v1682
    %v1684 = vrot.slane %v1663, %v1683
    %v1685 = vlaneseq
    %v1686 = vshrl.u32 %v1685, 7
    %v1687 = vsub.s32 2, %v1686
    %v1688 = vrot.slane %v1663, %v1687
    %v1689 = vlaneseq
    %v1690 = vshrl.u32 %v1689, 7
    %v1691 = vsub.s32 3, %v1690
    %v1692 = vrot.slane %v1663, %v1691
    %v1729 = vunpack.c.l.b16 %v1599
    %v1730 = vunpack.c.h.b16 %v1599
    %v1731 = vunpack.c.l.b16 %v1600
    %v1732 = vunpack.c.h.b16 %v1600
    %v1733 = vunpack.c.l.b16 %v1601
    %v1734 = vunpack.c.h.b16 %v1601
    %v1735 = vunpack.c.l.b16 %v1602
    %v1736 = vunpack.c.h.b16 %v1602
    %v1737 = vunpack.c.l.b16 %v1603
    %v1738 = vunpack.c.h.b16 %v1603
    %v1739 = vunpack.c.l.b16 %v1604
    %v1740 = vunpack.c.h.b16 %v1604
    %v1741 = vunpack.c.l.b16 %v1605
    %v1742 = vunpack.c.h.b16 %v1605
    %v1743 = vunpack.c.l.b16 %v1606
    %v1744 = vunpack.c.h.b16 %v1606
    %v1745 = vunpack.c.l.b16 %v1607
    %v1746 = vunpack.c.h.b16 %v1607
    %v1747 = vunpack.c.l.b16 %v1608
    %v1748 = vunpack.c.h.b16 %v1608
    %v1749 = vunpack.c.l.b16 %v1609
    %v1750 = vunpack.c.h.b16 %v1609
    %v1751 = vunpack.c.l.b16 %v1610
    %v1752 = vunpack.c.h.b16 %v1610
    %v1753 = vunpack.c.l.b16 %v1611
    %v1754 = vunpack.c.h.b16 %v1611
    %v1755 = vunpack.c.l.b16 %v1612
    %v1756 = vunpack.c.h.b16 %v1612
    %v1757 = vunpack.c.l.b16 %v1613
    %v1758 = vunpack.c.h.b16 %v1613
    %v1759 = vunpack.c.l.b16 %v1614
    %v1760 = vunpack.c.h.b16 %v1614
    %v1761 = vunpack.c.l.b16 %v1615
    %v1762 = vunpack.c.h.b16 %v1615
    %v1763 = vunpack.c.l.b16 %v1616
    %v1764 = vunpack.c.h.b16 %v1616
    %v1765 = vunpack.c.l.b16 %v1617
    %v1766 = vunpack.c.h.b16 %v1617
    %v1767 = vunpack.c.l.b16 %v1618
    %v1768 = vunpack.c.h.b16 %v1618
    %v1769 = vunpack.c.l.b16 %v1619
    %v1770 = vunpack.c.h.b16 %v1619
    %v1771 = vunpack.c.l.b16 %v1620
    %v1772 = vunpack.c.h.b16 %v1620
    %v1773 = vunpack.c.l.b16 %v1621
    %v1774 = vunpack.c.h.b16 %v1621
    %v1775 = vunpack.c.l.b16 %v1622
    %v1776 = vunpack.c.h.b16 %v1622
    %v1777 = vunpack.c.l.b16 %v1623
    %v1778 = vunpack.c.h.b16 %v1623
    %v1779 = vunpack.c.l.b16 %v1624
    %v1780 = vunpack.c.h.b16 %v1624
    %v1781 = vunpack.c.l.b16 %v1625
    %v1782 = vunpack.c.h.b16 %v1625
    %v1783 = vunpack.c.l.b16 %v1626
    %v1784 = vunpack.c.h.b16 %v1626
    %v1785 = vunpack.c.l.b16 %v1627
    %v1786 = vunpack.c.h.b16 %v1627
    %v1787 = vunpack.c.l.b16 %v1628
    %v1788 = vunpack.c.h.b16 %v1628
    %v1789 = vunpack.c.l.b16 %v1629
    %v1790 = vunpack.c.h.b16 %v1629
    %v1791 = vunpack.c.l.b16 %v1630
    %v1792 = vunpack.c.h.b16 %v1630
    %v1793 = vpack.c.b16 %v1733, %v1729
    %v1794 = vpack.c.b16 %v1734, %v1730
    %v1795 = vpack.c.b16 %v1735, %v1731
    %v1796 = vpack.c.b16 %v1736, %v1732
    %v1797 = vpack.c.b16 %v1741, %v1737
    %v1798 = vpack.c.b16 %v1742, %v1738
    %v1799 = vpack.c.b16 %v1743, %v1739
    %v1800 = vpack.c.b16 %v1744, %v1740
    %v1801 = vpack.c.b16 %v1749, %v1745
    %v1802 = vpack.c.b16 %v1750, %v1746
    %v1803 = vpack.c.b16 %v1751, %v1747
    %v1804 = vpack.c.b16 %v1752, %v1748
    %v1805 = vpack.c.b16 %v1757, %v1753
    %v1806 = vpack.c.b16 %v1758, %v1754
    %v1807 = vpack.c.b16 %v1759, %v1755
    %v1808 = vpack.c.b16 %v1760, %v1756
    %v1809 = vpack.c.b16 %v1765, %v1761
    %v1810 = vpack.c.b16 %v1766, %v1762
    %v1811 = vpack.c.b16 %v1767, %v1763
    %v1812 = vpack.c.b16 %v1768, %v1764
    %v1813 = vpack.c.b16 %v1773, %v1769
    %v1814 = vpack.c.b16 %v1774, %v1770
    %v1815 = vpack.c.b16 %v1775, %v1771
    %v1816 = vpack.c.b16 %v1776, %v1772
    %v1817 = vpack.c.b16 %v1781, %v1777
    %v1818 = vpack.c.b16 %v1782, %v1778
    %v1819 = vpack.c.b16 %v1783, %v1779
    %v1820 = vpack.c.b16 %v1784, %v1780
    %v1821 = vpack.c.b16 %v1789, %v1785
    %v1822 = vpack.c.b16 %v1790, %v1786
    %v1823 = vpack.c.b16 %v1791, %v1787
    %v1824 = vpack.c.b16 %v1792, %v1788
    %1857 = vmatprep.subr.bf16.mxu0 %v1822
    %1858 = vmatpush1.bf16.msra.mxu0 %v1821
    %1859 = vmatprep.subr.bf16.mxu0 %v1818
    %1860 = vmatpush1.bf16.msra.mxu0 %v1817
    %1861 = vmatprep.subr.bf16.mxu0 %v1814
    %1862 = vmatpush1.bf16.msra.mxu0 %v1813
    %1863 = vmatprep.subr.bf16.mxu0 %v1810
    %1864 = vmatpush1.bf16.msra.mxu0 %v1809
    %1865 = vmatprep.subr.bf16.mxu0 %v1806
    %1866 = vmatpush1.bf16.msra.mxu0 %v1805
    %1867 = vmatprep.subr.bf16.mxu0 %v1802
    %1868 = vmatpush1.bf16.msra.mxu0 %v1801
    %1869 = vmatprep.subr.bf16.mxu0 %v1798
    %1870 = vmatpush1.bf16.msra.mxu0 %v1797
    %1871 = vmatprep.subr.bf16.mxu0 %v1794
    %1872 = vmatpush1.bf16.msra.mxu0 %v1793
    %1873 = vmatprep.subr.bf16.mxu0 0
    %1874 = vmatpush2.bf16.msra.mxu0 0
    %1875 = vmatprep.subr.bf16.mxu0 0
    %1876 = vmatpush2.bf16.msra.mxu0 0
    %1877 = vmatprep.subr.bf16.mxu0 0
    %1878 = vmatpush2.bf16.msra.mxu0 0
    %1879 = vmatprep.subr.bf16.mxu0 0
    %1880 = vmatpush2.bf16.msra.mxu0 0
    %1881 = vmatprep.subr.bf16.mxu0 0
    %1882 = vmatpush2.bf16.msra.mxu0 0
    %1883 = vmatprep.subr.bf16.mxu0 0
    %1884 = vmatpush2.bf16.msra.mxu0 0
    %1885 = vmatprep.subr.bf16.mxu0 0
    %1886 = vmatpush2.bf16.msra.mxu0 0
    %1887 = vmatprep.subr.bf16.mxu0 0
    %1888 = vmatpush2.bf16.msra.mxu0 0
    %1889 = vmatprep.mubr.bf16.mxu0 0
    %1890 = vmatmul.mubr.bf16.gmra.mxu0 %v1672
    %v1891 = vpop.f32.mrf.mxu0
    %v1892 = vadd.f32 %v1680, %v1891
    %v1893 = vpop.f32.mrf.mxu0
    %v1894 = vadd.f32 %v1684, %v1893
    %v1895 = vpop.f32.mrf.mxu0
    %v1896 = vadd.f32 %v1680, %v1895
    %v1897 = vpop.f32.mrf.mxu0
    %v1898 = vadd.f32 %v1684, %v1897
    %1899 = vmatprep.mubr.bf16.mxu0 0
    %1900 = vmatmul.mubr.bf16.gmra.mxu0 %v1673
    %v1901 = vpop.f32.mrf.mxu0
    %v1902 = vadd.f32 %v1680, %v1901
    %v1903 = vpop.f32.mrf.mxu0
    %v1904 = vadd.f32 %v1684, %v1903
    %v1905 = vpop.f32.mrf.mxu0
    %v1906 = vadd.f32 %v1680, %v1905
    %v1907 = vpop.f32.mrf.mxu0
    %v1908 = vadd.f32 %v1684, %v1907
    %1909 = vmatprep.mubr.bf16.mxu0 0
    %1910 = vmatmul.mubr.bf16.gmra.mxu0 %v1674
    %v1911 = vpop.f32.mrf.mxu0
    %v1912 = vadd.f32 %v1680, %v1911
    %v1913 = vpop.f32.mrf.mxu0
    %v1914 = vadd.f32 %v1684, %v1913
    %v1915 = vpop.f32.mrf.mxu0
    %v1916 = vadd.f32 %v1680, %v1915
    %v1917 = vpop.f32.mrf.mxu0
    %v1918 = vadd.f32 %v1684, %v1917
    %1919 = vmatprep.mubr.bf16.mxu0 0
    %1920 = vmatmul.mubr.bf16.gmra.mxu0 %v1675
    %v1921 = vpop.f32.mrf.mxu0
    %v1922 = vadd.f32 %v1680, %v1921
    %v1923 = vpop.f32.mrf.mxu0
    %v1924 = vadd.f32 %v1684, %v1923
    %v1925 = vpop.f32.mrf.mxu0
    %v1926 = vadd.f32 %v1680, %v1925
    %v1927 = vpop.f32.mrf.mxu0
    %v1928 = vadd.f32 %v1684, %v1927
    %1929 = vdwg.mxu0
    %1930 = vmatprep.subr.bf16.mxu0 %v1824
    %1931 = vmatpush1.bf16.msra.mxu0 %v1823
    %1932 = vmatprep.subr.bf16.mxu0 %v1820
    %1933 = vmatpush1.bf16.msra.mxu0 %v1819
    %1934 = vmatprep.subr.bf16.mxu0 %v1816
    %1935 = vmatpush1.bf16.msra.mxu0 %v1815
    %1936 = vmatprep.subr.bf16.mxu0 %v1812
    %1937 = vmatpush1.bf16.msra.mxu0 %v1811
    %1938 = vmatprep.subr.bf16.mxu0 %v1808
    %1939 = vmatpush1.bf16.msra.mxu0 %v1807
    %1940 = vmatprep.subr.bf16.mxu0 %v1804
    %1941 = vmatpush1.bf16.msra.mxu0 %v1803
    %1942 = vmatprep.subr.bf16.mxu0 %v1800
    %1943 = vmatpush1.bf16.msra.mxu0 %v1799
    %1944 = vmatprep.subr.bf16.mxu0 %v1796
    %1945 = vmatpush1.bf16.msra.mxu0 %v1795
    %1946 = vmatprep.subr.bf16.mxu0 0
    %1947 = vmatpush2.bf16.msra.mxu0 0
    %1948 = vmatprep.subr.bf16.mxu0 0
    %1949 = vmatpush2.bf16.msra.mxu0 0
    %1950 = vmatprep.subr.bf16.mxu0 0
    %1951 = vmatpush2.bf16.msra.mxu0 0
    %1952 = vmatprep.subr.bf16.mxu0 0
    %1953 = vmatpush2.bf16.msra.mxu0 0
    %1954 = vmatprep.subr.bf16.mxu0 0
    %1955 = vmatpush2.bf16.msra.mxu0 0
    %1956 = vmatprep.subr.bf16.mxu0 0
    %1957 = vmatpush2.bf16.msra.mxu0 0
    %1958 = vmatprep.subr.bf16.mxu0 0
    %1959 = vmatpush2.bf16.msra.mxu0 0
    %1960 = vmatprep.subr.bf16.mxu0 0
    %1961 = vmatpush2.bf16.msra.mxu0 0
    %1962 = vmatprep.mubr.bf16.mxu0 0
    %1963 = vmatmul.mubr.bf16.gmra.mxu0 %v1672
    %v1964 = vpop.f32.mrf.mxu0
    %v1965 = vadd.f32 %v1688, %v1964
    %v1966 = vpop.f32.mrf.mxu0
    %v1967 = vadd.f32 %v1692, %v1966
    %v1968 = vpop.f32.mrf.mxu0
    %v1969 = vadd.f32 %v1688, %v1968
    %v1970 = vpop.f32.mrf.mxu0
    %v1971 = vadd.f32 %v1692, %v1970
    %1972 = vmatprep.mubr.bf16.mxu0 0
    %1973 = vmatmul.mubr.bf16.gmra.mxu0 %v1673
    %v1974 = vpop.f32.mrf.mxu0
    %v1975 = vadd.f32 %v1688, %v1974
    %v1976 = vpop.f32.mrf.mxu0
    %v1977 = vadd.f32 %v1692, %v1976
    %v1978 = vpop.f32.mrf.mxu0
    %v1979 = vadd.f32 %v1688, %v1978
    %v1980 = vpop.f32.mrf.mxu0
    %v1981 = vadd.f32 %v1692, %v1980
    %1982 = vmatprep.mubr.bf16.mxu0 0
    %1983 = vmatmul.mubr.bf16.gmra.mxu0 %v1674
    %v1984 = vpop.f32.mrf.mxu0
    %v1985 = vadd.f32 %v1688, %v1984
    %v1986 = vpop.f32.mrf.mxu0
    %v1987 = vadd.f32 %v1692, %v1986
    %v1988 = vpop.f32.mrf.mxu0
    %v1989 = vadd.f32 %v1688, %v1988
    %v1990 = vpop.f32.mrf.mxu0
    %v1991 = vadd.f32 %v1692, %v1990
    %1992 = vmatprep.mubr.bf16.mxu0 0
    %1993 = vmatmul.mubr.bf16.gmra.mxu0 %v1675
    %v1994 = vpop.f32.mrf.mxu0
    %v1995 = vadd.f32 %v1688, %v1994
    %v1996 = vpop.f32.mrf.mxu0
    %v1997 = vadd.f32 %v1692, %v1996
    %v1998 = vpop.f32.mrf.mxu0
    %v1999 = vadd.f32 %v1688, %v1998
    %v2000 = vpop.f32.mrf.mxu0
    %v2001 = vadd.f32 %v1692, %v2000
    %2002 = vdwg.mxu0
    %2003 = vst [vmem:[#allocation3] sm:$0xff] %v1892
    %2004 = vst [vmem:[#allocation3 + $0x8] sm:$0xff] %v1894
    %2005 = vst [vmem:[#allocation3 + $0x10] sm:$0xff] %v1965
    %2006 = vst [vmem:[#allocation3 + $0x18] sm:$0xff] %v1967
    %2007 = vst [vmem:[#allocation3 + $0x20] sm:$0xff] %v1896
    %2008 = vst [vmem:[#allocation3 + $0x28] sm:$0xff] %v1898
    %2009 = vst [vmem:[#allocation3 + $0x30] sm:$0xff] %v1969
    %2010 = vst [vmem:[#allocation3 + $0x38] sm:$0xff] %v1971
    %2011 = vst [vmem:[#allocation3 + $0x40] sm:$0xff] %v1902
    %2012 = vst [vmem:[#allocation3 + $0x48] sm:$0xff] %v1904
    %2013 = vst [vmem:[#allocation3 + $0x50] sm:$0xff] %v1975
    %2014 = vst [vmem:[#allocation3 + $0x58] sm:$0xff] %v1977
    %2015 = vst [vmem:[#allocation3 + $0x60] sm:$0xff] %v1906
    %2016 = vst [vmem:[#allocation3 + $0x68] sm:$0xff] %v1908
    %2017 = vst [vmem:[#allocation3 + $0x70] sm:$0xff] %v1979
    %2018 = vst [vmem:[#allocation3 + $0x78] sm:$0xff] %v1981
    %2019 = vst [vmem:[#allocation3 + $0x80] sm:$0xff] %v1912
    %2020 = vst [vmem:[#allocation3 + $0x88] sm:$0xff] %v1914
    %2021 = vst [vmem:[#allocation3 + $0x90] sm:$0xff] %v1985
    %2022 = vst [vmem:[#allocation3 + $0x98] sm:$0xff] %v1987
    %2023 = vst [vmem:[#allocation3 + $0xa0] sm:$0xff] %v1916
    %2024 = vst [vmem:[#allocation3 + $0xa8] sm:$0xff] %v1918
    %2025 = vst [vmem:[#allocation3 + $0xb0] sm:$0xff] %v1989
    %2026 = vst [vmem:[#allocation3 + $0xb8] sm:$0xff] %v1991
    %2027 = vst [vmem:[#allocation3 + $0xc0] sm:$0xff] %v1922
    %2028 = vst [vmem:[#allocation3 + $0xc8] sm:$0xff] %v1924
    %2029 = vst [vmem:[#allocation3 + $0xd0] sm:$0xff] %v1995
    %2030 = vst [vmem:[#allocation3 + $0xd8] sm:$0xff] %v1997
    %2031 = vst [vmem:[#allocation3 + $0xe0] sm:$0xff] %v1926
    %2032 = vst [vmem:[#allocation3 + $0xe8] sm:$0xff] %v1928
    %2033 = vst [vmem:[#allocation3 + $0xf0] sm:$0xff] %v1999
    %2034 = vst [vmem:[#allocation3 + $0xf8] sm:$0xff] %v2001
    %v2035 = vld [vmem:[%s474] sm:$0xff]
    %v2036 = vld [vmem:[%s474 + $0x8] sm:$0xff]
    %v2037 = vld [vmem:[%s474 + $0x10] sm:$0xff]
    %v2038 = vld [vmem:[%s474 + $0x18] sm:$0xff]
    %v2071 = vunpack.c.l.b16 %v1631
    %v2072 = vunpack.c.h.b16 %v1631
    %v2073 = vunpack.c.l.b16 %v1632
    %v2074 = vunpack.c.h.b16 %v1632
    %v2075 = vunpack.c.l.b16 %v1633
    %v2076 = vunpack.c.h.b16 %v1633
    %v2077 = vunpack.c.l.b16 %v1634
    %v2078 = vunpack.c.h.b16 %v1634
    %v2079 = vunpack.c.l.b16 %v1635
    %v2080 = vunpack.c.h.b16 %v1635
    %v2081 = vunpack.c.l.b16 %v1636
    %v2082 = vunpack.c.h.b16 %v1636
    %v2083 = vunpack.c.l.b16 %v1637
    %v2084 = vunpack.c.h.b16 %v1637
    %v2085 = vunpack.c.l.b16 %v1638
    %v2086 = vunpack.c.h.b16 %v1638
    %v2087 = vunpack.c.l.b16 %v1639
    %v2088 = vunpack.c.h.b16 %v1639
    %v2089 = vunpack.c.l.b16 %v1640
    %v2090 = vunpack.c.h.b16 %v1640
    %v2091 = vunpack.c.l.b16 %v1641
    %v2092 = vunpack.c.h.b16 %v1641
    %v2093 = vunpack.c.l.b16 %v1642
    %v2094 = vunpack.c.h.b16 %v1642
    %v2095 = vunpack.c.l.b16 %v1643
    %v2096 = vunpack.c.h.b16 %v1643
    %v2097 = vunpack.c.l.b16 %v1644
    %v2098 = vunpack.c.h.b16 %v1644
    %v2099 = vunpack.c.l.b16 %v1645
    %v2100 = vunpack.c.h.b16 %v1645
    %v2101 = vunpack.c.l.b16 %v1646
    %v2102 = vunpack.c.h.b16 %v1646
    %v2103 = vunpack.c.l.b16 %v1647
    %v2104 = vunpack.c.h.b16 %v1647
    %v2105 = vunpack.c.l.b16 %v1648
    %v2106 = vunpack.c.h.b16 %v1648
    %v2107 = vunpack.c.l.b16 %v1649
    %v2108 = vunpack.c.h.b16 %v1649
    %v2109 = vunpack.c.l.b16 %v1650
    %v2110 = vunpack.c.h.b16 %v1650
    %v2111 = vunpack.c.l.b16 %v1651
    %v2112 = vunpack.c.h.b16 %v1651
    %v2113 = vunpack.c.l.b16 %v1652
    %v2114 = vunpack.c.h.b16 %v1652
    %v2115 = vunpack.c.l.b16 %v1653
    %v2116 = vunpack.c.h.b16 %v1653
    %v2117 = vunpack.c.l.b16 %v1654
    %v2118 = vunpack.c.h.b16 %v1654
    %v2119 = vunpack.c.l.b16 %v1655
    %v2120 = vunpack.c.h.b16 %v1655
    %v2121 = vunpack.c.l.b16 %v1656
    %v2122 = vunpack.c.h.b16 %v1656
    %v2123 = vunpack.c.l.b16 %v1657
    %v2124 = vunpack.c.h.b16 %v1657
    %v2125 = vunpack.c.l.b16 %v1658
    %v2126 = vunpack.c.h.b16 %v1658
    %v2127 = vunpack.c.l.b16 %v1659
    %v2128 = vunpack.c.h.b16 %v1659
    %v2129 = vunpack.c.l.b16 %v1660
    %v2130 = vunpack.c.h.b16 %v1660
    %v2131 = vunpack.c.l.b16 %v1661
    %v2132 = vunpack.c.h.b16 %v1661
    %v2133 = vunpack.c.l.b16 %v1662
    %v2134 = vunpack.c.h.b16 %v1662
    %v2135 = vpack.c.b16 %v2075, %v2071
    %v2136 = vpack.c.b16 %v2076, %v2072
    %v2137 = vpack.c.b16 %v2077, %v2073
    %v2138 = vpack.c.b16 %v2078, %v2074
    %v2139 = vpack.c.b16 %v2083, %v2079
    %v2140 = vpack.c.b16 %v2084, %v2080
    %v2141 = vpack.c.b16 %v2085, %v2081
    %v2142 = vpack.c.b16 %v2086, %v2082
    %v2143 = vpack.c.b16 %v2091, %v2087
    %v2144 = vpack.c.b16 %v2092, %v2088
    %v2145 = vpack.c.b16 %v2093, %v2089
    %v2146 = vpack.c.b16 %v2094, %v2090
    %v2147 = vpack.c.b16 %v2099, %v2095
    %v2148 = vpack.c.b16 %v2100, %v2096
    %v2149 = vpack.c.b16 %v2101, %v2097
    %v2150 = vpack.c.b16 %v2102, %v2098
    %v2151 = vpack.c.b16 %v2107, %v2103
    %v2152 = vpack.c.b16 %v2108, %v2104
    %v2153 = vpack.c.b16 %v2109, %v2105
    %v2154 = vpack.c.b16 %v2110, %v2106
    %v2155 = vpack.c.b16 %v2115, %v2111
    %v2156 = vpack.c.b16 %v2116, %v2112
    %v2157 = vpack.c.b16 %v2117, %v2113
    %v2158 = vpack.c.b16 %v2118, %v2114
    %v2159 = vpack.c.b16 %v2123, %v2119
    %v2160 = vpack.c.b16 %v2124, %v2120
    %v2161 = vpack.c.b16 %v2125, %v2121
    %v2162 = vpack.c.b16 %v2126, %v2122
    %v2163 = vpack.c.b16 %v2131, %v2127
    %v2164 = vpack.c.b16 %v2132, %v2128
    %v2165 = vpack.c.b16 %v2133, %v2129
    %v2166 = vpack.c.b16 %v2134, %v2130
    %2199 = vmatprep.subr.bf16.mxu0 %v2164
    %2200 = vmatpush1.bf16.msra.mxu0 %v2163
    %2201 = vmatprep.subr.bf16.mxu0 %v2160
    %2202 = vmatpush1.bf16.msra.mxu0 %v2159
    %2203 = vmatprep.subr.bf16.mxu0 %v2156
    %2204 = vmatpush1.bf16.msra.mxu0 %v2155
    %2205 = vmatprep.subr.bf16.mxu0 %v2152
    %2206 = vmatpush1.bf16.msra.mxu0 %v2151
    %2207 = vmatprep.subr.bf16.mxu0 %v2148
    %2208 = vmatpush1.bf16.msra.mxu0 %v2147
    %2209 = vmatprep.subr.bf16.mxu0 %v2144
    %2210 = vmatpush1.bf16.msra.mxu0 %v2143
    %2211 = vmatprep.subr.bf16.mxu0 %v2140
    %2212 = vmatpush1.bf16.msra.mxu0 %v2139
    %2213 = vmatprep.subr.bf16.mxu0 %v2136
    %2214 = vmatpush1.bf16.msra.mxu0 %v2135
    %2215 = vmatprep.subr.bf16.mxu0 0
    %2216 = vmatpush2.bf16.msra.mxu0 0
    %2217 = vmatprep.subr.bf16.mxu0 0
    %2218 = vmatpush2.bf16.msra.mxu0 0
    %2219 = vmatprep.subr.bf16.mxu0 0
    %2220 = vmatpush2.bf16.msra.mxu0 0
    %2221 = vmatprep.subr.bf16.mxu0 0
    %2222 = vmatpush2.bf16.msra.mxu0 0
    %2223 = vmatprep.subr.bf16.mxu0 0
    %2224 = vmatpush2.bf16.msra.mxu0 0
    %2225 = vmatprep.subr.bf16.mxu0 0
    %2226 = vmatpush2.bf16.msra.mxu0 0
    %2227 = vmatprep.subr.bf16.mxu0 0
    %2228 = vmatpush2.bf16.msra.mxu0 0
    %2229 = vmatprep.subr.bf16.mxu0 0
    %2230 = vmatpush2.bf16.msra.mxu0 0
    %2231 = vmatprep.mubr.bf16.mxu0 0
    %2232 = vmatmul.mubr.bf16.gmra.mxu0 0
    %v2233 = vpop.f32.mrf.mxu0
    %v2234 = vadd.f32 0.0, %v2233
    %v2235 = vpop.f32.mrf.mxu0
    %v2236 = vadd.f32 0.0, %v2235
    %v2237 = vpop.f32.mrf.mxu0
    %v2238 = vpop.f32.mrf.mxu0
    %2239 = vdwg.mxu0
    %2240 = vmatprep.subr.bf16.mxu0 %v2166
    %2241 = vmatpush1.bf16.msra.mxu0 %v2165
    %2242 = vmatprep.subr.bf16.mxu0 %v2162
    %2243 = vmatpush1.bf16.msra.mxu0 %v2161
    %2244 = vmatprep.subr.bf16.mxu0 %v2158
    %2245 = vmatpush1.bf16.msra.mxu0 %v2157
    %2246 = vmatprep.subr.bf16.mxu0 %v2154
    %2247 = vmatpush1.bf16.msra.mxu0 %v2153
    %2248 = vmatprep.subr.bf16.mxu0 %v2150
    %2249 = vmatpush1.bf16.msra.mxu0 %v2149
    %2250 = vmatprep.subr.bf16.mxu0 %v2146
    %2251 = vmatpush1.bf16.msra.mxu0 %v2145
    %2252 = vmatprep.subr.bf16.mxu0 %v2142
    %2253 = vmatpush1.bf16.msra.mxu0 %v2141
    %2254 = vmatprep.subr.bf16.mxu0 %v2138
    %2255 = vmatpush1.bf16.msra.mxu0 %v2137
    %2256 = vmatprep.subr.bf16.mxu0 0
    %2257 = vmatpush2.bf16.msra.mxu0 0
    %2258 = vmatprep.subr.bf16.mxu0 0
    %2259 = vmatpush2.bf16.msra.mxu0 0
    %2260 = vmatprep.subr.bf16.mxu0 0
    %2261 = vmatpush2.bf16.msra.mxu0 0
    %2262 = vmatprep.subr.bf16.mxu0 0
    %2263 = vmatpush2.bf16.msra.mxu0 0
    %2264 = vmatprep.subr.bf16.mxu0 0
    %2265 = vmatpush2.bf16.msra.mxu0 0
    %2266 = vmatprep.subr.bf16.mxu0 0
    %2267 = vmatpush2.bf16.msra.mxu0 0
    %2268 = vmatprep.subr.bf16.mxu0 0
    %2269 = vmatpush2.bf16.msra.mxu0 0
    %2270 = vmatprep.subr.bf16.mxu0 0
    %2271 = vmatpush2.bf16.msra.mxu0 0
    %2272 = vmatprep.mubr.bf16.mxu0 0
    %2273 = vmatmul.mubr.bf16.gmra.mxu0 0
    %v2274 = vpop.f32.mrf.mxu0
    %v2275 = vadd.f32 0.0, %v2274
    %v2276 = vpop.f32.mrf.mxu0
    %v2277 = vadd.f32 0.0, %v2276
    %v2278 = vpop.f32.mrf.mxu0
    %v2279 = vpop.f32.mrf.mxu0
    %2280 = vdwg.mxu0
    %v2281 = vadd.f32 %v2035, %v2234
    %v2282 = vadd.f32 %v2036, %v2236
    %v2283 = vadd.f32 %v2037, %v2275
    %v2284 = vadd.f32 %v2038, %v2277
    %v2285 = vxor.u32 %v2281, 2147483648
    %v2286 = vmul.f32 %v2285, 1.442695
    %v2287 = vpow.pop %v2286
    %v2288 = vadd.f32 %v2287, 1.0
    %v2289 = vrcp.pop %v2288
    %v2290 = vmul.f32 1.0, %v2289
    %v2291 = vxor.u32 %v2282, 2147483648
    %v2292 = vmul.f32 %v2291, 1.442695
    %v2293 = vpow.pop %v2292
    %v2294 = vadd.f32 %v2293, 1.0
    %v2295 = vrcp.pop %v2294
    %v2296 = vmul.f32 1.0, %v2295
    %v2297 = vtanh.pop %v2283
    %v2298 = vxor.u32 %v2284, 2147483648
    %v2299 = vmul.f32 %v2298, 1.442695
    %v2300 = vpow.pop %v2299
    %v2301 = vadd.f32 %v2300, 1.0
    %v2302 = vrcp.pop %v2301
    %v2303 = vmul.f32 1.0, %v2302
    %v2304 = vmul.f32 %v2296, 0.0
    %v2305 = vmul.f32 %v2290, %v2297
    %v2306 = vadd.f32 %v2304, %v2305
    %v2307 = vtanh.pop %v2306
    %v2308 = vmul.f32 %v2303, %v2307
    %2309 = vst [vmem:[#allocation2] sm:$0xff] %v2308
    %v2310 = vld [vmem:[%s752] sm:$0xff]
    %v2311 = vld [vmem:[%s752 + $0x8] sm:$0xff]
    %v2312 = vld [vmem:[%s752 + $0x10] sm:$0xff]
    %v2313 = vld [vmem:[%s752 + $0x18] sm:$0xff]
    %v2314 = vpack.c.bf16 %v2308, %v2308
    %2315 = vmatprep.subr.bf16.mxu0 %v2164
    %2316 = vmatpush1.bf16.msra.mxu0 %v2163
    %2317 = vmatprep.subr.bf16.mxu0 %v2160
    %2318 = vmatpush1.bf16.msra.mxu0 %v2159
    %2319 = vmatprep.subr.bf16.mxu0 %v2156
    %2320 = vmatpush1.bf16.msra.mxu0 %v2155
    %2321 = vmatprep.subr.bf16.mxu0 %v2152
    %2322 = vmatpush1.bf16.msra.mxu0 %v2151
    %2323 = vmatprep.subr.bf16.mxu0 %v2148
    %2324 = vmatpush1.bf16.msra.mxu0 %v2147
    %2325 = vmatprep.subr.bf16.mxu0 %v2144
    %2326 = vmatpush1.bf16.msra.mxu0 %v2143
    %2327 = vmatprep.subr.bf16.mxu0 %v2140
    %2328 = vmatpush1.bf16.msra.mxu0 %v2139
    %2329 = vmatprep.subr.bf16.mxu0 %v2136
    %2330 = vmatpush1.bf16.msra.mxu0 %v2135
    %2331 = vmatprep.subr.bf16.mxu0 0
    %2332 = vmatpush2.bf16.msra.mxu0 0
    %2333 = vmatprep.subr.bf16.mxu0 0
    %2334 = vmatpush2.bf16.msra.mxu0 0
    %2335 = vmatprep.subr.bf16.mxu0 0
    %2336 = vmatpush2.bf16.msra.mxu0 0
    %2337 = vmatprep.subr.bf16.mxu0 0
    %2338 = vmatpush2.bf16.msra.mxu0 0
    %2339 = vmatprep.subr.bf16.mxu0 0
    %2340 = vmatpush2.bf16.msra.mxu0 0
    %2341 = vmatprep.subr.bf16.mxu0 0
    %2342 = vmatpush2.bf16.msra.mxu0 0
    %2343 = vmatprep.subr.bf16.mxu0 0
    %2344 = vmatpush2.bf16.msra.mxu0 0
    %2345 = vmatprep.subr.bf16.mxu0 0
    %2346 = vmatpush2.bf16.msra.mxu0 0
    %2347 = vmatprep.mubr.bf16.mxu0 0
    %2348 = vmatmul.mubr.bf16.gmra.mxu0 %v2314
    %v2349 = vpop.f32.mrf.mxu0
    %v2350 = vadd.f32 0.0, %v2349
    %v2351 = vpop.f32.mrf.mxu0
    %v2352 = vadd.f32 0.0, %v2351
    %v2353 = vpop.f32.mrf.mxu0
    %v2354 = vpop.f32.mrf.mxu0
    %2355 = vdwg.mxu0
    %2356 = vmatprep.subr.bf16.mxu0 %v2166
    %2357 = vmatpush1.bf16.msra.mxu0 %v2165
    %2358 = vmatprep.subr.bf16.mxu0 %v2162
    %2359 = vmatpush1.bf16.msra.mxu0 %v2161
    %2360 = vmatprep.subr.bf16.mxu0 %v2158
    %2361 = vmatpush1.bf16.msra.mxu0 %v2157
    %2362 = vmatprep.subr.bf16.mxu0 %v2154
    %2363 = vmatpush1.bf16.msra.mxu0 %v2153
    %2364 = vmatprep.subr.bf16.mxu0 %v2150
    %2365 = vmatpush1.bf16.msra.mxu0 %v2149
    %2366 = vmatprep.subr.bf16.mxu0 %v2146
    %2367 = vmatpush1.bf16.msra.mxu0 %v2145
    %2368 = vmatprep.subr.bf16.mxu0 %v2142
    %2369 = vmatpush1.bf16.msra.mxu0 %v2141
    %2370 = vmatprep.subr.bf16.mxu0 %v2138
    %2371 = vmatpush1.bf16.msra.mxu0 %v2137
    %2372 = vmatprep.subr.bf16.mxu0 0
    %2373 = vmatpush2.bf16.msra.mxu0 0
    %2374 = vmatprep.subr.bf16.mxu0 0
    %2375 = vmatpush2.bf16.msra.mxu0 0
    %2376 = vmatprep.subr.bf16.mxu0 0
    %2377 = vmatpush2.bf16.msra.mxu0 0
    %2378 = vmatprep.subr.bf16.mxu0 0
    %2379 = vmatpush2.bf16.msra.mxu0 0
    %2380 = vmatprep.subr.bf16.mxu0 0
    %2381 = vmatpush2.bf16.msra.mxu0 0
    %2382 = vmatprep.subr.bf16.mxu0 0
    %2383 = vmatpush2.bf16.msra.mxu0 0
    %2384 = vmatprep.subr.bf16.mxu0 0
    %2385 = vmatpush2.bf16.msra.mxu0 0
    %2386 = vmatprep.subr.bf16.mxu0 0
    %2387 = vmatpush2.bf16.msra.mxu0 0
    %2388 = vmatprep.mubr.bf16.mxu0 0
    %2389 = vmatmul.mubr.bf16.gmra.mxu0 %v2314
    %v2390 = vpop.f32.mrf.mxu0
    %v2391 = vadd.f32 0.0, %v2390
    %v2392 = vpop.f32.mrf.mxu0
    %v2393 = vadd.f32 0.0, %v2392
    %v2394 = vpop.f32.mrf.mxu0
    %v2395 = vpop.f32.mrf.mxu0
    %2396 = vdwg.mxu0
    %v2397 = vadd.f32 %v2310, %v2350
    %v2398 = vadd.f32 %v2311, %v2352
    %v2399 = vadd.f32 %v2312, %v2391
    %v2400 = vadd.f32 %v2313, %v2393
    %v2401 = vxor.u32 %v2397, 2147483648
    %v2402 = vmul.f32 %v2401, 1.442695
    %v2403 = vpow.pop %v2402
    %v2404 = vadd.f32 %v2403, 1.0
    %v2405 = vrcp.pop %v2404
    %v2406 = vmul.f32 1.0, %v2405
    %v2407 = vxor.u32 %v2398, 2147483648
    %v2408 = vmul.f32 %v2407, 1.442695
    %v2409 = vpow.pop %v2408
    %v2410 = vadd.f32 %v2409, 1.0
    %v2411 = vrcp.pop %v2410
    %v2412 = vmul.f32 1.0, %v2411
    %v2413 = vtanh.pop %v2399
    %v2414 = vxor.u32 %v2400, 2147483648
    %v2415 = vmul.f32 %v2414, 1.442695
    %v2416 = vpow.pop %v2415
    %v2417 = vadd.f32 %v2416, 1.0
    %v2418 = vrcp.pop %v2417
    %v2419 = vmul.f32 1.0, %v2418
    %v2420 = vmul.f32 %v2412, %v2306
    %v2421 = vmul.f32 %v2406, %v2413
    %v2422 = vadd.f32 %v2420, %v2421
    %v2423 = vtanh.pop %v2422
    %v2424 = vmul.f32 %v2419, %v2423
    %2425 = vst [vmem:[%s868] sm:$0xff] %v2424
    %v2426 = vld [vmem:[%s872] sm:$0xff]
    %v2427 = vld [vmem:[%s872 + $0x8] sm:$0xff]
    %v2428 = vld [vmem:[%s872 + $0x10] sm:$0xff]
    %v2429 = vld [vmem:[%s872 + $0x18] sm:$0xff]
    %v2430 = vpack.c.bf16 %v2424, %v2424
    %2431 = vmatprep.subr.bf16.mxu0 %v2164
    %2432 = vmatpush1.bf16.msra.mxu0 %v2163
    %2433 = vmatprep.subr.bf16.mxu0 %v2160
    %2434 = vmatpush1.bf16.msra.mxu0 %v2159
    %2435 = vmatprep.subr.bf16.mxu0 %v2156
    %2436 = vmatpush1.bf16.msra.mxu0 %v2155
    %2437 = vmatprep.subr.bf16.mxu0 %v2152
    %2438 = vmatpush1.bf16.msra.mxu0 %v2151
    %2439 = vmatprep.subr.bf16.mxu0 %v2148
    %2440 = vmatpush1.bf16.msra.mxu0 %v2147
    %2441 = vmatprep.subr.bf16.mxu0 %v2144
    %2442 = vmatpush1.bf16.msra.mxu0 %v2143
    %2443 = vmatprep.subr.bf16.mxu0 %v2140
    %2444 = vmatpush1.bf16.msra.mxu0 %v2139
    %2445 = vmatprep.subr.bf16.mxu0 %v2136
    %2446 = vmatpush1.bf16.msra.mxu0 %v2135
    %2447 = vmatprep.subr.bf16.mxu0 0
    %2448 = vmatpush2.bf16.msra.mxu0 0
    %2449 = vmatprep.subr.bf16.mxu0 0
    %2450 = vmatpush2.bf16.msra.mxu0 0
    %2451 = vmatprep.subr.bf16.mxu0 0
    %2452 = vmatpush2.bf16.msra.mxu0 0
    %2453 = vmatprep.subr.bf16.mxu0 0
    %2454 = vmatpush2.bf16.msra.mxu0 0
    %2455 = vmatprep.subr.bf16.mxu0 0
    %2456 = vmatpush2.bf16.msra.mxu0 0
    %2457 = vmatprep.subr.bf16.mxu0 0
    %2458 = vmatpush2.bf16.msra.mxu0 0
    %2459 = vmatprep.subr.bf16.mxu0 0
    %2460 = vmatpush2.bf16.msra.mxu0 0
    %2461 = vmatprep.subr.bf16.mxu0 0
    %2462 = vmatpush2.bf16.msra.mxu0 0
    %2463 = vmatprep.mubr.bf16.mxu0 0
    %2464 = vmatmul.mubr.bf16.gmra.mxu0 %v2430
    %v2465 = vpop.f32.mrf.mxu0
    %v2466 = vadd.f32 0.0, %v2465
    %v2467 = vpop.f32.mrf.mxu0
    %v2468 = vadd.f32 0.0, %v2467
    %v2469 = vpop.f32.mrf.mxu0
    %v2470 = vpop.f32.mrf.mxu0
    %2471 = vdwg.mxu0
    %2472 = vmatprep.subr.bf16.mxu0 %v2166
    %2473 = vmatpush1.bf16.msra.mxu0 %v2165
    %2474 = vmatprep.subr.bf16.mxu0 %v2162
    %2475 = vmatpush1.bf16.msra.mxu0 %v2161
    %2476 = vmatprep.subr.bf16.mxu0 %v2158
    %2477 = vmatpush1.bf16.msra.mxu0 %v2157
    %2478 = vmatprep.subr.bf16.mxu0 %v2154
    %2479 = vmatpush1.bf16.msra.mxu0 %v2153
    %2480 = vmatprep.subr.bf16.mxu0 %v2150
    %2481 = vmatpush1.bf16.msra.mxu0 %v2149
    %2482 = vmatprep.subr.bf16.mxu0 %v2146
    %2483 = vmatpush1.bf16.msra.mxu0 %v2145
    %2484 = vmatprep.subr.bf16.mxu0 %v2142
    %2485 = vmatpush1.bf16.msra.mxu0 %v2141
    %2486 = vmatprep.subr.bf16.mxu0 %v2138
    %2487 = vmatpush1.bf16.msra.mxu0 %v2137
    %2488 = vmatprep.subr.bf16.mxu0 0
    %2489 = vmatpush2.bf16.msra.mxu0 0
    %2490 = vmatprep.subr.bf16.mxu0 0
    %2491 = vmatpush2.bf16.msra.mxu0 0
    %2492 = vmatprep.subr.bf16.mxu0 0
    %2493 = vmatpush2.bf16.msra.mxu0 0
    %2494 = vmatprep.subr.bf16.mxu0 0
    %2495 = vmatpush2.bf16.msra.mxu0 0
    %2496 = vmatprep.subr.bf16.mxu0 0
    %2497 = vmatpush2.bf16.msra.mxu0 0
    %2498 = vmatprep.subr.bf16.mxu0 0
    %2499 = vmatpush2.bf16.msra.mxu0 0
    %2500 = vmatprep.subr.bf16.mxu0 0
    %2501 = vmatpush2.bf16.msra.mxu0 0
    %2502 = vmatprep.subr.bf16.mxu0 0
    %2503 = vmatpush2.bf16.msra.mxu0 0
    %2504 = vmatprep.mubr.bf16.mxu0 0
    %2505 = vmatmul.mubr.bf16.gmra.mxu0 %v2430
    %v2506 = vpop.f32.mrf.mxu0
    %v2507 = vadd.f32 0.0, %v2506
    %v2508 = vpop.f32.mrf.mxu0
    %v2509 = vadd.f32 0.0, %v2508
    %v2510 = vpop.f32.mrf.mxu0
    %v2511 = vpop.f32.mrf.mxu0
    %2512 = vdwg.mxu0
    %v2513 = vadd.f32 %v2426, %v2466
    %v2514 = vadd.f32 %v2427, %v2468
    %v2515 = vadd.f32 %v2428, %v2507
    %v2516 = vadd.f32 %v2429, %v2509
    %v2517 = vxor.u32 %v2513, 2147483648
    %v2518 = vmul.f32 %v2517, 1.442695
    %v2519 = vpow.pop %v2518
    %v2520 = vadd.f32 %v2519, 1.0
    %v2521 = vrcp.pop %v2520
    %v2522 = vmul.f32 1.0, %v2521
    %v2523 = vxor.u32 %v2514, 2147483648
    %v2524 = vmul.f32 %v2523, 1.442695
    %v2525 = vpow.pop %v2524
    %v2526 = vadd.f32 %v2525, 1.0
    %v2527 = vrcp.pop %v2526
    %v2528 = vmul.f32 1.0, %v2527
    %v2529 = vtanh.pop %v2515
    %v2530 = vxor.u32 %v2516, 2147483648
    %v2531 = vmul.f32 %v2530, 1.442695
    %v2532 = vpow.pop %v2531
    %v2533 = vadd.f32 %v2532, 1.0
    %v2534 = vrcp.pop %v2533
    %v2535 = vmul.f32 1.0, %v2534
    %v2536 = vmul.f32 %v2528, %v2422
    %v2537 = vmul.f32 %v2522, %v2529
    %v2538 = vadd.f32 %v2536, %v2537
    %v2539 = vtanh.pop %v2538
    %v2540 = vmul.f32 %v2535, %v2539
    %2541 = vst [vmem:[%s988] sm:$0xff] %v2540
    %v2542 = vld [vmem:[%s992] sm:$0xff]
    %v2543 = vld [vmem:[%s992 + $0x8] sm:$0xff]
    %v2544 = vld [vmem:[%s992 + $0x10] sm:$0xff]
    %v2545 = vld [vmem:[%s992 + $0x18] sm:$0xff]
    %v2546 = vpack.c.bf16 %v2540, %v2540
    %2547 = vmatprep.subr.bf16.mxu0 %v2164
    %2548 = vmatpush1.bf16.msra.mxu0 %v2163
    %2549 = vmatprep.subr.bf16.mxu0 %v2160
    %2550 = vmatpush1.bf16.msra.mxu0 %v2159
    %2551 = vmatprep.subr.bf16.mxu0 %v2156
    %2552 = vmatpush1.bf16.msra.mxu0 %v2155
    %2553 = vmatprep.subr.bf16.mxu0 %v2152
    %2554 = vmatpush1.bf16.msra.mxu0 %v2151
    %2555 = vmatprep.subr.bf16.mxu0 %v2148
    %2556 = vmatpush1.bf16.msra.mxu0 %v2147
    %2557 = vmatprep.subr.bf16.mxu0 %v2144
    %2558 = vmatpush1.bf16.msra.mxu0 %v2143
    %2559 = vmatprep.subr.bf16.mxu0 %v2140
    %2560 = vmatpush1.bf16.msra.mxu0 %v2139
    %2561 = vmatprep.subr.bf16.mxu0 %v2136
    %2562 = vmatpush1.bf16.msra.mxu0 %v2135
    %2563 = vmatprep.subr.bf16.mxu0 0
    %2564 = vmatpush2.bf16.msra.mxu0 0
    %2565 = vmatprep.subr.bf16.mxu0 0
    %2566 = vmatpush2.bf16.msra.mxu0 0
    %2567 = vmatprep.subr.bf16.mxu0 0
    %2568 = vmatpush2.bf16.msra.mxu0 0
    %2569 = vmatprep.subr.bf16.mxu0 0
    %2570 = vmatpush2.bf16.msra.mxu0 0
    %2571 = vmatprep.subr.bf16.mxu0 0
    %2572 = vmatpush2.bf16.msra.mxu0 0
    %2573 = vmatprep.subr.bf16.mxu0 0
    %2574 = vmatpush2.bf16.msra.mxu0 0
    %2575 = vmatprep.subr.bf16.mxu0 0
    %2576 = vmatpush2.bf16.msra.mxu0 0
    %2577 = vmatprep.subr.bf16.mxu0 0
    %2578 = vmatpush2.bf16.msra.mxu0 0
    %2579 = vmatprep.mubr.bf16.mxu0 0
    %2580 = vmatmul.mubr.bf16.gmra.mxu0 %v2546
    %v2581 = vpop.f32.mrf.mxu0
    %v2582 = vadd.f32 0.0, %v2581
    %v2583 = vpop.f32.mrf.mxu0
    %v2584 = vadd.f32 0.0, %v2583
    %v2585 = vpop.f32.mrf.mxu0
    %v2586 = vpop.f32.mrf.mxu0
    %2587 = vdwg.mxu0
    %2588 = vmatprep.subr.bf16.mxu0 %v2166
    %2589 = vmatpush1.bf16.msra.mxu0 %v2165
    %2590 = vmatprep.subr.bf16.mxu0 %v2162
    %2591 = vmatpush1.bf16.msra.mxu0 %v2161
    %2592 = vmatprep.subr.bf16.mxu0 %v2158
    %2593 = vmatpush1.bf16.msra.mxu0 %v2157
    %2594 = vmatprep.subr.bf16.mxu0 %v2154
    %2595 = vmatpush1.bf16.msra.mxu0 %v2153
    %2596 = vmatprep.subr.bf16.mxu0 %v2150
    %2597 = vmatpush1.bf16.msra.mxu0 %v2149
    %2598 = vmatprep.subr.bf16.mxu0 %v2146
    %2599 = vmatpush1.bf16.msra.mxu0 %v2145
    %2600 = vmatprep.subr.bf16.mxu0 %v2142
    %2601 = vmatpush1.bf16.msra.mxu0 %v2141
    %2602 = vmatprep.subr.bf16.mxu0 %v2138
    %2603 = vmatpush1.bf16.msra.mxu0 %v2137
    %2604 = vmatprep.subr.bf16.mxu0 0
    %2605 = vmatpush2.bf16.msra.mxu0 0
    %2606 = vmatprep.subr.bf16.mxu0 0
    %2607 = vmatpush2.bf16.msra.mxu0 0
    %2608 = vmatprep.subr.bf16.mxu0 0
    %2609 = vmatpush2.bf16.msra.mxu0 0
    %2610 = vmatprep.subr.bf16.mxu0 0
    %2611 = vmatpush2.bf16.msra.mxu0 0
    %2612 = vmatprep.subr.bf16.mxu0 0
    %2613 = vmatpush2.bf16.msra.mxu0 0
    %2614 = vmatprep.subr.bf16.mxu0 0
    %2615 = vmatpush2.bf16.msra.mxu0 0
    %2616 = vmatprep.subr.bf16.mxu0 0
    %2617 = vmatpush2.bf16.msra.mxu0 0
    %2618 = vmatprep.subr.bf16.mxu0 0
    %2619 = vmatpush2.bf16.msra.mxu0 0
    %2620 = vmatprep.mubr.bf16.mxu0 0
    %2621 = vmatmul.mubr.bf16.gmra.mxu0 %v2546
    %v2622 = vpop.f32.mrf.mxu0
    %v2623 = vadd.f32 0.0, %v2622
    %v2624 = vpop.f32.mrf.mxu0
    %v2625 = vadd.f32 0.0, %v2624
    %v2626 = vpop.f32.mrf.mxu0
    %v2627 = vpop.f32.mrf.mxu0
    %2628 = vdwg.mxu0
    %v2629 = vadd.f32 %v2542, %v2582
    %v2630 = vadd.f32 %v2543, %v2584
    %v2631 = vadd.f32 %v2544, %v2623
    %v2632 = vadd.f32 %v2545, %v2625
    %v2633 = vxor.u32 %v2629, 2147483648
    %v2634 = vmul.f32 %v2633, 1.442695
    %v2635 = vpow.pop %v2634
    %v2636 = vadd.f32 %v2635, 1.0
    %v2637 = vrcp.pop %v2636
    %v2638 = vmul.f32 1.0, %v2637
    %v2639 = vxor.u32 %v2630, 2147483648
    %v2640 = vmul.f32 %v2639, 1.442695
    %v2641 = vpow.pop %v2640
    %v2642 = vadd.f32 %v2641, 1.0
    %v2643 = vrcp.pop %v2642
    %v2644 = vmul.f32 1.0, %v2643
    %v2645 = vtanh.pop %v2631
    %v2646 = vxor.u32 %v2632, 2147483648
    %v2647 = vmul.f32 %v2646, 1.442695
    %v2648 = vpow.pop %v2647
    %v2649 = vadd.f32 %v2648, 1.0
    %v2650 = vrcp.pop %v2649
    %v2651 = vmul.f32 1.0, %v2650
    %v2652 = vmul.f32 %v2644, %v2538
    %v2653 = vmul.f32 %v2638, %v2645
    %v2654 = vadd.f32 %v2652, %v2653
    %v2655 = vtanh.pop %v2654
    %v2656 = vmul.f32 %v2651, %v2655
    %2657 = vst [vmem:[%s1108] sm:$0xff] %v2656
    %v2658 = vld [vmem:[%s1112] sm:$0xff]
    %v2659 = vld [vmem:[%s1112 + $0x8] sm:$0xff]
    %v2660 = vld [vmem:[%s1112 + $0x10] sm:$0xff]
    %v2661 = vld [vmem:[%s1112 + $0x18] sm:$0xff]
    %v2662 = vpack.c.bf16 %v2656, %v2656
    %2663 = vmatprep.subr.bf16.mxu0 %v2164
    %2664 = vmatpush1.bf16.msra.mxu0 %v2163
    %2665 = vmatprep.subr.bf16.mxu0 %v2160
    %2666 = vmatpush1.bf16.msra.mxu0 %v2159
    %2667 = vmatprep.subr.bf16.mxu0 %v2156
    %2668 = vmatpush1.bf16.msra.mxu0 %v2155
    %2669 = vmatprep.subr.bf16.mxu0 %v2152
    %2670 = vmatpush1.bf16.msra.mxu0 %v2151
    %2671 = vmatprep.subr.bf16.mxu0 %v2148
    %2672 = vmatpush1.bf16.msra.mxu0 %v2147
    %2673 = vmatprep.subr.bf16.mxu0 %v2144
    %2674 = vmatpush1.bf16.msra.mxu0 %v2143
    %2675 = vmatprep.subr.bf16.mxu0 %v2140
    %2676 = vmatpush1.bf16.msra.mxu0 %v2139
    %2677 = vmatprep.subr.bf16.mxu0 %v2136
    %2678 = vmatpush1.bf16.msra.mxu0 %v2135
    %2679 = vmatprep.subr.bf16.mxu0 0
    %2680 = vmatpush2.bf16.msra.mxu0 0
    %2681 = vmatprep.subr.bf16.mxu0 0
    %2682 = vmatpush2.bf16.msra.mxu0 0
    %2683 = vmatprep.subr.bf16.mxu0 0
    %2684 = vmatpush2.bf16.msra.mxu0 0
    %2685 = vmatprep.subr.bf16.mxu0 0
    %2686 = vmatpush2.bf16.msra.mxu0 0
    %2687 = vmatprep.subr.bf16.mxu0 0
    %2688 = vmatpush2.bf16.msra.mxu0 0
    %2689 = vmatprep.subr.bf16.mxu0 0
    %2690 = vmatpush2.bf16.msra.mxu0 0
    %2691 = vmatprep.subr.bf16.mxu0 0
    %2692 = vmatpush2.bf16.msra.mxu0 0
    %2693 = vmatprep.subr.bf16.mxu0 0
    %2694 = vmatpush2.bf16.msra.mxu0 0
    %2695 = vmatprep.mubr.bf16.mxu0 0
    %2696 = vmatmul.mubr.bf16.gmra.mxu0 %v2662
    %v2697 = vpop.f32.mrf.mxu0
    %v2698 = vadd.f32 0.0, %v2697
    %v2699 = vpop.f32.mrf.mxu0
    %v2700 = vadd.f32 0.0, %v2699
    %v2701 = vpop.f32.mrf.mxu0
    %v2702 = vpop.f32.mrf.mxu0
    %2703 = vdwg.mxu0
    %2704 = vmatprep.subr.bf16.mxu0 %v2166
    %2705 = vmatpush1.bf16.msra.mxu0 %v2165
    %2706 = vmatprep.subr.bf16.mxu0 %v2162
    %2707 = vmatpush1.bf16.msra.mxu0 %v2161
    %2708 = vmatprep.subr.bf16.mxu0 %v2158
    %2709 = vmatpush1.bf16.msra.mxu0 %v2157
    %2710 = vmatprep.subr.bf16.mxu0 %v2154
    %2711 = vmatpush1.bf16.msra.mxu0 %v2153
    %2712 = vmatprep.subr.bf16.mxu0 %v2150
    %2713 = vmatpush1.bf16.msra.mxu0 %v2149
    %2714 = vmatprep.subr.bf16.mxu0 %v2146
    %2715 = vmatpush1.bf16.msra.mxu0 %v2145
    %2716 = vmatprep.subr.bf16.mxu0 %v2142
    %2717 = vmatpush1.bf16.msra.mxu0 %v2141
    %2718 = vmatprep.subr.bf16.mxu0 %v2138
    %2719 = vmatpush1.bf16.msra.mxu0 %v2137
    %2720 = vmatprep.subr.bf16.mxu0 0
    %2721 = vmatpush2.bf16.msra.mxu0 0
    %2722 = vmatprep.subr.bf16.mxu0 0
    %2723 = vmatpush2.bf16.msra.mxu0 0
    %2724 = vmatprep.subr.bf16.mxu0 0
    %2725 = vmatpush2.bf16.msra.mxu0 0
    %2726 = vmatprep.subr.bf16.mxu0 0
    %2727 = vmatpush2.bf16.msra.mxu0 0
    %2728 = vmatprep.subr.bf16.mxu0 0
    %2729 = vmatpush2.bf16.msra.mxu0 0
    %2730 = vmatprep.subr.bf16.mxu0 0
    %2731 = vmatpush2.bf16.msra.mxu0 0
    %2732 = vmatprep.subr.bf16.mxu0 0
    %2733 = vmatpush2.bf16.msra.mxu0 0
    %2734 = vmatprep.subr.bf16.mxu0 0
    %2735 = vmatpush2.bf16.msra.mxu0 0
    %2736 = vmatprep.mubr.bf16.mxu0 0
    %2737 = vmatmul.mubr.bf16.gmra.mxu0 %v2662
    %v2738 = vpop.f32.mrf.mxu0
    %v2739 = vadd.f32 0.0, %v2738
    %v2740 = vpop.f32.mrf.mxu0
    %v2741 = vadd.f32 0.0, %v2740
    %v2742 = vpop.f32.mrf.mxu0
    %v2743 = vpop.f32.mrf.mxu0
    %2744 = vdwg.mxu0
    %v2745 = vadd.f32 %v2658, %v2698
    %v2746 = vadd.f32 %v2659, %v2700
    %v2747 = vadd.f32 %v2660, %v2739
    %v2748 = vadd.f32 %v2661, %v2741
    %v2749 = vxor.u32 %v2745, 2147483648
    %v2750 = vmul.f32 %v2749, 1.442695
    %v2751 = vpow.pop %v2750
    %v2752 = vadd.f32 %v2751, 1.0
    %v2753 = vrcp.pop %v2752
    %v2754 = vmul.f32 1.0, %v2753
    %v2755 = vxor.u32 %v2746, 2147483648
    %v2756 = vmul.f32 %v2755, 1.442695
    %v2757 = vpow.pop %v2756
    %v2758 = vadd.f32 %v2757, 1.0
    %v2759 = vrcp.pop %v2758
    %v2760 = vmul.f32 1.0, %v2759
    %v2761 = vtanh.pop %v2747
    %v2762 = vxor.u32 %v2748, 2147483648
    %v2763 = vmul.f32 %v2762, 1.442695
    %v2764 = vpow.pop %v2763
    %v2765 = vadd.f32 %v2764, 1.0
    %v2766 = vrcp.pop %v2765
    %v2767 = vmul.f32 1.0, %v2766
    %v2768 = vmul.f32 %v2760, %v2654
    %v2769 = vmul.f32 %v2754, %v2761
    %v2770 = vadd.f32 %v2768, %v2769
    %v2771 = vtanh.pop %v2770
    %v2772 = vmul.f32 %v2767, %v2771
    %2773 = vst [vmem:[%s1228] sm:$0xff] %v2772
    %v2774 = vld [vmem:[%s1232] sm:$0xff]
    %v2775 = vld [vmem:[%s1232 + $0x8] sm:$0xff]
    %v2776 = vld [vmem:[%s1232 + $0x10] sm:$0xff]
    %v2777 = vld [vmem:[%s1232 + $0x18] sm:$0xff]
    %v2778 = vpack.c.bf16 %v2772, %v2772
    %2779 = vmatprep.subr.bf16.mxu0 %v2164
    %2780 = vmatpush1.bf16.msra.mxu0 %v2163
    %2781 = vmatprep.subr.bf16.mxu0 %v2160
    %2782 = vmatpush1.bf16.msra.mxu0 %v2159
    %2783 = vmatprep.subr.bf16.mxu0 %v2156
    %2784 = vmatpush1.bf16.msra.mxu0 %v2155
    %2785 = vmatprep.subr.bf16.mxu0 %v2152
    %2786 = vmatpush1.bf16.msra.mxu0 %v2151
    %2787 = vmatprep.subr.bf16.mxu0 %v2148
    %2788 = vmatpush1.bf16.msra.mxu0 %v2147
    %2789 = vmatprep.subr.bf16.mxu0 %v2144
    %2790 = vmatpush1.bf16.msra.mxu0 %v2143
    %2791 = vmatprep.subr.bf16.mxu0 %v2140
    %2792 = vmatpush1.bf16.msra.mxu0 %v2139
    %2793 = vmatprep.subr.bf16.mxu0 %v2136
    %2794 = vmatpush1.bf16.msra.mxu0 %v2135
    %2795 = vmatprep.subr.bf16.mxu0 0
    %2796 = vmatpush2.bf16.msra.mxu0 0
    %2797 = vmatprep.subr.bf16.mxu0 0
    %2798 = vmatpush2.bf16.msra.mxu0 0
    %2799 = vmatprep.subr.bf16.mxu0 0
    %2800 = vmatpush2.bf16.msra.mxu0 0
    %2801 = vmatprep.subr.bf16.mxu0 0
    %2802 = vmatpush2.bf16.msra.mxu0 0
    %2803 = vmatprep.subr.bf16.mxu0 0
    %2804 = vmatpush2.bf16.msra.mxu0 0
    %2805 = vmatprep.subr.bf16.mxu0 0
    %2806 = vmatpush2.bf16.msra.mxu0 0
    %2807 = vmatprep.subr.bf16.mxu0 0
    %2808 = vmatpush2.bf16.msra.mxu0 0
    %2809 = vmatprep.subr.bf16.mxu0 0
    %2810 = vmatpush2.bf16.msra.mxu0 0
    %2811 = vmatprep.mubr.bf16.mxu0 0
    %2812 = vmatmul.mubr.bf16.gmra.mxu0 %v2778
    %v2813 = vpop.f32.mrf.mxu0
    %v2814 = vadd.f32 0.0, %v2813
    %v2815 = vpop.f32.mrf.mxu0
    %v2816 = vadd.f32 0.0, %v2815
    %v2817 = vpop.f32.mrf.mxu0
    %v2818 = vpop.f32.mrf.mxu0
    %2819 = vdwg.mxu0
    %2820 = vmatprep.subr.bf16.mxu0 %v2166
    %2821 = vmatpush1.bf16.msra.mxu0 %v2165
    %2822 = vmatprep.subr.bf16.mxu0 %v2162
    %2823 = vmatpush1.bf16.msra.mxu0 %v2161
    %2824 = vmatprep.subr.bf16.mxu0 %v2158
    %2825 = vmatpush1.bf16.msra.mxu0 %v2157
    %2826 = vmatprep.subr.bf16.mxu0 %v2154
    %2827 = vmatpush1.bf16.msra.mxu0 %v2153
    %2828 = vmatprep.subr.bf16.mxu0 %v2150
    %2829 = vmatpush1.bf16.msra.mxu0 %v2149
    %2830 = vmatprep.subr.bf16.mxu0 %v2146
    %2831 = vmatpush1.bf16.msra.mxu0 %v2145
    %2832 = vmatprep.subr.bf16.mxu0 %v2142
    %2833 = vmatpush1.bf16.msra.mxu0 %v2141
    %2834 = vmatprep.subr.bf16.mxu0 %v2138
    %2835 = vmatpush1.bf16.msra.mxu0 %v2137
    %2836 = vmatprep.subr.bf16.mxu0 0
    %2837 = vmatpush2.bf16.msra.mxu0 0
    %2838 = vmatprep.subr.bf16.mxu0 0
    %2839 = vmatpush2.bf16.msra.mxu0 0
    %2840 = vmatprep.subr.bf16.mxu0 0
    %2841 = vmatpush2.bf16.msra.mxu0 0
    %2842 = vmatprep.subr.bf16.mxu0 0
    %2843 = vmatpush2.bf16.msra.mxu0 0
    %2844 = vmatprep.subr.bf16.mxu0 0
    %2845 = vmatpush2.bf16.msra.mxu0 0
    %2846 = vmatprep.subr.bf16.mxu0 0
    %2847 = vmatpush2.bf16.msra.mxu0 0
    %2848 = vmatprep.subr.bf16.mxu0 0
    %2849 = vmatpush2.bf16.msra.mxu0 0
    %2850 = vmatprep.subr.bf16.mxu0 0
    %2851 = vmatpush2.bf16.msra.mxu0 0
    %2852 = vmatprep.mubr.bf16.mxu0 0
    %2853 = vmatmul.mubr.bf16.gmra.mxu0 %v2778
    %v2854 = vpop.f32.mrf.mxu0
    %v2855 = vadd.f32 0.0, %v2854
    %v2856 = vpop.f32.mrf.mxu0
    %v2857 = vadd.f32 0.0, %v2856
    %v2858 = vpop.f32.mrf.mxu0
    %v2859 = vpop.f32.mrf.mxu0
    %2860 = vdwg.mxu0
    %v2861 = vadd.f32 %v2774, %v2814
    %v2862 = vadd.f32 %v2775, %v2816
    %v2863 = vadd.f32 %v2776, %v2855
    %v2864 = vadd.f32 %v2777, %v2857
    %v2865 = vxor.u32 %v2861, 2147483648
    %v2866 = vmul.f32 %v2865, 1.442695
    %v2867 = vpow.pop %v2866
    %v2868 = vadd.f32 %v2867, 1.0
    %v2869 = vrcp.pop %v2868
    %v2870 = vmul.f32 1.0, %v2869
    %v2871 = vxor.u32 %v2862, 2147483648
    %v2872 = vmul.f32 %v2871, 1.442695
    %v2873 = vpow.pop %v2872
    %v2874 = vadd.f32 %v2873, 1.0
    %v2875 = vrcp.pop %v2874
    %v2876 = vmul.f32 1.0, %v2875
    %v2877 = vtanh.pop %v2863
    %v2878 = vxor.u32 %v2864, 2147483648
    %v2879 = vmul.f32 %v2878, 1.442695
    %v2880 = vpow.pop %v2879
    %v2881 = vadd.f32 %v2880, 1.0
    %v2882 = vrcp.pop %v2881
    %v2883 = vmul.f32 1.0, %v2882
    %v2884 = vmul.f32 %v2876, %v2770
    %v2885 = vmul.f32 %v2870, %v2877
    %v2886 = vadd.f32 %v2884, %v2885
    %v2887 = vtanh.pop %v2886
    %v2888 = vmul.f32 %v2883, %v2887
    %2889 = vst [vmem:[%s1348] sm:$0xff] %v2888
    %v2890 = vld [vmem:[%s1352] sm:$0xff]
    %v2891 = vld [vmem:[%s1352 + $0x8] sm:$0xff]
    %v2892 = vld [vmem:[%s1352 + $0x10] sm:$0xff]
    %v2893 = vld [vmem:[%s1352 + $0x18] sm:$0xff]
    %v2894 = vpack.c.bf16 %v2888, %v2888
    %2895 = vmatprep.subr.bf16.mxu0 %v2164
    %2896 = vmatpush1.bf16.msra.mxu0 %v2163
    %2897 = vmatprep.subr.bf16.mxu0 %v2160
    %2898 = vmatpush1.bf16.msra.mxu0 %v2159
    %2899 = vmatprep.subr.bf16.mxu0 %v2156
    %2900 = vmatpush1.bf16.msra.mxu0 %v2155
    %2901 = vmatprep.subr.bf16.mxu0 %v2152
    %2902 = vmatpush1.bf16.msra.mxu0 %v2151
    %2903 = vmatprep.subr.bf16.mxu0 %v2148
    %2904 = vmatpush1.bf16.msra.mxu0 %v2147
    %2905 = vmatprep.subr.bf16.mxu0 %v2144
    %2906 = vmatpush1.bf16.msra.mxu0 %v2143
    %2907 = vmatprep.subr.bf16.mxu0 %v2140
    %2908 = vmatpush1.bf16.msra.mxu0 %v2139
    %2909 = vmatprep.subr.bf16.mxu0 %v2136
    %2910 = vmatpush1.bf16.msra.mxu0 %v2135
    %2911 = vmatprep.subr.bf16.mxu0 0
    %2912 = vmatpush2.bf16.msra.mxu0 0
    %2913 = vmatprep.subr.bf16.mxu0 0
    %2914 = vmatpush2.bf16.msra.mxu0 0
    %2915 = vmatprep.subr.bf16.mxu0 0
    %2916 = vmatpush2.bf16.msra.mxu0 0
    %2917 = vmatprep.subr.bf16.mxu0 0
    %2918 = vmatpush2.bf16.msra.mxu0 0
    %2919 = vmatprep.subr.bf16.mxu0 0
    %2920 = vmatpush2.bf16.msra.mxu0 0
    %2921 = vmatprep.subr.bf16.mxu0 0
    %2922 = vmatpush2.bf16.msra.mxu0 0
    %2923 = vmatprep.subr.bf16.mxu0 0
    %2924 = vmatpush2.bf16.msra.mxu0 0
    %2925 = vmatprep.subr.bf16.mxu0 0
    %2926 = vmatpush2.bf16.msra.mxu0 0
    %2927 = vmatprep.mubr.bf16.mxu0 0
    %2928 = vmatmul.mubr.bf16.gmra.mxu0 %v2894
    %v2929 = vpop.f32.mrf.mxu0
    %v2930 = vadd.f32 0.0, %v2929
    %v2931 = vpop.f32.mrf.mxu0
    %v2932 = vadd.f32 0.0, %v2931
    %v2933 = vpop.f32.mrf.mxu0
    %v2934 = vpop.f32.mrf.mxu0
    %2935 = vdwg.mxu0
    %2936 = vmatprep.subr.bf16.mxu0 %v2166
    %2937 = vmatpush1.bf16.msra.mxu0 %v2165
    %2938 = vmatprep.subr.bf16.mxu0 %v2162
    %2939 = vmatpush1.bf16.msra.mxu0 %v2161
    %2940 = vmatprep.subr.bf16.mxu0 %v2158
    %2941 = vmatpush1.bf16.msra.mxu0 %v2157
    %2942 = vmatprep.subr.bf16.mxu0 %v2154
    %2943 = vmatpush1.bf16.msra.mxu0 %v2153
    %2944 = vmatprep.subr.bf16.mxu0 %v2150
    %2945 = vmatpush1.bf16.msra.mxu0 %v2149
    %2946 = vmatprep.subr.bf16.mxu0 %v2146
    %2947 = vmatpush1.bf16.msra.mxu0 %v2145
    %2948 = vmatprep.subr.bf16.mxu0 %v2142
    %2949 = vmatpush1.bf16.msra.mxu0 %v2141
    %2950 = vmatprep.subr.bf16.mxu0 %v2138
    %2951 = vmatpush1.bf16.msra.mxu0 %v2137
    %2952 = vmatprep.subr.bf16.mxu0 0
    %2953 = vmatpush2.bf16.msra.mxu0 0
    %2954 = vmatprep.subr.bf16.mxu0 0
    %2955 = vmatpush2.bf16.msra.mxu0 0
    %2956 = vmatprep.subr.bf16.mxu0 0
    %2957 = vmatpush2.bf16.msra.mxu0 0
    %2958 = vmatprep.subr.bf16.mxu0 0
    %2959 = vmatpush2.bf16.msra.mxu0 0
    %2960 = vmatprep.subr.bf16.mxu0 0
    %2961 = vmatpush2.bf16.msra.mxu0 0
    %2962 = vmatprep.subr.bf16.mxu0 0
    %2963 = vmatpush2.bf16.msra.mxu0 0
    %2964 = vmatprep.subr.bf16.mxu0 0
    %2965 = vmatpush2.bf16.msra.mxu0 0
    %2966 = vmatprep.subr.bf16.mxu0 0
    %2967 = vmatpush2.bf16.msra.mxu0 0
    %2968 = vmatprep.mubr.bf16.mxu0 0
    %2969 = vmatmul.mubr.bf16.gmra.mxu0 %v2894
    %v2970 = vpop.f32.mrf.mxu0
    %v2971 = vadd.f32 0.0, %v2970
    %v2972 = vpop.f32.mrf.mxu0
    %v2973 = vadd.f32 0.0, %v2972
    %v2974 = vpop.f32.mrf.mxu0
    %v2975 = vpop.f32.mrf.mxu0
    %2976 = vdwg.mxu0
    %v2977 = vadd.f32 %v2890, %v2930
    %v2978 = vadd.f32 %v2891, %v2932
    %v2979 = vadd.f32 %v2892, %v2971
    %v2980 = vadd.f32 %v2893, %v2973
    %v2981 = vxor.u32 %v2977, 2147483648
    %v2982 = vmul.f32 %v2981, 1.442695
    %v2983 = vpow.pop %v2982
    %v2984 = vadd.f32 %v2983, 1.0
    %v2985 = vrcp.pop %v2984
    %v2986 = vmul.f32 1.0, %v2985
    %v2987 = vxor.u32 %v2978, 2147483648
    %v2988 = vmul.f32 %v2987, 1.442695
    %v2989 = vpow.pop %v2988
    %v2990 = vadd.f32 %v2989, 1.0
    %v2991 = vrcp.pop %v2990
    %v2992 = vmul.f32 1.0, %v2991
    %v2993 = vtanh.pop %v2979
    %v2994 = vxor.u32 %v2980, 2147483648
    %v2995 = vmul.f32 %v2994, 1.442695
    %v2996 = vpow.pop %v2995
    %v2997 = vadd.f32 %v2996, 1.0
    %v2998 = vrcp.pop %v2997
    %v2999 = vmul.f32 1.0, %v2998
    %v3000 = vmul.f32 %v2992, %v2886
    %v3001 = vmul.f32 %v2986, %v2993
    %v3002 = vadd.f32 %v3000, %v3001
    %v3003 = vtanh.pop %v3002
    %v3004 = vmul.f32 %v2999, %v3003
    %3005 = vst [vmem:[%s1468] sm:$0xff] %v3004
    %v3006 = vld [vmem:[%s1472] sm:$0xff]
    %v3007 = vld [vmem:[%s1472 + $0x8] sm:$0xff]
    %v3008 = vld [vmem:[%s1472 + $0x10] sm:$0xff]
    %v3009 = vld [vmem:[%s1472 + $0x18] sm:$0xff]
    %v3010 = vpack.c.bf16 %v3004, %v3004
    %3011 = vmatprep.subr.bf16.mxu0 %v2164
    %3012 = vmatpush1.bf16.msra.mxu0 %v2163
    %3013 = vmatprep.subr.bf16.mxu0 %v2160
    %3014 = vmatpush1.bf16.msra.mxu0 %v2159
    %3015 = vmatprep.subr.bf16.mxu0 %v2156
    %3016 = vmatpush1.bf16.msra.mxu0 %v2155
    %3017 = vmatprep.subr.bf16.mxu0 %v2152
    %3018 = vmatpush1.bf16.msra.mxu0 %v2151
    %3019 = vmatprep.subr.bf16.mxu0 %v2148
    %3020 = vmatpush1.bf16.msra.mxu0 %v2147
    %3021 = vmatprep.subr.bf16.mxu0 %v2144
    %3022 = vmatpush1.bf16.msra.mxu0 %v2143
    %3023 = vmatprep.subr.bf16.mxu0 %v2140
    %3024 = vmatpush1.bf16.msra.mxu0 %v2139
    %3025 = vmatprep.subr.bf16.mxu0 %v2136
    %3026 = vmatpush1.bf16.msra.mxu0 %v2135
    %3027 = vmatprep.subr.bf16.mxu0 0
    %3028 = vmatpush2.bf16.msra.mxu0 0
    %3029 = vmatprep.subr.bf16.mxu0 0
    %3030 = vmatpush2.bf16.msra.mxu0 0
    %3031 = vmatprep.subr.bf16.mxu0 0
    %3032 = vmatpush2.bf16.msra.mxu0 0
    %3033 = vmatprep.subr.bf16.mxu0 0
    %3034 = vmatpush2.bf16.msra.mxu0 0
    %3035 = vmatprep.subr.bf16.mxu0 0
    %3036 = vmatpush2.bf16.msra.mxu0 0
    %3037 = vmatprep.subr.bf16.mxu0 0
    %3038 = vmatpush2.bf16.msra.mxu0 0
    %3039 = vmatprep.subr.bf16.mxu0 0
    %3040 = vmatpush2.bf16.msra.mxu0 0
    %3041 = vmatprep.subr.bf16.mxu0 0
    %3042 = vmatpush2.bf16.msra.mxu0 0
    %3043 = vmatprep.mubr.bf16.mxu0 0
    %3044 = vmatmul.mubr.bf16.gmra.mxu0 %v3010
    %v3045 = vpop.f32.mrf.mxu0
    %v3046 = vadd.f32 0.0, %v3045
    %v3047 = vpop.f32.mrf.mxu0
    %v3048 = vadd.f32 0.0, %v3047
    %v3049 = vpop.f32.mrf.mxu0
    %v3050 = vpop.f32.mrf.mxu0
    %3051 = vdwg.mxu0
    %3052 = vmatprep.subr.bf16.mxu0 %v2166
    %3053 = vmatpush1.bf16.msra.mxu0 %v2165
    %3054 = vmatprep.subr.bf16.mxu0 %v2162
    %3055 = vmatpush1.bf16.msra.mxu0 %v2161
    %3056 = vmatprep.subr.bf16.mxu0 %v2158
    %3057 = vmatpush1.bf16.msra.mxu0 %v2157
    %3058 = vmatprep.subr.bf16.mxu0 %v2154
    %3059 = vmatpush1.bf16.msra.mxu0 %v2153
    %3060 = vmatprep.subr.bf16.mxu0 %v2150
    %3061 = vmatpush1.bf16.msra.mxu0 %v2149
    %3062 = vmatprep.subr.bf16.mxu0 %v2146
    %3063 = vmatpush1.bf16.msra.mxu0 %v2145
    %3064 = vmatprep.subr.bf16.mxu0 %v2142
    %3065 = vmatpush1.bf16.msra.mxu0 %v2141
    %3066 = vmatprep.subr.bf16.mxu0 %v2138
    %3067 = vmatpush1.bf16.msra.mxu0 %v2137
    %3068 = vmatprep.subr.bf16.mxu0 0
    %3069 = vmatpush2.bf16.msra.mxu0 0
    %3070 = vmatprep.subr.bf16.mxu0 0
    %3071 = vmatpush2.bf16.msra.mxu0 0
    %3072 = vmatprep.subr.bf16.mxu0 0
    %3073 = vmatpush2.bf16.msra.mxu0 0
    %3074 = vmatprep.subr.bf16.mxu0 0
    %3075 = vmatpush2.bf16.msra.mxu0 0
    %3076 = vmatprep.subr.bf16.mxu0 0
    %3077 = vmatpush2.bf16.msra.mxu0 0
    %3078 = vmatprep.subr.bf16.mxu0 0
    %3079 = vmatpush2.bf16.msra.mxu0 0
    %3080 = vmatprep.subr.bf16.mxu0 0
    %3081 = vmatpush2.bf16.msra.mxu0 0
    %3082 = vmatprep.subr.bf16.mxu0 0
    %3083 = vmatpush2.bf16.msra.mxu0 0
    %3084 = vmatprep.mubr.bf16.mxu0 0
    %3085 = vmatmul.mubr.bf16.gmra.mxu0 %v3010
    %v3086 = vpop.f32.mrf.mxu0
    %v3087 = vadd.f32 0.0, %v3086
    %v3088 = vpop.f32.mrf.mxu0
    %v3089 = vadd.f32 0.0, %v3088
    %v3090 = vpop.f32.mrf.mxu0
    %v3091 = vpop.f32.mrf.mxu0
    %3092 = vdwg.mxu0
    %v3093 = vadd.f32 %v3006, %v3046
    %v3094 = vadd.f32 %v3007, %v3048
    %v3095 = vadd.f32 %v3008, %v3087
    %v3096 = vadd.f32 %v3009, %v3089
    %v3097 = vxor.u32 %v3093, 2147483648
    %v3098 = vmul.f32 %v3097, 1.442695
    %v3099 = vpow.pop %v3098
    %v3100 = vadd.f32 %v3099, 1.0
    %v3101 = vrcp.pop %v3100
    %v3102 = vmul.f32 1.0, %v3101
    %v3103 = vxor.u32 %v3094, 2147483648
    %v3104 = vmul.f32 %v3103, 1.442695
    %v3105 = vpow.pop %v3104
    %v3106 = vadd.f32 %v3105, 1.0
    %v3107 = vrcp.pop %v3106
    %v3108 = vmul.f32 1.0, %v3107
    %v3109 = vtanh.pop %v3095
    %v3110 = vxor.u32 %v3096, 2147483648
    %v3111 = vmul.f32 %v3110, 1.442695
    %v3112 = vpow.pop %v3111
    %v3113 = vadd.f32 %v3112, 1.0
    %v3114 = vrcp.pop %v3113
    %v3115 = vmul.f32 1.0, %v3114
    %v3116 = vmul.f32 %v3108, %v3002
    %v3117 = vmul.f32 %v3102, %v3109
    %v3118 = vadd.f32 %v3116, %v3117
    %v3119 = vtanh.pop %v3118
    %v3120 = vmul.f32 %v3115, %v3119
    %3121 = vst [vmem:[%s1588] sm:$0xff] %v3120
    %s3122 = smul.u32 %s1590, 1
    %s3123 = sshll.u32 %s3122, 4
    %3124 = dma.done %s108, %s3123
    %s3125 = smul.u32 1, 1
    %s3126 = sshll.u32 %s3125, 4
    %3127 = dma.done %s120, %s3126
    %v3128 = vld [vmem:[#allocation2] sm:$0xff]
    %v3129 = vld [vmem:[#allocation2 + $0x8] sm:$0xff]
    %v3130 = vld [vmem:[#allocation2 + $0x10] sm:$0xff]
    %v3131 = vld [vmem:[#allocation2 + $0x18] sm:$0xff]
    %v3132 = vld [vmem:[#allocation2 + $0x20] sm:$0xff]
    %v3133 = vld [vmem:[#allocation2 + $0x28] sm:$0xff]
    %v3134 = vld [vmem:[#allocation2 + $0x30] sm:$0xff]
    %v3135 = vld [vmem:[#allocation2 + $0x38] sm:$0xff]
    %v3136 = vpack.c.bf16 %v3129, %v3128
    %v3137 = vpack.c.bf16 %v3131, %v3130
    %v3138 = vpack.c.bf16 %v3133, %v3132
    %v3139 = vpack.c.bf16 %v3135, %v3134
    %v3140 = vld [vmem:[#allocation7] sm:$0xf]
    %v3141 = vld [vmem:[#allocation7 + $0x4] sm:$0xf]
    %v3142 = vld [vmem:[#allocation7 + $0x8] sm:$0xf]
    %v3143 = vld [vmem:[#allocation7 + $0xc] sm:$0xf]
    %v3144 = vld [vmem:[#allocation7 + $0x10] sm:$0xf]
    %v3145 = vld [vmem:[#allocation7 + $0x14] sm:$0xf]
    %v3146 = vld [vmem:[#allocation7 + $0x18] sm:$0xf]
    %v3147 = vld [vmem:[#allocation7 + $0x1c] sm:$0xf]
    %v3148 = vld [vmem:[#allocation7 + $0x20] sm:$0xf]
    %v3149 = vld [vmem:[#allocation7 + $0x24] sm:$0xf]
    %v3150 = vld [vmem:[#allocation7 + $0x28] sm:$0xf]
    %v3151 = vld [vmem:[#allocation7 + $0x2c] sm:$0xf]
    %v3152 = vld [vmem:[#allocation7 + $0x30] sm:$0xf]
    %v3153 = vld [vmem:[#allocation7 + $0x34] sm:$0xf]
    %v3154 = vld [vmem:[#allocation7 + $0x38] sm:$0xf]
    %v3155 = vld [vmem:[#allocation7 + $0x3c] sm:$0xf]
    %v3156 = vld [vmem:[#allocation8] sm:$0x1]
    %v3158 = vlaneseq
    %v3159 = vshrl.u32 %v3158, 7
    %v3160 = vsub.s32 0, %v3159
    %v3161 = vrot.slane %v3156, %v3160
    %v3179 = vunpack.c.l.b16 %v3140
    %v3180 = vunpack.c.l.b16 %v3141
    %v3181 = vunpack.c.l.b16 %v3142
    %v3182 = vunpack.c.l.b16 %v3143
    %v3183 = vunpack.c.l.b16 %v3144
    %v3184 = vunpack.c.l.b16 %v3145
    %v3185 = vunpack.c.l.b16 %v3146
    %v3186 = vunpack.c.l.b16 %v3147
    %v3187 = vunpack.c.l.b16 %v3148
    %v3188 = vunpack.c.l.b16 %v3149
    %v3189 = vunpack.c.l.b16 %v3150
    %v3190 = vunpack.c.l.b16 %v3151
    %v3191 = vunpack.c.l.b16 %v3152
    %v3192 = vunpack.c.l.b16 %v3153
    %v3193 = vunpack.c.l.b16 %v3154
    %v3194 = vunpack.c.l.b16 %v3155
    %v3195 = vpack.c.b16 %v3180, %v3179
    %v3196 = vpack.c.b16 %v3182, %v3181
    %v3197 = vpack.c.b16 %v3184, %v3183
    %v3198 = vpack.c.b16 %v3186, %v3185
    %v3199 = vpack.c.b16 %v3188, %v3187
    %v3200 = vpack.c.b16 %v3190, %v3189
    %v3201 = vpack.c.b16 %v3192, %v3191
    %v3202 = vpack.c.b16 %v3194, %v3193
    %3211 = vmatprep.subr.bf16.mxu0 0
    %3212 = vmatpush1.bf16.msra.mxu0 %v3202
    %3213 = vmatprep.subr.bf16.mxu0 0
    %3214 = vmatpush1.bf16.msra.mxu0 %v3201
    %3215 = vmatprep.subr.bf16.mxu0 0
    %3216 = vmatpush1.bf16.msra.mxu0 %v3200
    %3217 = vmatprep.subr.bf16.mxu0 0
    %3218 = vmatpush1.bf16.msra.mxu0 %v3199
    %3219 = vmatprep.subr.bf16.mxu0 0
    %3220 = vmatpush1.bf16.msra.mxu0 %v3198
    %3221 = vmatprep.subr.bf16.mxu0 0
    %3222 = vmatpush1.bf16.msra.mxu0 %v3197
    %3223 = vmatprep.subr.bf16.mxu0 0
    %3224 = vmatpush1.bf16.msra.mxu0 %v3196
    %3225 = vmatprep.subr.bf16.mxu0 0
    %3226 = vmatpush1.bf16.msra.mxu0 %v3195
    %3227 = vmatprep.subr.bf16.mxu0 0
    %3228 = vmatpush2.bf16.msra.mxu0 0
    %3229 = vmatprep.subr.bf16.mxu0 0
    %3230 = vmatpush2.bf16.msra.mxu0 0
    %3231 = vmatprep.subr.bf16.mxu0 0
    %3232 = vmatpush2.bf16.msra.mxu0 0
    %3233 = vmatprep.subr.bf16.mxu0 0
    %3234 = vmatpush2.bf16.msra.mxu0 0
    %3235 = vmatprep.subr.bf16.mxu0 0
    %3236 = vmatpush2.bf16.msra.mxu0 0
    %3237 = vmatprep.subr.bf16.mxu0 0
    %3238 = vmatpush2.bf16.msra.mxu0 0
    %3239 = vmatprep.subr.bf16.mxu0 0
    %3240 = vmatpush2.bf16.msra.mxu0 0
    %3241 = vmatprep.subr.bf16.mxu0 0
    %3242 = vmatpush2.bf16.msra.mxu0 0
    %3243 = vmatprep.mubr.bf16.mxu0 0
    %3244 = vmatmul.mubr.bf16.gmra.mxu0 %v3136
    %v3245 = vpop.f32.mrf.mxu0
    %v3246 = vadd.f32 %v3161, %v3245
    %v3247 = vpop.f32.mrf.mxu0
    %v3248 = vpop.f32.mrf.mxu0
    %v3249 = vadd.f32 %v3161, %v3248
    %v3250 = vpop.f32.mrf.mxu0
    %3251 = vmatprep.mubr.bf16.mxu0 0
    %3252 = vmatmul.mubr.bf16.gmra.mxu0 %v3137
    %v3253 = vpop.f32.mrf.mxu0
    %v3254 = vadd.f32 %v3161, %v3253
    %v3255 = vpop.f32.mrf.mxu0
    %v3256 = vpop.f32.mrf.mxu0
    %v3257 = vadd.f32 %v3161, %v3256
    %v3258 = vpop.f32.mrf.mxu0
    %3259 = vmatprep.mubr.bf16.mxu0 0
    %3260 = vmatmul.mubr.bf16.gmra.mxu0 %v3138
    %v3261 = vpop.f32.mrf.mxu0
    %v3262 = vadd.f32 %v3161, %v3261
    %v3263 = vpop.f32.mrf.mxu0
    %v3264 = vpop.f32.mrf.mxu0
    %v3265 = vadd.f32 %v3161, %v3264
    %v3266 = vpop.f32.mrf.mxu0
    %3267 = vmatprep.mubr.bf16.mxu0 0
    %3268 = vmatmul.mubr.bf16.gmra.mxu0 %v3139
    %v3269 = vpop.f32.mrf.mxu0
    %v3270 = vadd.f32 %v3161, %v3269
    %v3271 = vpop.f32.mrf.mxu0
    %v3272 = vpop.f32.mrf.mxu0
    %v3273 = vadd.f32 %v3161, %v3272
    %v3274 = vpop.f32.mrf.mxu0
    %3275 = vdwg.mxu0
    %3276 = vst [vmem:[#allocation13] sm:$0xff] %v3246
    %3277 = vst [vmem:[#allocation13 + $0x8] sm:$0xff] %v3249
    %3278 = vst [vmem:[#allocation13 + $0x10] sm:$0xff] %v3254
    %3279 = vst [vmem:[#allocation13 + $0x18] sm:$0xff] %v3257
    %3280 = vst [vmem:[#allocation13 + $0x20] sm:$0xff] %v3262
    %3281 = vst [vmem:[#allocation13 + $0x28] sm:$0xff] %v3265
    %3282 = vst [vmem:[#allocation13 + $0x30] sm:$0xff] %v3270
    %3283 = vst [vmem:[#allocation13 + $0x38] sm:$0xff] %v3273
    // Predicated region
    $region94: #{tpu_custom_call.1} parent=1 // pred_check
      _
    $region95: #{tpu_custom_call.1} parent=1 // pred_check_branch
      %3285 = sbr.rel (0) target = $region97
    $region96: #{tpu_custom_call.1} parent=1 // pred_region
      %s3287 = ssub.s32 1024, 1024
      %3288 = vsyncadd [#allocation12], %s3287
      %s3289 = sshll.u32 [#allocation13], 4
      %s3290 = int_to_ptr.vmem [resolvable:$true] %s3289
      %3295 = dma.vmem_to_hbm [thread:$0]  %s3290, 1024, %s9, [#allocation12], 128, 128, 8
    $region97: #{tpu_custom_call.1} parent=1 // pred_fallthru
      _
    // Predicated region
    $region98: #{tpu_custom_call.1} parent=1 // pred_check
      _
    $region99: #{tpu_custom_call.1} parent=1 // pred_check_branch
      %3297 = sbr.rel (0) target = $region101
    $region100: #{tpu_custom_call.1} parent=1 // pred_region
      %3298 = dma.done [#allocation12], 1024
    $region101: #{tpu_custom_call.1} parent=1 // pred_fallthru
      _
    %3299 = vsyncpa [#allocation11], 1
    %3300 = vsyncpa [#allocation12], 1
  %3301 = vsyncmov [#allocation9]
  %s3302 = vpop.sfrf %3301
  %p3303 = scmp.eq.s32.totalorder %s3302, 0
  %p3304 = pneg %p3303
  %3306 = shalt.err (%p3304)
  %s3307 = scalar_lea.sflag [#allocation9], 1
  %3308 = vsyncmov %s3307
  %s3309 = vpop.sfrf %3308
  %p3310 = scmp.eq.s32.totalorder %s3309, 0
  %p3311 = pneg %p3310
  %3313 = shalt.err (%p3311)
  %s3314 = scalar_lea.sflag [#allocation9], 2
  %3315 = vsyncmov %s3314
  %s3316 = vpop.sfrf %3315
  %p3317 = scmp.eq.s32.totalorder %s3316, 0
  %p3318 = pneg %p3317
  %3320 = shalt.err (%p3318)
  %s3321 = scalar_lea.sflag [#allocation9], 3
  %3322 = vsyncmov %s3321
  %s3323 = vpop.sfrf %3322
  %p3324 = scmp.eq.s32.totalorder %s3323, 0
  %p3325 = pneg %p3324
  %3327 = shalt.err (%p3325)
  %s3328 = scalar_lea.sflag [#allocation9], 4
  %3329 = vsyncmov %s3328
  %s3330 = vpop.sfrf %3329
  %p3331 = scmp.eq.s32.totalorder %s3330, 0
  %p3332 = pneg %p3331
  %3334 = shalt.err (%p3332)

</llo_original>
